<compile_context>
chip_gen: v6e
topology: v6e:2x2x1
jax: 0.10.0
libtpu: 0.0.40
codegen_flags: <defaults>
</compile_context>

<pallas_src>
import jax
import jax.numpy as jnp
from jax import lax
from jax.experimental import pallas as pl
from jax.experimental.pallas import tpu as pltpu


def _single_layer_kernel(x_ref, scale_ref, shift_ref, w_ref, out_ref, xp_scr):
    # x_ref:     (B, H, W, C)        raw input block (NHWC, f32)
    # scale_ref: (1, C)              folded BN scale = gamma / sqrt(var + eps)
    # shift_ref: (1, C)              folded BN shift = beta - mean * scale
    # w_ref:     (9, C, G)           conv weights (bf16), k = kh*3 + kw
    # out_ref:   (B, H, W, G + C)    fused [conv | x] output (NHWC, f32)
    # xp_scr:    (B, H+2, W+2, C)    VMEM scratch: BN+ReLU'ed input + zero halo
    B, H, W, C = x_ref.shape
    G = w_ref.shape[2]
    M = B * H * W

    x = x_ref[...]                                            # (B, H, W, C)
    # Inference BatchNorm (folded scale/shift) + ReLU; (1, C) operands
    # broadcast per-channel over (B, H, W, C).
    xn = jnp.maximum(x * scale_ref[...] + shift_ref[...], 0.0)

    # Zero only the halo ring (== conv padding=1); the interior gets the real
    # data.  Re-done every step on purpose -- see header note about scratch
    # being per-core under megacore "parallel" splitting.
    xp_scr[:, 0:1, :, :] = jnp.zeros((B, 1, W + 2, C), jnp.float32)
    xp_scr[:, H + 1:H + 2, :, :] = jnp.zeros((B, 1, W + 2, C), jnp.float32)
    xp_scr[:, :, 0:1, :] = jnp.zeros((B, H + 2, 1, C), jnp.float32)
    xp_scr[:, :, W + 1:W + 2, :] = jnp.zeros((B, H + 2, 1, C), jnp.float32)
    xp_scr[:, 1:H + 1, 1:W + 1, :] = xn

    # 3x3 conv as 9 accumulated (M, C) @ (C, G) matmuls -- no im2col buffer,
    # no lane-axis concatenates.  bf16 operands, f32 accumulation.
    acc = jnp.zeros((M, G), jnp.float32)
    for kh in range(3):
        for kw in range(3):
            win = xp_scr[:, kh:kh + H, kw:kw + W, :]          # (B, H, W, C)
            acc = acc + jnp.dot(
                win.reshape(M, C).astype(jnp.bfloat16),
                w_ref[kh * 3 + kw],
                preferred_element_type=jnp.float32)

    # Fused torch.cat((conv, x), dim=channel) and store.
    combined = jnp.concatenate(
        [acc.astype(out_ref.dtype), x.reshape(M, C).astype(out_ref.dtype)],
        axis=-1)
    out_ref[...] = combined.reshape(B, H, W, G + C)


def single_layer_forward(x_nchw, gamma, beta, running_mean, running_var,
                         conv_w, eps=1e-5, batch_block=None):
    """SingleLayer.forward (inference-mode BN).

    x_nchw: (N, C, H, W);  conv_w: (G, C, 3, 3) (PyTorch OIHW).
    Returns (N, G + C, H, W), matching torch.cat((conv(relu(bn(x))), x), 1).
    """
    N, C, H, W = x_nchw.shape
    G = conv_w.shape[0]

    if batch_block is None:
        candidates = [b for b in (8, 4, 2, 1) if N % b == 0]
        # Largest block that still leaves >= 2 grid steps, so a 2-TensorCore
        # part (v7x) can split the "parallel" batch axis.
        batch_block = next((b for b in candidates if N // b >= 2),
                           candidates[-1])
    B = batch_block
    assert N % B == 0

    x = jnp.transpose(x_nchw, (0, 2, 3, 1)).astype(jnp.float32)     # NHWC

    scale = (gamma / jnp.sqrt(running_var + eps)).astype(jnp.float32)
    shift = (beta.astype(jnp.float32)
             - running_mean.astype(jnp.float32) * scale)
    scale2 = scale.reshape(1, C)
    shift2 = shift.reshape(1, C)

    # OIHW -> (kh, kw, Cin, G) -> (9, Cin, G); index k = kh*3 + kw matches the
    # window loop inside the kernel.  bf16 for the MXU.
    w = jnp.transpose(conv_w, (2, 3, 1, 0)).reshape(9, C, G).astype(
        jnp.bfloat16)

    flops = 2 * N * H * W * 9 * C * G
    bytes_accessed = (N * H * W * C * 4            # x
                      + 9 * C * G * 2              # weights (bf16)
                      + 2 * C * 4                  # scale / shift
                      + N * H * W * (G + C) * 4)   # output
    cost = pl.CostEstimate(flops=flops, transcendentals=0,
                           bytes_accessed=bytes_accessed)

    out_nhwc = pl.pallas_call(
        _single_layer_kernel,
        out_shape=jax.ShapeDtypeStruct((N, H, W, G + C), jnp.float32),
        grid_spec=pltpu.PrefetchScalarGridSpec(
            num_scalar_prefetch=0,
            grid=(N // B,),
            in_specs=[
                pl.BlockSpec((B, H, W, C), lambda n: (n, 0, 0, 0)),
                pl.BlockSpec((1, C), lambda n: (0, 0)),
                pl.BlockSpec((1, C), lambda n: (0, 0)),
                pl.BlockSpec((9, C, G), lambda n: (0, 0, 0)),
            ],
            out_specs=pl.BlockSpec((B, H, W, G + C),
                                   lambda n: (n, 0, 0, 0)),
            scratch_shapes=[pltpu.VMEM((B, H + 2, W + 2, C), jnp.float32)],
        ),
        compiler_params=pltpu.CompilerParams(
            dimension_semantics=("parallel",),
            vmem_limit_bytes=64 * 1024 * 1024),
        cost_estimate=cost,
    )(x, scale2, shift2, w)

    # TODO(synk): in a stacked DenseNet keep activations NHWC end-to-end; this
    # boundary transpose is a full extra HBM pass for the standalone layer.
    return jnp.transpose(out_nhwc, (0, 3, 1, 2))


def _reference(x_nchw, gamma, beta, running_mean, running_var, conv_w,
               eps=1e-5):
    scale = gamma / jnp.sqrt(running_var + eps)
    shift = beta - running_mean * scale
    xn = jnp.maximum(
        x_nchw * scale.reshape(1, -1, 1, 1) + shift.reshape(1, -1, 1, 1), 0.0)
    conv = lax.conv_general_dilated(
        xn, conv_w, window_strides=(1, 1), padding=((1, 1), (1, 1)),
        dimension_numbers=("NCHW", "OIHW", "NCHW"))
    return jnp.concatenate([conv, x_nchw], axis=1)


if __name__ == "__main__":
    N, C, H, W = 2, 4, 16, 16      # batch, in_channels, spatial
    G = 8                          # growthRate

    key = jax.random.PRNGKey(0)
    k_x, k_g, k_b, k_m, k_v, k_w = jax.random.split(key, 6)

    x = jax.random.normal(k_x, (N, C, H, W), dtype=jnp.float32)
    gamma = jax.random.normal(k_g, (C,), dtype=jnp.float32) * 0.1 + 1.0
    beta = jax.random.normal(k_b, (C,), dtype=jnp.float32) * 0.1
    running_mean = jax.random.normal(k_m, (C,), dtype=jnp.float32) * 0.1
    running_var = jnp.abs(jax.random.normal(k_v, (C,), dtype=jnp.float32)) + 0.5
    conv_w = jax.random.normal(k_w, (G, C, 3, 3), dtype=jnp.float32) * 0.1

    out = jax.block_until_ready(
        single_layer_forward(x, gamma, beta, running_mean, running_var,
                             conv_w))
    ref = jax.block_until_ready(
        _reference(x, gamma, beta, running_mean, running_var, conv_w))

    assert out.shape == (N, G + C, H, W), out.shape
    # bf16 MXU operands (f32 accumulation) -> loosened tolerance vs f32 ref.
    max_err = float(jnp.max(jnp.abs(out - ref)))
    assert jnp.allclose(out, ref, atol=5e-2, rtol=5e-2), max_err
    print("KERNEL_OK")
</pallas_src>

<mosaic_0001>
module attributes {stable_mosaic.version = 11 : i64} {
  func.func @_single_layer_kernel(%arg0: i32, %arg1: memref<1x16x16x4xf32, #tpu.memory_space<vmem>>, %arg2: memref<1x4xf32, #tpu.memory_space<vmem>>, %arg3: memref<1x4xf32, #tpu.memory_space<vmem>>, %arg4: memref<9x4x8xbf16, #tpu.memory_space<vmem>>, %arg5: memref<1x16x16x12xf32, #tpu.memory_space<vmem>>, %arg6: memref<1x18x18x4xf32, #tpu.memory_space<vmem>>) attributes {dimension_semantics = [#tpu.dimension_semantics<parallel>], iteration_bounds = array<i64: 2>, scalar_prefetch = 0 : i64, scratch_operands = 1 : i64, tpu.core_type = #tpu.core_type<tc>, window_params = [{transform_indices = @transform_0, window_bounds = array<i64: 1, 16, 16, 4>}, {pipeline_mode = #tpu.pipeline_mode<synchronous>, transform_indices = @transform_1, window_bounds = array<i64: 1, 4>}, {pipeline_mode = #tpu.pipeline_mode<synchronous>, transform_indices = @transform_2, window_bounds = array<i64: 1, 4>}, {pipeline_mode = #tpu.pipeline_mode<synchronous>, transform_indices = @transform_3, window_bounds = array<i64: 9, 4, 8>}, {transform_indices = @transform_4, window_bounds = array<i64: 1, 16, 16, 12>}]} {
    %c0 = arith.constant 0 : index
    %c0_0 = arith.constant 0 : index
    %c0_1 = arith.constant 0 : index
    %c0_2 = arith.constant 0 : index
    %0 = vector.load %arg1[%c0, %c0_0, %c0_1, %c0_2] : memref<1x16x16x4xf32, #tpu.memory_space<vmem>>, vector<1x16x16x4xf32>
    %c0_3 = arith.constant 0 : index
    %c0_4 = arith.constant 0 : index
    %1 = vector.load %arg2[%c0_3, %c0_4] : memref<1x4xf32, #tpu.memory_space<vmem>>, vector<1x4xf32>
    %2 = vector.shape_cast %1 : vector<1x4xf32> to vector<1x1x1x4xf32>
    %3 = vector.broadcast %2 : vector<1x1x1x4xf32> to vector<1x16x16x4xf32>
    %4 = arith.mulf %0, %3 : vector<1x16x16x4xf32>
    %c0_5 = arith.constant 0 : index
    %c0_6 = arith.constant 0 : index
    %5 = vector.load %arg3[%c0_5, %c0_6] : memref<1x4xf32, #tpu.memory_space<vmem>>, vector<1x4xf32>
    %6 = vector.shape_cast %5 : vector<1x4xf32> to vector<1x1x1x4xf32>
    %7 = vector.broadcast %6 : vector<1x1x1x4xf32> to vector<1x16x16x4xf32>
    %8 = arith.addf %4, %7 : vector<1x16x16x4xf32>
    %cst = arith.constant 0.000000e+00 : f32
    %9 = vector.broadcast %cst : f32 to vector<1x16x16x4xf32>
    %10 = arith.maximumf %8, %9 : vector<1x16x16x4xf32>
    %cst_7 = arith.constant 0.000000e+00 : f32
    %11 = vector.broadcast %cst_7 : f32 to vector<1x1x18x4xf32>
    %c0_8 = arith.constant 0 : index
    %c0_9 = arith.constant 0 : index
    %c0_10 = arith.constant 0 : index
    %c0_11 = arith.constant 0 : index
    %12 = vector.load %arg6[%c0_8, %c0_9, %c0_10, %c0_11] : memref<1x18x18x4xf32, #tpu.memory_space<vmem>>, vector<1x1x18x4xf32>
    tpu.vector_store %arg6[%c0_8, %c0_9, %c0_10, %c0_11], %11 {strides = array<i32>} : memref<1x18x18x4xf32, #tpu.memory_space<vmem>>, vector<1x1x18x4xf32>,
    %cst_12 = arith.constant 0.000000e+00 : f32
    %13 = vector.broadcast %cst_12 : f32 to vector<1x1x18x4xf32>
    %c0_13 = arith.constant 0 : index
    %c17 = arith.constant 17 : index
    %c0_14 = arith.constant 0 : index
    %c0_15 = arith.constant 0 : index
    %14 = vector.load %arg6[%c0_13, %c17, %c0_14, %c0_15] : memref<1x18x18x4xf32, #tpu.memory_space<vmem>>, vector<1x1x18x4xf32>
    tpu.vector_store %arg6[%c0_13, %c17, %c0_14, %c0_15], %13 {strides = array<i32>} : memref<1x18x18x4xf32, #tpu.memory_space<vmem>>, vector<1x1x18x4xf32>,
    %cst_16 = arith.constant 0.000000e+00 : f32
    %15 = vector.broadcast %cst_16 : f32 to vector<1x18x1x4xf32>
    %c0_17 = arith.constant 0 : index
    %c0_18 = arith.constant 0 : index
    %c0_19 = arith.constant 0 : index
    %c0_20 = arith.constant 0 : index
    %16 = vector.load %arg6[%c0_17, %c0_18, %c0_19, %c0_20] : memref<1x18x18x4xf32, #tpu.memory_space<vmem>>, vector<1x18x1x4xf32>
    tpu.vector_store %arg6[%c0_17, %c0_18, %c0_19, %c0_20], %15 {strides = array<i32>} : memref<1x18x18x4xf32, #tpu.memory_space<vmem>>, vector<1x18x1x4xf32>,
    %cst_21 = arith.constant 0.000000e+00 : f32
    %17 = vector.broadcast %cst_21 : f32 to vector<1x18x1x4xf32>
    %c0_22 = arith.constant 0 : index
    %c0_23 = arith.constant 0 : index
    %c17_24 = arith.constant 17 : index
    %c0_25 = arith.constant 0 : index
    %18 = vector.load %arg6[%c0_22, %c0_23, %c17_24, %c0_25] : memref<1x18x18x4xf32, #tpu.memory_space<vmem>>, vector<1x18x1x4xf32>
    tpu.vector_store %arg6[%c0_22, %c0_23, %c17_24, %c0_25], %17 {strides = array<i32>} : memref<1x18x18x4xf32, #tpu.memory_space<vmem>>, vector<1x18x1x4xf32>,
    %c0_26 = arith.constant 0 : index
    %c1 = arith.constant 1 : index
    %c1_27 = arith.constant 1 : index
    %c0_28 = arith.constant 0 : index
    %19 = vector.load %arg6[%c0_26, %c1, %c1_27, %c0_28] : memref<1x18x18x4xf32, #tpu.memory_space<vmem>>, vector<1x16x16x4xf32>
    tpu.vector_store %arg6[%c0_26, %c1, %c1_27, %c0_28], %10 {strides = array<i32>} : memref<1x18x18x4xf32, #tpu.memory_space<vmem>>, vector<1x16x16x4xf32>,
    %cst_29 = arith.constant 0.000000e+00 : f32
    %20 = vector.broadcast %cst_29 : f32 to vector<256x8xf32>
    %c0_30 = arith.constant 0 : index
    %c0_31 = arith.constant 0 : index
    %c0_32 = arith.constant 0 : index
    %c0_33 = arith.constant 0 : index
    %21 = vector.load %arg6[%c0_30, %c0_31, %c0_32, %c0_33] : memref<1x18x18x4xf32, #tpu.memory_space<vmem>>, vector<1x16x16x4xf32>
    %22 = vector.shape_cast %21 : vector<1x16x16x4xf32> to vector<256x4xf32>
    %23 = arith.truncf %22 : vector<256x4xf32> to vector<256x4xbf16>
    %c0_34 = arith.constant 0 : index
    %c0_35 = arith.constant 0 : index
    %c0_36 = arith.constant 0 : index
    %24 = vector.load %arg4[%c0_34, %c0_35, %c0_36] : memref<9x4x8xbf16, #tpu.memory_space<vmem>>, vector<1x4x8xbf16>
    %25 = vector.shape_cast %24 : vector<1x4x8xbf16> to vector<4x8xbf16>
    %cst_37 = arith.constant dense<0.000000e+00> : vector<256x8xf32>
    %26 = tpu.matmul %23, %25, %cst_37 {dimension_numbers = #tpu.dot_dimension_numbers<[1], [0], [0], [1], [0, 0, 1, 1], [], []>} : vector<256x4xbf16>, vector<4x8xbf16>, vector<256x8xf32> -> vector<256x8xf32>
    %27 = arith.addf %20, %26 : vector<256x8xf32>
    %c0_38 = arith.constant 0 : index
    %c0_39 = arith.constant 0 : index
    %c1_40 = arith.constant 1 : index
    %c0_41 = arith.constant 0 : index
    %28 = vector.load %arg6[%c0_38, %c0_39, %c1_40, %c0_41] : memref<1x18x18x4xf32, #tpu.memory_space<vmem>>, vector<1x16x16x4xf32>
    %29 = vector.shape_cast %28 : vector<1x16x16x4xf32> to vector<256x4xf32>
    %30 = arith.truncf %29 : vector<256x4xf32> to vector<256x4xbf16>
    %c1_42 = arith.constant 1 : index
    %c0_43 = arith.constant 0 : index
    %c0_44 = arith.constant 0 : index
    %31 = vector.load %arg4[%c1_42, %c0_43, %c0_44] : memref<9x4x8xbf16, #tpu.memory_space<vmem>>, vector<1x4x8xbf16>
    %32 = vector.shape_cast %31 : vector<1x4x8xbf16> to vector<4x8xbf16>
    %cst_45 = arith.constant dense<0.000000e+00> : vector<256x8xf32>
    %33 = tpu.matmul %30, %32, %cst_45 {dimension_numbers = #tpu.dot_dimension_numbers<[1], [0], [0], [1], [0, 0, 1, 1], [], []>} : vector<256x4xbf16>, vector<4x8xbf16>, vector<256x8xf32> -> vector<256x8xf32>
    %34 = arith.addf %27, %33 : vector<256x8xf32>
    %c0_46 = arith.constant 0 : index
    %c0_47 = arith.constant 0 : index
    %c2 = arith.constant 2 : index
    %c0_48 = arith.constant 0 : index
    %35 = vector.load %arg6[%c0_46, %c0_47, %c2, %c0_48] : memref<1x18x18x4xf32, #tpu.memory_space<vmem>>, vector<1x16x16x4xf32>
    %36 = vector.shape_cast %35 : vector<1x16x16x4xf32> to vector<256x4xf32>
    %37 = arith.truncf %36 : vector<256x4xf32> to vector<256x4xbf16>
    %c2_49 = arith.constant 2 : index
    %c0_50 = arith.constant 0 : index
    %c0_51 = arith.constant 0 : index
    %38 = vector.load %arg4[%c2_49, %c0_50, %c0_51] : memref<9x4x8xbf16, #tpu.memory_space<vmem>>, vector<1x4x8xbf16>
    %39 = vector.shape_cast %38 : vector<1x4x8xbf16> to vector<4x8xbf16>
    %cst_52 = arith.constant dense<0.000000e+00> : vector<256x8xf32>
    %40 = tpu.matmul %37, %39, %cst_52 {dimension_numbers = #tpu.dot_dimension_numbers<[1], [0], [0], [1], [0, 0, 1, 1], [], []>} : vector<256x4xbf16>, vector<4x8xbf16>, vector<256x8xf32> -> vector<256x8xf32>
    %41 = arith.addf %34, %40 : vector<256x8xf32>
    %c0_53 = arith.constant 0 : index
    %c1_54 = arith.constant 1 : index
    %c0_55 = arith.constant 0 : index
    %c0_56 = arith.constant 0 : index
    %42 = vector.load %arg6[%c0_53, %c1_54, %c0_55, %c0_56] : memref<1x18x18x4xf32, #tpu.memory_space<vmem>>, vector<1x16x16x4xf32>
    %43 = vector.shape_cast %42 : vector<1x16x16x4xf32> to vector<256x4xf32>
    %44 = arith.truncf %43 : vector<256x4xf32> to vector<256x4xbf16>
    %c3 = arith.constant 3 : index
    %c0_57 = arith.constant 0 : index
    %c0_58 = arith.constant 0 : index
    %45 = vector.load %arg4[%c3, %c0_57, %c0_58] : memref<9x4x8xbf16, #tpu.memory_space<vmem>>, vector<1x4x8xbf16>
    %46 = vector.shape_cast %45 : vector<1x4x8xbf16> to vector<4x8xbf16>
    %cst_59 = arith.constant dense<0.000000e+00> : vector<256x8xf32>
    %47 = tpu.matmul %44, %46, %cst_59 {dimension_numbers = #tpu.dot_dimension_numbers<[1], [0], [0], [1], [0, 0, 1, 1], [], []>} : vector<256x4xbf16>, vector<4x8xbf16>, vector<256x8xf32> -> vector<256x8xf32>
    %48 = arith.addf %41, %47 : vector<256x8xf32>
    %c0_60 = arith.constant 0 : index
    %c1_61 = arith.constant 1 : index
    %c1_62 = arith.constant 1 : index
    %c0_63 = arith.constant 0 : index
    %49 = vector.load %arg6[%c0_60, %c1_61, %c1_62, %c0_63] : memref<1x18x18x4xf32, #tpu.memory_space<vmem>>, vector<1x16x16x4xf32>
    %50 = vector.shape_cast %49 : vector<1x16x16x4xf32> to vector<256x4xf32>
    %51 = arith.truncf %50 : vector<256x4xf32> to vector<256x4xbf16>
    %c4 = arith.constant 4 : index
    %c0_64 = arith.constant 0 : index
    %c0_65 = arith.constant 0 : index
    %52 = vector.load %arg4[%c4, %c0_64, %c0_65] : memref<9x4x8xbf16, #tpu.memory_space<vmem>>, vector<1x4x8xbf16>
    %53 = vector.shape_cast %52 : vector<1x4x8xbf16> to vector<4x8xbf16>
    %cst_66 = arith.constant dense<0.000000e+00> : vector<256x8xf32>
    %54 = tpu.matmul %51, %53, %cst_66 {dimension_numbers = #tpu.dot_dimension_numbers<[1], [0], [0], [1], [0, 0, 1, 1], [], []>} : vector<256x4xbf16>, vector<4x8xbf16>, vector<256x8xf32> -> vector<256x8xf32>
    %55 = arith.addf %48, %54 : vector<256x8xf32>
    %c0_67 = arith.constant 0 : index
    %c1_68 = arith.constant 1 : index
    %c2_69 = arith.constant 2 : index
    %c0_70 = arith.constant 0 : index
    %56 = vector.load %arg6[%c0_67, %c1_68, %c2_69, %c0_70] : memref<1x18x18x4xf32, #tpu.memory_space<vmem>>, vector<1x16x16x4xf32>
    %57 = vector.shape_cast %56 : vector<1x16x16x4xf32> to vector<256x4xf32>
    %58 = arith.truncf %57 : vector<256x4xf32> to vector<256x4xbf16>
    %c5 = arith.constant 5 : index
    %c0_71 = arith.constant 0 : index
    %c0_72 = arith.constant 0 : index
    %59 = vector.load %arg4[%c5, %c0_71, %c0_72] : memref<9x4x8xbf16, #tpu.memory_space<vmem>>, vector<1x4x8xbf16>
    %60 = vector.shape_cast %59 : vector<1x4x8xbf16> to vector<4x8xbf16>
    %cst_73 = arith.constant dense<0.000000e+00> : vector<256x8xf32>
    %61 = tpu.matmul %58, %60, %cst_73 {dimension_numbers = #tpu.dot_dimension_numbers<[1], [0], [0], [1], [0, 0, 1, 1], [], []>} : vector<256x4xbf16>, vector<4x8xbf16>, vector<256x8xf32> -> vector<256x8xf32>
    %62 = arith.addf %55, %61 : vector<256x8xf32>
    %c0_74 = arith.constant 0 : index
    %c2_75 = arith.constant 2 : index
    %c0_76 = arith.constant 0 : index
    %c0_77 = arith.constant 0 : index
    %63 = vector.load %arg6[%c0_74, %c2_75, %c0_76, %c0_77] : memref<1x18x18x4xf32, #tpu.memory_space<vmem>>, vector<1x16x16x4xf32>
    %64 = vector.shape_cast %63 : vector<1x16x16x4xf32> to vector<256x4xf32>
    %65 = arith.truncf %64 : vector<256x4xf32> to vector<256x4xbf16>
    %c6 = arith.constant 6 : index
    %c0_78 = arith.constant 0 : index
    %c0_79 = arith.constant 0 : index
    %66 = vector.load %arg4[%c6, %c0_78, %c0_79] : memref<9x4x8xbf16, #tpu.memory_space<vmem>>, vector<1x4x8xbf16>
    %67 = vector.shape_cast %66 : vector<1x4x8xbf16> to vector<4x8xbf16>
    %cst_80 = arith.constant dense<0.000000e+00> : vector<256x8xf32>
    %68 = tpu.matmul %65, %67, %cst_80 {dimension_numbers = #tpu.dot_dimension_numbers<[1], [0], [0], [1], [0, 0, 1, 1], [], []>} : vector<256x4xbf16>, vector<4x8xbf16>, vector<256x8xf32> -> vector<256x8xf32>
    %69 = arith.addf %62, %68 : vector<256x8xf32>
    %c0_81 = arith.constant 0 : index
    %c2_82 = arith.constant 2 : index
    %c1_83 = arith.constant 1 : index
    %c0_84 = arith.constant 0 : index
    %70 = vector.load %arg6[%c0_81, %c2_82, %c1_83, %c0_84] : memref<1x18x18x4xf32, #tpu.memory_space<vmem>>, vector<1x16x16x4xf32>
    %71 = vector.shape_cast %70 : vector<1x16x16x4xf32> to vector<256x4xf32>
    %72 = arith.truncf %71 : vector<256x4xf32> to vector<256x4xbf16>
    %c7 = arith.constant 7 : index
    %c0_85 = arith.constant 0 : index
    %c0_86 = arith.constant 0 : index
    %73 = vector.load %arg4[%c7, %c0_85, %c0_86] : memref<9x4x8xbf16, #tpu.memory_space<vmem>>, vector<1x4x8xbf16>
    %74 = vector.shape_cast %73 : vector<1x4x8xbf16> to vector<4x8xbf16>
    %cst_87 = arith.constant dense<0.000000e+00> : vector<256x8xf32>
    %75 = tpu.matmul %72, %74, %cst_87 {dimension_numbers = #tpu.dot_dimension_numbers<[1], [0], [0], [1], [0, 0, 1, 1], [], []>} : vector<256x4xbf16>, vector<4x8xbf16>, vector<256x8xf32> -> vector<256x8xf32>
    %76 = arith.addf %69, %75 : vector<256x8xf32>
    %c0_88 = arith.constant 0 : index
    %c2_89 = arith.constant 2 : index
    %c2_90 = arith.constant 2 : index
    %c0_91 = arith.constant 0 : index
    %77 = vector.load %arg6[%c0_88, %c2_89, %c2_90, %c0_91] : memref<1x18x18x4xf32, #tpu.memory_space<vmem>>, vector<1x16x16x4xf32>
    %78 = vector.shape_cast %77 : vector<1x16x16x4xf32> to vector<256x4xf32>
    %79 = arith.truncf %78 : vector<256x4xf32> to vector<256x4xbf16>
    %c8 = arith.constant 8 : index
    %c0_92 = arith.constant 0 : index
    %c0_93 = arith.constant 0 : index
    %80 = vector.load %arg4[%c8, %c0_92, %c0_93] : memref<9x4x8xbf16, #tpu.memory_space<vmem>>, vector<1x4x8xbf16>
    %81 = vector.shape_cast %80 : vector<1x4x8xbf16> to vector<4x8xbf16>
    %cst_94 = arith.constant dense<0.000000e+00> : vector<256x8xf32>
    %82 = tpu.matmul %79, %81, %cst_94 {dimension_numbers = #tpu.dot_dimension_numbers<[1], [0], [0], [1], [0, 0, 1, 1], [], []>} : vector<256x4xbf16>, vector<4x8xbf16>, vector<256x8xf32> -> vector<256x8xf32>
    %83 = arith.addf %76, %82 : vector<256x8xf32>
    %84 = vector.shape_cast %0 : vector<1x16x16x4xf32> to vector<256x4xf32>
    %85 = tpu.concatenate %83, %84 in 1 : vector<256x8xf32>, vector<256x4xf32> -> vector<256x12xf32>
    %86 = vector.shape_cast %85 : vector<256x12xf32> to vector<1x16x16x12xf32>
    %c0_95 = arith.constant 0 : index
    %c0_96 = arith.constant 0 : index
    %c0_97 = arith.constant 0 : index
    %c0_98 = arith.constant 0 : index
    %87 = vector.load %arg5[%c0_95, %c0_96, %c0_97, %c0_98] : memref<1x16x16x12xf32, #tpu.memory_space<vmem>>, vector<1x16x16x12xf32>
    tpu.vector_store %arg5[%c0_95, %c0_96, %c0_97, %c0_98], %86 {strides = array<i32>} : memref<1x16x16x12xf32, #tpu.memory_space<vmem>>, vector<1x16x16x12xf32>,
    return
  }
  func.func @transform_0(%arg0: i32) -> (i32, i32, i32, i32) {
    %c0_i32 = arith.constant 0 : i32
    %c0_i32_0 = arith.constant 0 : i32
    %c0_i32_1 = arith.constant 0 : i32
    %c0_i32_2 = arith.constant 0 : i32
    return %arg0, %c0_i32, %c0_i32_0, %c0_i32_1 : i32, i32, i32, i32
  }
  func.func @transform_1(%arg0: i32) -> (i32, i32) {
    %c0_i32 = arith.constant 0 : i32
    %c0_i32_0 = arith.constant 0 : i32
    %c0_i32_1 = arith.constant 0 : i32
    return %c0_i32, %c0_i32_0 : i32, i32
  }
  func.func @transform_2(%arg0: i32) -> (i32, i32) {
    %c0_i32 = arith.constant 0 : i32
    %c0_i32_0 = arith.constant 0 : i32
    %c0_i32_1 = arith.constant 0 : i32
    return %c0_i32, %c0_i32_0 : i32, i32
  }
  func.func @transform_3(%arg0: i32) -> (i32, i32, i32) {
    %c0_i32 = arith.constant 0 : i32
    %c0_i32_0 = arith.constant 0 : i32
    %c0_i32_1 = arith.constant 0 : i32
    %c0_i32_2 = arith.constant 0 : i32
    return %c0_i32, %c0_i32_0, %c0_i32_1 : i32, i32, i32
  }
  func.func @transform_4(%arg0: i32) -> (i32, i32, i32, i32) {
    %c0_i32 = arith.constant 0 : i32
    %c0_i32_0 = arith.constant 0 : i32
    %c0_i32_1 = arith.constant 0 : i32
    %c0_i32_2 = arith.constant 0 : i32
    return %arg0, %c0_i32, %c0_i32_0, %c0_i32_1 : i32, i32, i32, i32
  }
}

</mosaic_0001>

<llo_original>
// kernel: tpu_custom_call.1
$region0: #{tpu_custom_call.1}
  #allocation0 [shape = 'u32[]', space=smem, size = 0x4, offset = 0x4, fixed_abs, tag = 'smem constant byte address 0x4 - core index']
  #allocation1 [shape = 'u32[144,128]{1,0:T(1,128)}', space=vmem, size = 0x12000, scoped, tag = 'internal scratch']
  #allocation2 [shape = 'f32[1,18,18,4]{3,2,1,0:T(8,128)}', space=vmem, size = 0x36000, scoped, tag = 'scratch operand']
  %s0 = inlined_call_operand.vmem [shape: f32[2,16,16,4], index: 0, kind: input, shape index: {}]
  %s1 = inlined_call_operand.vmem [shape: f32[1,4], index: 1, kind: input, shape index: {}]
  %s2 = inlined_call_operand.vmem [shape: f32[1,4], index: 2, kind: input, shape index: {}]
  %s3 = inlined_call_operand.vmem [shape: bf16[9,4,8], index: 3, kind: input, shape index: {}]
  %s4 = inlined_call_operand.vmem [shape: f32[2,16,16,12], index: 4, kind: output, shape index: {}]
  %s5 = sld [smem:[#allocation0]]
  $region49: #{tpu_custom_call.1} parent=0
    _
  %s7 = ssub.s32 1, %s5
  %s8 = scalar_select 0, %s7, %s5
  loop: start=0, step=1, limit=4
  $region2: #{tpu_custom_call.1} parent=0 // loop_pre_header
    _
  $region3: #{tpu_custom_call.1} parent=0 // loop_header
    %s10 = sphi 0, %s14
    %p11 = scmp.ge.s32.totalorder %s10, 4
    %s20 = sphi 0, %s22
    %s23 = sphi 0, %s20
    %s24 = sphi 0, %s23
    %s40 = sphi 0, %s24
    %s44 = sphi 0, %s44
    %s46 = sphi 0, %s44
    %s47 = sphi 0, %s46
    %s61 = sphi 0, %s47
    %s65 = sphi 0, %s65
    %s67 = sphi 0, %s65
    %s68 = sphi 0, %s67
    %s82 = sphi 0, %s68
    %s86 = sphi 0, %s86
    %s88 = sphi 0, %s86
    %s89 = sphi 0, %s88
    %s103 = sphi 0, %s89
    %s109 = sphi 0, %s111
    %s112 = sphi 0, %s109
    %s113 = sphi 0, %s112
    %s129 = sphi 0, %s113
  $region4: #{tpu_custom_call.1} parent=0 // loop_header_branch
    %13 = sbr.rel (%p11) target = $region8
  $region5: #{tpu_custom_call.1} parent=0 // loop_body
    %s15 = ssub.s32 %s10, 1
    %s16 = ssub.s32 %s10, 2
    %s17 = sadd.s32 %s10, 1
    %s18 = ssub.s32 %s10, %s17
    %p19 = scmp.eq.s32.totalorder %s18, 0
    %s21 = sadd.s32 %s20, 1
    %s22 = scalar_select %p19, %s20, %s21
    %p25 = pneg %p19
    %p26 = scmp.eq.s32.totalorder %s10, 1
    %p27 = por %p25, %p26
    %p28 = scmp.ne.s32.totalorder %s20, %s23
    %p29 = scmp.eq.s32.totalorder %s10, 0
    %p30 = por %p28, %p29
    %p31 = scmp.ne.s32.totalorder %s20, %s23
    %p32 = scmp.eq.s32.totalorder %s15, 1
    %p33 = por %p31, %p32
    %p34 = scmp.ne.s32.totalorder %s23, %s24
    %p35 = scmp.eq.s32.totalorder %s15, 0
    %p36 = por %p34, %p35
    %p37 = scmp.ne.s32.totalorder %s23, %s24
    %p38 = scmp.eq.s32.totalorder %s16, 1
    %p39 = por %p37, %p38
    %p41 = scmp.ne.s32.totalorder %s24, %s40
    %p42 = scmp.eq.s32.totalorder %s16, 0
    %p43 = por %p41, %p42
    %s45 = sadd.s32 %s44, 1
    %p48 = scmp.eq.s32.totalorder %s10, 1
    %p49 = scmp.ne.s32.totalorder %s44, %s46
    %p50 = scmp.eq.s32.totalorder %s10, 0
    %p51 = por %p49, %p50
    %p52 = scmp.ne.s32.totalorder %s44, %s46
    %p53 = scmp.eq.s32.totalorder %s15, 1
    %p54 = por %p52, %p53
    %p55 = scmp.ne.s32.totalorder %s46, %s47
    %p56 = scmp.eq.s32.totalorder %s15, 0
    %p57 = por %p55, %p56
    %p58 = scmp.ne.s32.totalorder %s46, %s47
    %p59 = scmp.eq.s32.totalorder %s16, 1
    %p60 = por %p58, %p59
    %p62 = scmp.ne.s32.totalorder %s47, %s61
    %p63 = scmp.eq.s32.totalorder %s16, 0
    %p64 = por %p62, %p63
    %s66 = sadd.s32 %s65, 1
    %p69 = scmp.eq.s32.totalorder %s10, 1
    %p70 = scmp.ne.s32.totalorder %s65, %s67
    %p71 = scmp.eq.s32.totalorder %s10, 0
    %p72 = por %p70, %p71
    %p73 = scmp.ne.s32.totalorder %s65, %s67
    %p74 = scmp.eq.s32.totalorder %s15, 1
    %p75 = por %p73, %p74
    %p76 = scmp.ne.s32.totalorder %s67, %s68
    %p77 = scmp.eq.s32.totalorder %s15, 0
    %p78 = por %p76, %p77
    %p79 = scmp.ne.s32.totalorder %s67, %s68
    %p80 = scmp.eq.s32.totalorder %s16, 1
    %p81 = por %p79, %p80
    %p83 = scmp.ne.s32.totalorder %s68, %s82
    %p84 = scmp.eq.s32.totalorder %s16, 0
    %p85 = por %p83, %p84
    %s87 = sadd.s32 %s86, 1
    %p90 = scmp.eq.s32.totalorder %s10, 1
    %p91 = scmp.ne.s32.totalorder %s86, %s88
    %p92 = scmp.eq.s32.totalorder %s10, 0
    %p93 = por %p91, %p92
    %p94 = scmp.ne.s32.totalorder %s86, %s88
    %p95 = scmp.eq.s32.totalorder %s15, 1
    %p96 = por %p94, %p95
    %p97 = scmp.ne.s32.totalorder %s88, %s89
    %p98 = scmp.eq.s32.totalorder %s15, 0
    %p99 = por %p97, %p98
    %p100 = scmp.ne.s32.totalorder %s88, %s89
    %p101 = scmp.eq.s32.totalorder %s16, 1
    %p102 = por %p100, %p101
    %p104 = scmp.ne.s32.totalorder %s89, %s103
    %p105 = scmp.eq.s32.totalorder %s16, 0
    %p106 = por %p104, %p105
    %s107 = ssub.s32 %s10, %s17
    %p108 = scmp.eq.s32.totalorder %s107, 0
    %s110 = sadd.s32 %s109, 1
    %s111 = scalar_select %p108, %s109, %s110
    %p114 = pneg %p108
    %p115 = scmp.eq.s32.totalorder %s10, 1
    %p116 = por %p114, %p115
    %p117 = scmp.ne.s32.totalorder %s109, %s112
    %p118 = scmp.eq.s32.totalorder %s10, 0
    %p119 = por %p117, %p118
    %p120 = scmp.ne.s32.totalorder %s109, %s112
    %p121 = scmp.eq.s32.totalorder %s15, 1
    %p122 = por %p120, %p121
    %p123 = scmp.ne.s32.totalorder %s112, %s113
    %p124 = scmp.eq.s32.totalorder %s15, 0
    %p125 = por %p123, %p124
    %p126 = scmp.ne.s32.totalorder %s112, %s113
    %p127 = scmp.eq.s32.totalorder %s16, 1
    %p128 = por %p126, %p127
    %p130 = scmp.ne.s32.totalorder %s113, %s129
    %p131 = scmp.eq.s32.totalorder %s16, 0
    %p132 = por %p130, %p131
    %p133 = scmp.le.s32.totalorder 1, %s10
    %p134 = scmp.lt.s32.totalorder %s10, 3
    %p135 = pnand %p133, %p134
    %p136 = pneg %p135
    // Predicated region
    $region9: #{tpu_custom_call.1} parent=5 // pred_check
      _
    $region10: #{tpu_custom_call.1} parent=5 // pred_check_branch
      %138 = sbr.rel (%p135) target = $region12
    $region11: #{tpu_custom_call.1} parent=5 // pred_region
      %s139 = ssub.s32 %s10, 1
      // Predicated region
      $region13: #{tpu_custom_call.1} parent=11 // pred_check
        %p140 = pneg %p57
      $region14: #{tpu_custom_call.1} parent=11 // pred_check_branch
        %142 = sbr.rel (%p140) target = $region16
      $region15: #{tpu_custom_call.1} parent=11 // pred_region
        _
      $region16: #{tpu_custom_call.1} parent=11 // pred_fallthru
        _
      // Predicated region
      $region17: #{tpu_custom_call.1} parent=11 // pred_check
        %p143 = pneg %p78
      $region18: #{tpu_custom_call.1} parent=11 // pred_check_branch
        %145 = sbr.rel (%p143) target = $region20
      $region19: #{tpu_custom_call.1} parent=11 // pred_region
        _
      $region20: #{tpu_custom_call.1} parent=11 // pred_fallthru
        _
      // Predicated region
      $region21: #{tpu_custom_call.1} parent=11 // pred_check
        %p146 = pneg %p99
      $region22: #{tpu_custom_call.1} parent=11 // pred_check_branch
        %148 = sbr.rel (%p146) target = $region24
      $region23: #{tpu_custom_call.1} parent=11 // pred_region
        _
      $region24: #{tpu_custom_call.1} parent=11 // pred_fallthru
        _
    $region12: #{tpu_custom_call.1} parent=5 // pred_fallthru
      _
    %p149 = scmp.lt.s32.totalorder %s10, 2
    // Predicated region
    $region25: #{tpu_custom_call.1} parent=5 // pred_check
      %p150 = pneg %p149
    $region26: #{tpu_custom_call.1} parent=5 // pred_check_branch
      %152 = sbr.rel (%p150) target = $region28
    $region27: #{tpu_custom_call.1} parent=5 // pred_region
      // Predicated region
      $region29: #{tpu_custom_call.1} parent=27 // pred_check
        %p153 = pneg %p30
      $region30: #{tpu_custom_call.1} parent=27 // pred_check_branch
        %155 = sbr.rel (%p153) target = $region32
      $region31: #{tpu_custom_call.1} parent=27 // pred_region
        %p156 = scmp.lt.s32.totalorder %s10, 1
        %s157 = scalar_select %p156, %s10, 1
        %s158 = smul.addr %s157, 32
        %s159 = smul.addr %s158, 8
        %s160 = scalar_lea.vmem %s0, %s159
      $region32: #{tpu_custom_call.1} parent=27 // pred_fallthru
        _
    $region28: #{tpu_custom_call.1} parent=5 // pred_fallthru
      _
    %p161 = scmp.le.s32.totalorder 1, %s10
    %p162 = scmp.lt.s32.totalorder %s10, 3
    %p163 = pnand %p161, %p162
    %p164 = pneg %p163
    // Predicated region
    $region33: #{tpu_custom_call.1} parent=5 // pred_check
      _
    $region34: #{tpu_custom_call.1} parent=5 // pred_check_branch
      %166 = sbr.rel (%p163) target = $region36
    $region35: #{tpu_custom_call.1} parent=5 // pred_region
      %s167 = ssub.s32 %s10, 1
      %p168 = scmp.lt.s32.totalorder %s15, 1
      %s169 = scalar_select %p168, %s15, 1
      %s170 = smul.addr %s169, 32
      %s171 = smul.addr %s170, 8
      %s172 = scalar_lea.vmem %s0, %s171
      %p173 = pneg %p36
      %p174 = pneg %p33
      %p175 = pneg %p57
      %p176 = pneg %p54
      %p177 = pneg %p78
      %p178 = pneg %p75
      %p179 = pneg %p99
      %p180 = pneg %p96
      %p181 = pneg %p125
      %p182 = pneg %p122
      %p183 = scmp.lt.s32.totalorder %s15, 1
      %s184 = scalar_select %p183, %s15, 1
      %s185 = smul.addr %s184, 32
      %s186 = smul.addr %s185, 8
      %s187 = scalar_lea.vmem %s4, %s186
      %p188 = scmp.lt.s32.totalorder %s15, 1
      %s189 = scalar_select %p188, %s15, 1
      %s190 = smul.addr %s189, 32
      %s191 = smul.addr %s190, 8
      %s192 = scalar_lea.vmem %s0, %s191
      %p193 = scmp.lt.s32.totalorder %s15, 1
      %s194 = scalar_select %p193, %s15, 1
      %s195 = smul.addr %s194, 32
      %s196 = smul.addr %s195, 8
      %s197 = scalar_lea.vmem %s4, %s196
      %v199 = vld [vmem:[%s192] sm:$0xff]
      %v200 = vld [vmem:[%s192 + $0x8] sm:$0xff]
      %v201 = vld [vmem:[%s192 + $0x10] sm:$0xff]
      %v202 = vld [vmem:[%s192 + $0x18] sm:$0xff]
      %v203 = vld [vmem:[%s192 + $0x20] sm:$0xff]
      %v204 = vld [vmem:[%s192 + $0x28] sm:$0xff]
      %v205 = vld [vmem:[%s192 + $0x30] sm:$0xff]
      %v206 = vld [vmem:[%s192 + $0x38] sm:$0xff]
      %v207 = vld [vmem:[%s192 + $0x40] sm:$0xff]
      %v208 = vld [vmem:[%s192 + $0x48] sm:$0xff]
      %v209 = vld [vmem:[%s192 + $0x50] sm:$0xff]
      %v210 = vld [vmem:[%s192 + $0x58] sm:$0xff]
      %v211 = vld [vmem:[%s192 + $0x60] sm:$0xff]
      %v212 = vld [vmem:[%s192 + $0x68] sm:$0xff]
      %v213 = vld [vmem:[%s192 + $0x70] sm:$0xff]
      %v214 = vld [vmem:[%s192 + $0x78] sm:$0xff]
      %v215 = vld [vmem:[%s192 + $0x80] sm:$0xff]
      %v216 = vld [vmem:[%s192 + $0x88] sm:$0xff]
      %v217 = vld [vmem:[%s192 + $0x90] sm:$0xff]
      %v218 = vld [vmem:[%s192 + $0x98] sm:$0xff]
      %v219 = vld [vmem:[%s192 + $0xa0] sm:$0xff]
      %v220 = vld [vmem:[%s192 + $0xa8] sm:$0xff]
      %v221 = vld [vmem:[%s192 + $0xb0] sm:$0xff]
      %v222 = vld [vmem:[%s192 + $0xb8] sm:$0xff]
      %v223 = vld [vmem:[%s192 + $0xc0] sm:$0xff]
      %v224 = vld [vmem:[%s192 + $0xc8] sm:$0xff]
      %v225 = vld [vmem:[%s192 + $0xd0] sm:$0xff]
      %v226 = vld [vmem:[%s192 + $0xd8] sm:$0xff]
      %v227 = vld [vmem:[%s192 + $0xe0] sm:$0xff]
      %v228 = vld [vmem:[%s192 + $0xe8] sm:$0xff]
      %v229 = vld [vmem:[%s192 + $0xf0] sm:$0xff]
      %v230 = vld [vmem:[%s192 + $0xf8] sm:$0xff]
      %v231 = vld [vmem:[%s1] sm:$0x1]
      %v233 = vlaneseq
      %v234 = vshrl.u32 %v233, 7
      %v235 = vsub.s32 0, %v234
      %v236 = vrot.slane %v231, %v235
      %v238 = vmul.f32 %v199, %v236
      %v239 = vmul.f32 %v200, %v236
      %v240 = vmul.f32 %v201, %v236
      %v241 = vmul.f32 %v202, %v236
      %v242 = vmul.f32 %v203, %v236
      %v243 = vmul.f32 %v204, %v236
      %v244 = vmul.f32 %v205, %v236
      %v245 = vmul.f32 %v206, %v236
      %v246 = vmul.f32 %v207, %v236
      %v247 = vmul.f32 %v208, %v236
      %v248 = vmul.f32 %v209, %v236
      %v249 = vmul.f32 %v210, %v236
      %v250 = vmul.f32 %v211, %v236
      %v251 = vmul.f32 %v212, %v236
      %v252 = vmul.f32 %v213, %v236
      %v253 = vmul.f32 %v214, %v236
      %v254 = vmul.f32 %v215, %v236
      %v255 = vmul.f32 %v216, %v236
      %v256 = vmul.f32 %v217, %v236
      %v257 = vmul.f32 %v218, %v236
      %v258 = vmul.f32 %v219, %v236
      %v259 = vmul.f32 %v220, %v236
      %v260 = vmul.f32 %v221, %v236
      %v261 = vmul.f32 %v222, %v236
      %v262 = vmul.f32 %v223, %v236
      %v263 = vmul.f32 %v224, %v236
      %v264 = vmul.f32 %v225, %v236
      %v265 = vmul.f32 %v226, %v236
      %v266 = vmul.f32 %v227, %v236
      %v267 = vmul.f32 %v228, %v236
      %v268 = vmul.f32 %v229, %v236
      %v269 = vmul.f32 %v230, %v236
      %v270 = vld [vmem:[%s2] sm:$0x1]
      %v272 = vlaneseq
      %v273 = vshrl.u32 %v272, 7
      %v274 = vsub.s32 0, %v273
      %v275 = vrot.slane %v270, %v274
      %v277 = vadd.f32 %v238, %v275
      %v278 = vadd.f32 %v239, %v275
      %v279 = vadd.f32 %v240, %v275
      %v280 = vadd.f32 %v241, %v275
      %v281 = vadd.f32 %v242, %v275
      %v282 = vadd.f32 %v243, %v275
      %v283 = vadd.f32 %v244, %v275
      %v284 = vadd.f32 %v245, %v275
      %v285 = vadd.f32 %v246, %v275
      %v286 = vadd.f32 %v247, %v275
      %v287 = vadd.f32 %v248, %v275
      %v288 = vadd.f32 %v249, %v275
      %v289 = vadd.f32 %v250, %v275
      %v290 = vadd.f32 %v251, %v275
      %v291 = vadd.f32 %v252, %v275
      %v292 = vadd.f32 %v253, %v275
      %v293 = vadd.f32 %v254, %v275
      %v294 = vadd.f32 %v255, %v275
      %v295 = vadd.f32 %v256, %v275
      %v296 = vadd.f32 %v257, %v275
      %v297 = vadd.f32 %v258, %v275
      %v298 = vadd.f32 %v259, %v275
      %v299 = vadd.f32 %v260, %v275
      %v300 = vadd.f32 %v261, %v275
      %v301 = vadd.f32 %v262, %v275
      %v302 = vadd.f32 %v263, %v275
      %v303 = vadd.f32 %v264, %v275
      %v304 = vadd.f32 %v265, %v275
      %v305 = vadd.f32 %v266, %v275
      %v306 = vadd.f32 %v267, %v275
      %v307 = vadd.f32 %v268, %v275
      %v308 = vadd.f32 %v269, %v275
      %v309 = vmax.f32 %v277, 0.0
      %v310 = vmax.f32 %v278, 0.0
      %v311 = vmax.f32 %v279, 0.0
      %v312 = vmax.f32 %v280, 0.0
      %v313 = vmax.f32 %v281, 0.0
      %v314 = vmax.f32 %v282, 0.0
      %v315 = vmax.f32 %v283, 0.0
      %v316 = vmax.f32 %v284, 0.0
      %v317 = vmax.f32 %v285, 0.0
      %v318 = vmax.f32 %v286, 0.0
      %v319 = vmax.f32 %v287, 0.0
      %v320 = vmax.f32 %v288, 0.0
      %v321 = vmax.f32 %v289, 0.0
      %v322 = vmax.f32 %v290, 0.0
      %v323 = vmax.f32 %v291, 0.0
      %v324 = vmax.f32 %v292, 0.0
      %v325 = vmax.f32 %v293, 0.0
      %v326 = vmax.f32 %v294, 0.0
      %v327 = vmax.f32 %v295, 0.0
      %v328 = vmax.f32 %v296, 0.0
      %v329 = vmax.f32 %v297, 0.0
      %v330 = vmax.f32 %v298, 0.0
      %v331 = vmax.f32 %v299, 0.0
      %v332 = vmax.f32 %v300, 0.0
      %v333 = vmax.f32 %v301, 0.0
      %v334 = vmax.f32 %v302, 0.0
      %v335 = vmax.f32 %v303, 0.0
      %v336 = vmax.f32 %v304, 0.0
      %v337 = vmax.f32 %v305, 0.0
      %v338 = vmax.f32 %v306, 0.0
      %v339 = vmax.f32 %v307, 0.0
      %v340 = vmax.f32 %v308, 0.0
      %vm341 = vcmask 31744
      %342 = vst.msk [vmem:[#allocation2] sm:$0xff] %vm341, 0.0
      %343 = vst.msk [vmem:[#allocation2 + $0x8] sm:$0xff] %vm341, 0.0
      %vm344 = vcmask 25600
      %345 = vst.msk [vmem:[#allocation2 + $0x10] sm:$0x3] %vm344, 0.0
      %s346 = scalar_lea.vmem [#allocation2], 408
      %347 = vst.msk [vmem:[%s346] sm:$0xff] %vm341, 0.0
      %348 = vst.msk [vmem:[%s346 + $0x8] sm:$0xff] %vm341, 0.0
      %349 = vst.msk [vmem:[%s346 + $0x10] sm:$0x3] %vm344, 0.0
      %vm350 = vcmask 24576
      %351 = vst.msk [vmem:[#allocation2] sm:$0x1] %vm350, 0.0
      %352 = vst.msk [vmem:[#allocation2 + $0x18] sm:$0x1] %vm350, 0.0
      %353 = vst.msk [vmem:[#allocation2 + $0x30] sm:$0x1] %vm350, 0.0
      %354 = vst.msk [vmem:[#allocation2 + $0x48] sm:$0x1] %vm350, 0.0
      %355 = vst.msk [vmem:[#allocation2 + $0x60] sm:$0x1] %vm350, 0.0
      %356 = vst.msk [vmem:[#allocation2 + $0x78] sm:$0x1] %vm350, 0.0
      %357 = vst.msk [vmem:[#allocation2 + $0x90] sm:$0x1] %vm350, 0.0
      %358 = vst.msk [vmem:[#allocation2 + $0xa8] sm:$0x1] %vm350, 0.0
      %359 = vst.msk [vmem:[#allocation2 + $0xc0] sm:$0x1] %vm350, 0.0
      %360 = vst.msk [vmem:[#allocation2 + $0xd8] sm:$0x1] %vm350, 0.0
      %361 = vst.msk [vmem:[#allocation2 + $0xf0] sm:$0x1] %vm350, 0.0
      %362 = vst.msk [vmem:[#allocation2 + $0x108] sm:$0x1] %vm350, 0.0
      %363 = vst.msk [vmem:[#allocation2 + $0x120] sm:$0x1] %vm350, 0.0
      %364 = vst.msk [vmem:[#allocation2 + $0x138] sm:$0x1] %vm350, 0.0
      %365 = vst.msk [vmem:[#allocation2 + $0x150] sm:$0x1] %vm350, 0.0
      %366 = vst.msk [vmem:[#allocation2 + $0x168] sm:$0x1] %vm350, 0.0
      %367 = vst.msk [vmem:[#allocation2 + $0x180] sm:$0x1] %vm350, 0.0
      %368 = vst.msk [vmem:[#allocation2 + $0x198] sm:$0x1] %vm350, 0.0
      %369 = vst.msk [vmem:[#allocation2 + $0x11] sm:$0x1] %vm350, 0.0
      %370 = vst.msk [vmem:[#allocation2 + $0x29] sm:$0x1] %vm350, 0.0
      %371 = vst.msk [vmem:[#allocation2 + $0x41] sm:$0x1] %vm350, 0.0
      %372 = vst.msk [vmem:[#allocation2 + $0x59] sm:$0x1] %vm350, 0.0
      %373 = vst.msk [vmem:[#allocation2 + $0x71] sm:$0x1] %vm350, 0.0
      %374 = vst.msk [vmem:[#allocation2 + $0x89] sm:$0x1] %vm350, 0.0
      %375 = vst.msk [vmem:[#allocation2 + $0xa1] sm:$0x1] %vm350, 0.0
      %376 = vst.msk [vmem:[#allocation2 + $0xb9] sm:$0x1] %vm350, 0.0
      %377 = vst.msk [vmem:[#allocation2 + $0xd1] sm:$0x1] %vm350, 0.0
      %378 = vst.msk [vmem:[#allocation2 + $0xe9] sm:$0x1] %vm350, 0.0
      %379 = vst.msk [vmem:[#allocation2 + $0x101] sm:$0x1] %vm350, 0.0
      %380 = vst.msk [vmem:[#allocation2 + $0x119] sm:$0x1] %vm350, 0.0
      %381 = vst.msk [vmem:[#allocation2 + $0x131] sm:$0x1] %vm350, 0.0
      %382 = vst.msk [vmem:[#allocation2 + $0x149] sm:$0x1] %vm350, 0.0
      %383 = vst.msk [vmem:[#allocation2 + $0x161] sm:$0x1] %vm350, 0.0
      %384 = vst.msk [vmem:[#allocation2 + $0x179] sm:$0x1] %vm350, 0.0
      %385 = vst.msk [vmem:[#allocation2 + $0x191] sm:$0x1] %vm350, 0.0
      %386 = vst.msk [vmem:[#allocation2 + $0x1a9] sm:$0x1] %vm350, 0.0
      %s387 = scalar_lea.vmem [#allocation2], 24
      %388 = vst.msk [vmem:[%s387 + $0x1] sm:$0xff] %vm341, %v309
      %389 = vst.msk [vmem:[%s387 + $0x9] sm:$0xff] %vm341, %v310
      %390 = vst.msk [vmem:[%s387 + $0x19] sm:$0xff] %vm341, %v311
      %391 = vst.msk [vmem:[%s387 + $0x21] sm:$0xff] %vm341, %v312
      %392 = vst.msk [vmem:[%s387 + $0x31] sm:$0xff] %vm341, %v313
      %393 = vst.msk [vmem:[%s387 + $0x39] sm:$0xff] %vm341, %v314
      %394 = vst.msk [vmem:[%s387 + $0x49] sm:$0xff] %vm341, %v315
      %395 = vst.msk [vmem:[%s387 + $0x51] sm:$0xff] %vm341, %v316
      %396 = vst.msk [vmem:[%s387 + $0x61] sm:$0xff] %vm341, %v317
      %397 = vst.msk [vmem:[%s387 + $0x69] sm:$0xff] %vm341, %v318
      %398 = vst.msk [vmem:[%s387 + $0x79] sm:$0xff] %vm341, %v319
      %399 = vst.msk [vmem:[%s387 + $0x81] sm:$0xff] %vm341, %v320
      %400 = vst.msk [vmem:[%s387 + $0x91] sm:$0xff] %vm341, %v321
      %401 = vst.msk [vmem:[%s387 + $0x99] sm:$0xff] %vm341, %v322
      %402 = vst.msk [vmem:[%s387 + $0xa9] sm:$0xff] %vm341, %v323
      %403 = vst.msk [vmem:[%s387 + $0xb1] sm:$0xff] %vm341, %v324
      %404 = vst.msk [vmem:[%s387 + $0xc1] sm:$0xff] %vm341, %v325
      %405 = vst.msk [vmem:[%s387 + $0xc9] sm:$0xff] %vm341, %v326
      %406 = vst.msk [vmem:[%s387 + $0xd9] sm:$0xff] %vm341, %v327
      %407 = vst.msk [vmem:[%s387 + $0xe1] sm:$0xff] %vm341, %v328
      %408 = vst.msk [vmem:[%s387 + $0xf1] sm:$0xff] %vm341, %v329
      %409 = vst.msk [vmem:[%s387 + $0xf9] sm:$0xff] %vm341, %v330
      %410 = vst.msk [vmem:[%s387 + $0x109] sm:$0xff] %vm341, %v331
      %411 = vst.msk [vmem:[%s387 + $0x111] sm:$0xff] %vm341, %v332
      %412 = vst.msk [vmem:[%s387 + $0x121] sm:$0xff] %vm341, %v333
      %413 = vst.msk [vmem:[%s387 + $0x129] sm:$0xff] %vm341, %v334
      %414 = vst.msk [vmem:[%s387 + $0x139] sm:$0xff] %vm341, %v335
      %415 = vst.msk [vmem:[%s387 + $0x141] sm:$0xff] %vm341, %v336
      %416 = vst.msk [vmem:[%s387 + $0x151] sm:$0xff] %vm341, %v337
      %417 = vst.msk [vmem:[%s387 + $0x159] sm:$0xff] %vm341, %v338
      %418 = vst.msk [vmem:[%s387 + $0x169] sm:$0xff] %vm341, %v339
      %419 = vst.msk [vmem:[%s387 + $0x171] sm:$0xff] %vm341, %v340
      %v420 = vld [vmem:[#allocation2] sm:$0xff]
      %v421 = vld [vmem:[#allocation2 + $0x8] sm:$0xff]
      %v422 = vld [vmem:[#allocation2 + $0x18] sm:$0xff]
      %v423 = vld [vmem:[#allocation2 + $0x20] sm:$0xff]
      %v424 = vld [vmem:[#allocation2 + $0x30] sm:$0xff]
      %v425 = vld [vmem:[#allocation2 + $0x38] sm:$0xff]
      %v426 = vld [vmem:[#allocation2 + $0x48] sm:$0xff]
      %v427 = vld [vmem:[#allocation2 + $0x50] sm:$0xff]
      %v428 = vld [vmem:[#allocation2 + $0x60] sm:$0xff]
      %v429 = vld [vmem:[#allocation2 + $0x68] sm:$0xff]
      %v430 = vld [vmem:[#allocation2 + $0x78] sm:$0xff]
      %v431 = vld [vmem:[#allocation2 + $0x80] sm:$0xff]
      %v432 = vld [vmem:[#allocation2 + $0x90] sm:$0xff]
      %v433 = vld [vmem:[#allocation2 + $0x98] sm:$0xff]
      %v434 = vld [vmem:[#allocation2 + $0xa8] sm:$0xff]
      %v435 = vld [vmem:[#allocation2 + $0xb0] sm:$0xff]
      %v436 = vld [vmem:[#allocation2 + $0xc0] sm:$0xff]
      %v437 = vld [vmem:[#allocation2 + $0xc8] sm:$0xff]
      %v438 = vld [vmem:[#allocation2 + $0xd8] sm:$0xff]
      %v439 = vld [vmem:[#allocation2 + $0xe0] sm:$0xff]
      %v440 = vld [vmem:[#allocation2 + $0xf0] sm:$0xff]
      %v441 = vld [vmem:[#allocation2 + $0xf8] sm:$0xff]
      %v442 = vld [vmem:[#allocation2 + $0x108] sm:$0xff]
      %v443 = vld [vmem:[#allocation2 + $0x110] sm:$0xff]
      %v444 = vld [vmem:[#allocation2 + $0x120] sm:$0xff]
      %v445 = vld [vmem:[#allocation2 + $0x128] sm:$0xff]
      %v446 = vld [vmem:[#allocation2 + $0x138] sm:$0xff]
      %v447 = vld [vmem:[#allocation2 + $0x140] sm:$0xff]
      %v448 = vld [vmem:[#allocation2 + $0x150] sm:$0xff]
      %v449 = vld [vmem:[#allocation2 + $0x158] sm:$0xff]
      %v450 = vld [vmem:[#allocation2 + $0x168] sm:$0xff]
      %v451 = vld [vmem:[#allocation2 + $0x170] sm:$0xff]
      %v452 = vpack.c.bf16 %v421, %v420
      %v453 = vpack.c.bf16 %v423, %v422
      %v454 = vpack.c.bf16 %v425, %v424
      %v455 = vpack.c.bf16 %v427, %v426
      %v456 = vpack.c.bf16 %v429, %v428
      %v457 = vpack.c.bf16 %v431, %v430
      %v458 = vpack.c.bf16 %v433, %v432
      %v459 = vpack.c.bf16 %v435, %v434
      %v460 = vpack.c.bf16 %v437, %v436
      %v461 = vpack.c.bf16 %v439, %v438
      %v462 = vpack.c.bf16 %v441, %v440
      %v463 = vpack.c.bf16 %v443, %v442
      %v464 = vpack.c.bf16 %v445, %v444
      %v465 = vpack.c.bf16 %v447, %v446
      %v466 = vpack.c.bf16 %v449, %v448
      %v467 = vpack.c.bf16 %v451, %v450
      %v468 = vld [vmem:[%s3] sm:$0x3]
      %v469 = vld [vmem:[#allocation2 + $0x1] sm:$0xff]
      %v470 = vld [vmem:[#allocation2 + $0x9] sm:$0xff]
      %v471 = vld [vmem:[#allocation2 + $0x19] sm:$0xff]
      %v472 = vld [vmem:[#allocation2 + $0x21] sm:$0xff]
      %v473 = vld [vmem:[#allocation2 + $0x31] sm:$0xff]
      %v474 = vld [vmem:[#allocation2 + $0x39] sm:$0xff]
      %v475 = vld [vmem:[#allocation2 + $0x49] sm:$0xff]
      %v476 = vld [vmem:[#allocation2 + $0x51] sm:$0xff]
      %v477 = vld [vmem:[#allocation2 + $0x61] sm:$0xff]
      %v478 = vld [vmem:[#allocation2 + $0x69] sm:$0xff]
      %v479 = vld [vmem:[#allocation2 + $0x79] sm:$0xff]
      %v480 = vld [vmem:[#allocation2 + $0x81] sm:$0xff]
      %v481 = vld [vmem:[#allocation2 + $0x91] sm:$0xff]
      %v482 = vld [vmem:[#allocation2 + $0x99] sm:$0xff]
      %v483 = vld [vmem:[#allocation2 + $0xa9] sm:$0xff]
      %v484 = vld [vmem:[#allocation2 + $0xb1] sm:$0xff]
      %v485 = vld [vmem:[#allocation2 + $0xc1] sm:$0xff]
      %v486 = vld [vmem:[#allocation2 + $0xc9] sm:$0xff]
      %v487 = vld [vmem:[#allocation2 + $0xd9] sm:$0xff]
      %v488 = vld [vmem:[#allocation2 + $0xe1] sm:$0xff]
      %v489 = vld [vmem:[#allocation2 + $0xf1] sm:$0xff]
      %v490 = vld [vmem:[#allocation2 + $0xf9] sm:$0xff]
      %v491 = vld [vmem:[#allocation2 + $0x109] sm:$0xff]
      %v492 = vld [vmem:[#allocation2 + $0x111] sm:$0xff]
      %v493 = vld [vmem:[#allocation2 + $0x121] sm:$0xff]
      %v494 = vld [vmem:[#allocation2 + $0x129] sm:$0xff]
      %v495 = vld [vmem:[#allocation2 + $0x139] sm:$0xff]
      %v496 = vld [vmem:[#allocation2 + $0x141] sm:$0xff]
      %v497 = vld [vmem:[#allocation2 + $0x151] sm:$0xff]
      %v498 = vld [vmem:[#allocation2 + $0x159] sm:$0xff]
      %v499 = vld [vmem:[#allocation2 + $0x169] sm:$0xff]
      %v500 = vld [vmem:[#allocation2 + $0x171] sm:$0xff]
      %v501 = vpack.c.bf16 %v470, %v469
      %v502 = vpack.c.bf16 %v472, %v471
      %v503 = vpack.c.bf16 %v474, %v473
      %v504 = vpack.c.bf16 %v476, %v475
      %v505 = vpack.c.bf16 %v478, %v477
      %v506 = vpack.c.bf16 %v480, %v479
      %v507 = vpack.c.bf16 %v482, %v481
      %v508 = vpack.c.bf16 %v484, %v483
      %v509 = vpack.c.bf16 %v486, %v485
      %v510 = vpack.c.bf16 %v488, %v487
      %v511 = vpack.c.bf16 %v490, %v489
      %v512 = vpack.c.bf16 %v492, %v491
      %v513 = vpack.c.bf16 %v494, %v493
      %v514 = vpack.c.bf16 %v496, %v495
      %v515 = vpack.c.bf16 %v498, %v497
      %v516 = vpack.c.bf16 %v500, %v499
      %s517 = scalar_lea.vmem %s3, 2
      %v518 = vld [vmem:[%s517] sm:$0x3]
      %v520 = vsel %vm341, %v501, 0
      %v523 = vsel %vm341, %v502, 0
      %v526 = vsel %vm341, %v503, 0
      %v529 = vsel %vm341, %v504, 0
      %v532 = vsel %vm341, %v505, 0
      %v535 = vsel %vm341, %v506, 0
      %v538 = vsel %vm341, %v507, 0
      %v541 = vsel %vm341, %v508, 0
      %v544 = vsel %vm341, %v509, 0
      %v547 = vsel %vm341, %v510, 0
      %v550 = vsel %vm341, %v511, 0
      %v553 = vsel %vm341, %v512, 0
      %v556 = vsel %vm341, %v513, 0
      %v559 = vsel %vm341, %v514, 0
      %v562 = vsel %vm341, %v515, 0
      %v565 = vsel %vm341, %v516, 0
      %vm567 = vcmask 1041408
      %v569 = vsel %vm567, %v518, 0
      %571 = vmatprep.subr.bf16.mxu0 0
      %572 = vmatpush1.bf16.msra.mxu0 0
      %573 = vmatprep.subr.bf16.mxu0 0
      %574 = vmatpush1.bf16.msra.mxu0 0
      %575 = vmatprep.subr.bf16.mxu0 0
      %576 = vmatpush1.bf16.msra.mxu0 0
      %577 = vmatprep.subr.bf16.mxu0 0
      %578 = vmatpush1.bf16.msra.mxu0 0
      %579 = vmatprep.subr.bf16.mxu0 0
      %580 = vmatpush1.bf16.msra.mxu0 0
      %581 = vmatprep.subr.bf16.mxu0 0
      %582 = vmatpush1.bf16.msra.mxu0 0
      %583 = vmatprep.subr.bf16.mxu0 0
      %584 = vmatpush1.bf16.msra.mxu0 0
      %585 = vmatprep.subr.bf16.mxu0 0
      %586 = vmatpush1.bf16.msra.mxu0 %v569
      %587 = vmatprep.subr.bf16.mxu0 0
      %588 = vmatpush2.bf16.msra.mxu0 0
      %589 = vmatprep.subr.bf16.mxu0 0
      %590 = vmatpush2.bf16.msra.mxu0 0
      %591 = vmatprep.subr.bf16.mxu0 0
      %592 = vmatpush2.bf16.msra.mxu0 0
      %593 = vmatprep.subr.bf16.mxu0 0
      %594 = vmatpush2.bf16.msra.mxu0 0
      %595 = vmatprep.subr.bf16.mxu0 0
      %596 = vmatpush2.bf16.msra.mxu0 0
      %597 = vmatprep.subr.bf16.mxu0 0
      %598 = vmatpush2.bf16.msra.mxu0 0
      %599 = vmatprep.subr.bf16.mxu0 0
      %600 = vmatpush2.bf16.msra.mxu0 0
      %601 = vmatprep.subr.bf16.mxu0 0
      %602 = vmatpush2.bf16.msra.mxu0 0
      %603 = vmatprep.mubr.bf16.mxu0 0
      %604 = vmatmul.mubr.bf16.gmra.mxu0 %v520
      %v605 = vpop.f32.mrf.mxu0
      %v606 = vadd.f32 0.0, %v605
      %v607 = vpop.f32.mrf.mxu0
      %v608 = vpop.f32.mrf.mxu0
      %v609 = vadd.f32 0.0, %v608
      %v610 = vpop.f32.mrf.mxu0
      %611 = vmatprep.mubr.bf16.mxu0 0
      %612 = vmatmul.mubr.bf16.gmra.mxu0 %v523
      %v613 = vpop.f32.mrf.mxu0
      %v614 = vadd.f32 0.0, %v613
      %v615 = vpop.f32.mrf.mxu0
      %v616 = vpop.f32.mrf.mxu0
      %v617 = vadd.f32 0.0, %v616
      %v618 = vpop.f32.mrf.mxu0
      %619 = vmatprep.mubr.bf16.mxu0 0
      %620 = vmatmul.mubr.bf16.gmra.mxu0 %v526
      %v621 = vpop.f32.mrf.mxu0
      %v622 = vadd.f32 0.0, %v621
      %v623 = vpop.f32.mrf.mxu0
      %v624 = vpop.f32.mrf.mxu0
      %v625 = vadd.f32 0.0, %v624
      %v626 = vpop.f32.mrf.mxu0
      %627 = vmatprep.mubr.bf16.mxu0 0
      %628 = vmatmul.mubr.bf16.gmra.mxu0 %v529
      %v629 = vpop.f32.mrf.mxu0
      %v630 = vadd.f32 0.0, %v629
      %v631 = vpop.f32.mrf.mxu0
      %v632 = vpop.f32.mrf.mxu0
      %v633 = vadd.f32 0.0, %v632
      %v634 = vpop.f32.mrf.mxu0
      %635 = vmatprep.mubr.bf16.mxu0 0
      %636 = vmatmul.mubr.bf16.gmra.mxu0 %v532
      %v637 = vpop.f32.mrf.mxu0
      %v638 = vadd.f32 0.0, %v637
      %v639 = vpop.f32.mrf.mxu0
      %v640 = vpop.f32.mrf.mxu0
      %v641 = vadd.f32 0.0, %v640
      %v642 = vpop.f32.mrf.mxu0
      %643 = vmatprep.mubr.bf16.mxu0 0
      %644 = vmatmul.mubr.bf16.gmra.mxu0 %v535
      %v645 = vpop.f32.mrf.mxu0
      %v646 = vadd.f32 0.0, %v645
      %v647 = vpop.f32.mrf.mxu0
      %v648 = vpop.f32.mrf.mxu0
      %v649 = vadd.f32 0.0, %v648
      %v650 = vpop.f32.mrf.mxu0
      %651 = vmatprep.mubr.bf16.mxu0 0
      %652 = vmatmul.mubr.bf16.gmra.mxu0 %v538
      %v653 = vpop.f32.mrf.mxu0
      %v654 = vadd.f32 0.0, %v653
      %v655 = vpop.f32.mrf.mxu0
      %v656 = vpop.f32.mrf.mxu0
      %v657 = vadd.f32 0.0, %v656
      %v658 = vpop.f32.mrf.mxu0
      %659 = vmatprep.mubr.bf16.mxu0 0
      %660 = vmatmul.mubr.bf16.gmra.mxu0 %v541
      %v661 = vpop.f32.mrf.mxu0
      %v662 = vadd.f32 0.0, %v661
      %v663 = vpop.f32.mrf.mxu0
      %v664 = vpop.f32.mrf.mxu0
      %v665 = vadd.f32 0.0, %v664
      %v666 = vpop.f32.mrf.mxu0
      %667 = vmatprep.mubr.bf16.mxu0 0
      %668 = vmatmul.mubr.bf16.gmra.mxu0 %v544
      %v669 = vpop.f32.mrf.mxu0
      %v670 = vadd.f32 0.0, %v669
      %v671 = vpop.f32.mrf.mxu0
      %v672 = vpop.f32.mrf.mxu0
      %v673 = vadd.f32 0.0, %v672
      %v674 = vpop.f32.mrf.mxu0
      %675 = vmatprep.mubr.bf16.mxu0 0
      %676 = vmatmul.mubr.bf16.gmra.mxu0 %v547
      %v677 = vpop.f32.mrf.mxu0
      %v678 = vadd.f32 0.0, %v677
      %v679 = vpop.f32.mrf.mxu0
      %v680 = vpop.f32.mrf.mxu0
      %v681 = vadd.f32 0.0, %v680
      %v682 = vpop.f32.mrf.mxu0
      %683 = vmatprep.mubr.bf16.mxu0 0
      %684 = vmatmul.mubr.bf16.gmra.mxu0 %v550
      %v685 = vpop.f32.mrf.mxu0
      %v686 = vadd.f32 0.0, %v685
      %v687 = vpop.f32.mrf.mxu0
      %v688 = vpop.f32.mrf.mxu0
      %v689 = vadd.f32 0.0, %v688
      %v690 = vpop.f32.mrf.mxu0
      %691 = vmatprep.mubr.bf16.mxu0 0
      %692 = vmatmul.mubr.bf16.gmra.mxu0 %v553
      %v693 = vpop.f32.mrf.mxu0
      %v694 = vadd.f32 0.0, %v693
      %v695 = vpop.f32.mrf.mxu0
      %v696 = vpop.f32.mrf.mxu0
      %v697 = vadd.f32 0.0, %v696
      %v698 = vpop.f32.mrf.mxu0
      %699 = vmatprep.mubr.bf16.mxu0 0
      %700 = vmatmul.mubr.bf16.gmra.mxu0 %v556
      %v701 = vpop.f32.mrf.mxu0
      %v702 = vadd.f32 0.0, %v701
      %v703 = vpop.f32.mrf.mxu0
      %v704 = vpop.f32.mrf.mxu0
      %v705 = vadd.f32 0.0, %v704
      %v706 = vpop.f32.mrf.mxu0
      %707 = vmatprep.mubr.bf16.mxu0 0
      %708 = vmatmul.mubr.bf16.gmra.mxu0 %v559
      %v709 = vpop.f32.mrf.mxu0
      %v710 = vadd.f32 0.0, %v709
      %v711 = vpop.f32.mrf.mxu0
      %v712 = vpop.f32.mrf.mxu0
      %v713 = vadd.f32 0.0, %v712
      %v714 = vpop.f32.mrf.mxu0
      %715 = vmatprep.mubr.bf16.mxu0 0
      %716 = vmatmul.mubr.bf16.gmra.mxu0 %v562
      %v717 = vpop.f32.mrf.mxu0
      %v718 = vadd.f32 0.0, %v717
      %v719 = vpop.f32.mrf.mxu0
      %v720 = vpop.f32.mrf.mxu0
      %v721 = vadd.f32 0.0, %v720
      %v722 = vpop.f32.mrf.mxu0
      %723 = vmatprep.mubr.bf16.mxu0 0
      %724 = vmatmul.mubr.bf16.gmra.mxu0 %v565
      %v725 = vpop.f32.mrf.mxu0
      %v726 = vadd.f32 0.0, %v725
      %v727 = vpop.f32.mrf.mxu0
      %v728 = vpop.f32.mrf.mxu0
      %v729 = vadd.f32 0.0, %v728
      %v730 = vpop.f32.mrf.mxu0
      %731 = vdwg.mxu0
      %v733 = vsel %vm341, %v452, 0
      %v736 = vsel %vm341, %v453, 0
      %v739 = vsel %vm341, %v454, 0
      %v742 = vsel %vm341, %v455, 0
      %v745 = vsel %vm341, %v456, 0
      %v748 = vsel %vm341, %v457, 0
      %v751 = vsel %vm341, %v458, 0
      %v754 = vsel %vm341, %v459, 0
      %v757 = vsel %vm341, %v460, 0
      %v760 = vsel %vm341, %v461, 0
      %v763 = vsel %vm341, %v462, 0
      %v766 = vsel %vm341, %v463, 0
      %v769 = vsel %vm341, %v464, 0
      %v772 = vsel %vm341, %v465, 0
      %v775 = vsel %vm341, %v466, 0
      %v778 = vsel %vm341, %v467, 0
      %v781 = vsel %vm567, %v468, 0
      %783 = vmatprep.subr.bf16.mxu0 0
      %784 = vmatpush1.bf16.msra.mxu0 0
      %785 = vmatprep.subr.bf16.mxu0 0
      %786 = vmatpush1.bf16.msra.mxu0 0
      %787 = vmatprep.subr.bf16.mxu0 0
      %788 = vmatpush1.bf16.msra.mxu0 0
      %789 = vmatprep.subr.bf16.mxu0 0
      %790 = vmatpush1.bf16.msra.mxu0 0
      %791 = vmatprep.subr.bf16.mxu0 0
      %792 = vmatpush1.bf16.msra.mxu0 0
      %793 = vmatprep.subr.bf16.mxu0 0
      %794 = vmatpush1.bf16.msra.mxu0 0
      %795 = vmatprep.subr.bf16.mxu0 0
      %796 = vmatpush1.bf16.msra.mxu0 0
      %797 = vmatprep.subr.bf16.mxu0 0
      %798 = vmatpush1.bf16.msra.mxu0 %v781
      %799 = vmatprep.subr.bf16.mxu0 0
      %800 = vmatpush2.bf16.msra.mxu0 0
      %801 = vmatprep.subr.bf16.mxu0 0
      %802 = vmatpush2.bf16.msra.mxu0 0
      %803 = vmatprep.subr.bf16.mxu0 0
      %804 = vmatpush2.bf16.msra.mxu0 0
      %805 = vmatprep.subr.bf16.mxu0 0
      %806 = vmatpush2.bf16.msra.mxu0 0
      %807 = vmatprep.subr.bf16.mxu0 0
      %808 = vmatpush2.bf16.msra.mxu0 0
      %809 = vmatprep.subr.bf16.mxu0 0
      %810 = vmatpush2.bf16.msra.mxu0 0
      %811 = vmatprep.subr.bf16.mxu0 0
      %812 = vmatpush2.bf16.msra.mxu0 0
      %813 = vmatprep.subr.bf16.mxu0 0
      %814 = vmatpush2.bf16.msra.mxu0 0
      %815 = vmatprep.mubr.bf16.mxu0 0
      %816 = vmatmul.mubr.bf16.gmra.mxu0 %v733
      %v817 = vpop.f32.mrf.mxu0
      %v818 = vadd.f32 %v606, %v817
      %v819 = vpop.f32.mrf.mxu0
      %v820 = vpop.f32.mrf.mxu0
      %v821 = vadd.f32 %v609, %v820
      %v822 = vpop.f32.mrf.mxu0
      %823 = vmatprep.mubr.bf16.mxu0 0
      %824 = vmatmul.mubr.bf16.gmra.mxu0 %v736
      %v825 = vpop.f32.mrf.mxu0
      %v826 = vadd.f32 %v614, %v825
      %v827 = vpop.f32.mrf.mxu0
      %v828 = vpop.f32.mrf.mxu0
      %v829 = vadd.f32 %v617, %v828
      %v830 = vpop.f32.mrf.mxu0
      %831 = vmatprep.mubr.bf16.mxu0 0
      %832 = vmatmul.mubr.bf16.gmra.mxu0 %v739
      %v833 = vpop.f32.mrf.mxu0
      %v834 = vadd.f32 %v622, %v833
      %v835 = vpop.f32.mrf.mxu0
      %v836 = vpop.f32.mrf.mxu0
      %v837 = vadd.f32 %v625, %v836
      %v838 = vpop.f32.mrf.mxu0
      %839 = vmatprep.mubr.bf16.mxu0 0
      %840 = vmatmul.mubr.bf16.gmra.mxu0 %v742
      %v841 = vpop.f32.mrf.mxu0
      %v842 = vadd.f32 %v630, %v841
      %v843 = vpop.f32.mrf.mxu0
      %v844 = vpop.f32.mrf.mxu0
      %v845 = vadd.f32 %v633, %v844
      %v846 = vpop.f32.mrf.mxu0
      %847 = vmatprep.mubr.bf16.mxu0 0
      %848 = vmatmul.mubr.bf16.gmra.mxu0 %v745
      %v849 = vpop.f32.mrf.mxu0
      %v850 = vadd.f32 %v638, %v849
      %v851 = vpop.f32.mrf.mxu0
      %v852 = vpop.f32.mrf.mxu0
      %v853 = vadd.f32 %v641, %v852
      %v854 = vpop.f32.mrf.mxu0
      %855 = vmatprep.mubr.bf16.mxu0 0
      %856 = vmatmul.mubr.bf16.gmra.mxu0 %v748
      %v857 = vpop.f32.mrf.mxu0
      %v858 = vadd.f32 %v646, %v857
      %v859 = vpop.f32.mrf.mxu0
      %v860 = vpop.f32.mrf.mxu0
      %v861 = vadd.f32 %v649, %v860
      %v862 = vpop.f32.mrf.mxu0
      %863 = vmatprep.mubr.bf16.mxu0 0
      %864 = vmatmul.mubr.bf16.gmra.mxu0 %v751
      %v865 = vpop.f32.mrf.mxu0
      %v866 = vadd.f32 %v654, %v865
      %v867 = vpop.f32.mrf.mxu0
      %v868 = vpop.f32.mrf.mxu0
      %v869 = vadd.f32 %v657, %v868
      %v870 = vpop.f32.mrf.mxu0
      %871 = vmatprep.mubr.bf16.mxu0 0
      %872 = vmatmul.mubr.bf16.gmra.mxu0 %v754
      %v873 = vpop.f32.mrf.mxu0
      %v874 = vadd.f32 %v662, %v873
      %v875 = vpop.f32.mrf.mxu0
      %v876 = vpop.f32.mrf.mxu0
      %v877 = vadd.f32 %v665, %v876
      %v878 = vpop.f32.mrf.mxu0
      %879 = vmatprep.mubr.bf16.mxu0 0
      %880 = vmatmul.mubr.bf16.gmra.mxu0 %v757
      %v881 = vpop.f32.mrf.mxu0
      %v882 = vadd.f32 %v670, %v881
      %v883 = vpop.f32.mrf.mxu0
      %v884 = vpop.f32.mrf.mxu0
      %v885 = vadd.f32 %v673, %v884
      %v886 = vpop.f32.mrf.mxu0
      %887 = vmatprep.mubr.bf16.mxu0 0
      %888 = vmatmul.mubr.bf16.gmra.mxu0 %v760
      %v889 = vpop.f32.mrf.mxu0
      %v890 = vadd.f32 %v678, %v889
      %v891 = vpop.f32.mrf.mxu0
      %v892 = vpop.f32.mrf.mxu0
      %v893 = vadd.f32 %v681, %v892
      %v894 = vpop.f32.mrf.mxu0
      %895 = vmatprep.mubr.bf16.mxu0 0
      %896 = vmatmul.mubr.bf16.gmra.mxu0 %v763
      %v897 = vpop.f32.mrf.mxu0
      %v898 = vadd.f32 %v686, %v897
      %v899 = vpop.f32.mrf.mxu0
      %v900 = vpop.f32.mrf.mxu0
      %v901 = vadd.f32 %v689, %v900
      %v902 = vpop.f32.mrf.mxu0
      %903 = vmatprep.mubr.bf16.mxu0 0
      %904 = vmatmul.mubr.bf16.gmra.mxu0 %v766
      %v905 = vpop.f32.mrf.mxu0
      %v906 = vadd.f32 %v694, %v905
      %v907 = vpop.f32.mrf.mxu0
      %v908 = vpop.f32.mrf.mxu0
      %v909 = vadd.f32 %v697, %v908
      %v910 = vpop.f32.mrf.mxu0
      %911 = vmatprep.mubr.bf16.mxu0 0
      %912 = vmatmul.mubr.bf16.gmra.mxu0 %v769
      %v913 = vpop.f32.mrf.mxu0
      %v914 = vadd.f32 %v702, %v913
      %v915 = vpop.f32.mrf.mxu0
      %v916 = vpop.f32.mrf.mxu0
      %v917 = vadd.f32 %v705, %v916
      %v918 = vpop.f32.mrf.mxu0
      %919 = vmatprep.mubr.bf16.mxu0 0
      %920 = vmatmul.mubr.bf16.gmra.mxu0 %v772
      %v921 = vpop.f32.mrf.mxu0
      %v922 = vadd.f32 %v710, %v921
      %v923 = vpop.f32.mrf.mxu0
      %v924 = vpop.f32.mrf.mxu0
      %v925 = vadd.f32 %v713, %v924
      %v926 = vpop.f32.mrf.mxu0
      %927 = vmatprep.mubr.bf16.mxu0 0
      %928 = vmatmul.mubr.bf16.gmra.mxu0 %v775
      %v929 = vpop.f32.mrf.mxu0
      %v930 = vadd.f32 %v718, %v929
      %v931 = vpop.f32.mrf.mxu0
      %v932 = vpop.f32.mrf.mxu0
      %v933 = vadd.f32 %v721, %v932
      %v934 = vpop.f32.mrf.mxu0
      %935 = vmatprep.mubr.bf16.mxu0 0
      %936 = vmatmul.mubr.bf16.gmra.mxu0 %v778
      %v937 = vpop.f32.mrf.mxu0
      %v938 = vadd.f32 %v726, %v937
      %v939 = vpop.f32.mrf.mxu0
      %v940 = vpop.f32.mrf.mxu0
      %v941 = vadd.f32 %v729, %v940
      %v942 = vpop.f32.mrf.mxu0
      %943 = vdwg.mxu0
      %v944 = vld [vmem:[#allocation2 + $0x2] sm:$0xff]
      %v945 = vld [vmem:[#allocation2 + $0xa] sm:$0xff]
      %v946 = vld [vmem:[#allocation2 + $0x1a] sm:$0xff]
      %v947 = vld [vmem:[#allocation2 + $0x22] sm:$0xff]
      %v948 = vld [vmem:[#allocation2 + $0x32] sm:$0xff]
      %v949 = vld [vmem:[#allocation2 + $0x3a] sm:$0xff]
      %v950 = vld [vmem:[#allocation2 + $0x4a] sm:$0xff]
      %v951 = vld [vmem:[#allocation2 + $0x52] sm:$0xff]
      %v952 = vld [vmem:[#allocation2 + $0x62] sm:$0xff]
      %v953 = vld [vmem:[#allocation2 + $0x6a] sm:$0xff]
      %v954 = vld [vmem:[#allocation2 + $0x7a] sm:$0xff]
      %v955 = vld [vmem:[#allocation2 + $0x82] sm:$0xff]
      %v956 = vld [vmem:[#allocation2 + $0x92] sm:$0xff]
      %v957 = vld [vmem:[#allocation2 + $0x9a] sm:$0xff]
      %v958 = vld [vmem:[#allocation2 + $0xaa] sm:$0xff]
      %v959 = vld [vmem:[#allocation2 + $0xb2] sm:$0xff]
      %v960 = vld [vmem:[#allocation2 + $0xc2] sm:$0xff]
      %v961 = vld [vmem:[#allocation2 + $0xca] sm:$0xff]
      %v962 = vld [vmem:[#allocation2 + $0xda] sm:$0xff]
      %v963 = vld [vmem:[#allocation2 + $0xe2] sm:$0xff]
      %v964 = vld [vmem:[#allocation2 + $0xf2] sm:$0xff]
      %v965 = vld [vmem:[#allocation2 + $0xfa] sm:$0xff]
      %v966 = vld [vmem:[#allocation2 + $0x10a] sm:$0xff]
      %v967 = vld [vmem:[#allocation2 + $0x112] sm:$0xff]
      %v968 = vld [vmem:[#allocation2 + $0x122] sm:$0xff]
      %v969 = vld [vmem:[#allocation2 + $0x12a] sm:$0xff]
      %v970 = vld [vmem:[#allocation2 + $0x13a] sm:$0xff]
      %v971 = vld [vmem:[#allocation2 + $0x142] sm:$0xff]
      %v972 = vld [vmem:[#allocation2 + $0x152] sm:$0xff]
      %v973 = vld [vmem:[#allocation2 + $0x15a] sm:$0xff]
      %v974 = vld [vmem:[#allocation2 + $0x16a] sm:$0xff]
      %v975 = vld [vmem:[#allocation2 + $0x172] sm:$0xff]
      %v976 = vpack.c.bf16 %v945, %v944
      %v977 = vpack.c.bf16 %v947, %v946
      %v978 = vpack.c.bf16 %v949, %v948
      %v979 = vpack.c.bf16 %v951, %v950
      %v980 = vpack.c.bf16 %v953, %v952
      %v981 = vpack.c.bf16 %v955, %v954
      %v982 = vpack.c.bf16 %v957, %v956
      %v983 = vpack.c.bf16 %v959, %v958
      %v984 = vpack.c.bf16 %v961, %v960
      %v985 = vpack.c.bf16 %v963, %v962
      %v986 = vpack.c.bf16 %v965, %v964
      %v987 = vpack.c.bf16 %v967, %v966
      %v988 = vpack.c.bf16 %v969, %v968
      %v989 = vpack.c.bf16 %v971, %v970
      %v990 = vpack.c.bf16 %v973, %v972
      %v991 = vpack.c.bf16 %v975, %v974
      %s992 = scalar_lea.vmem %s3, 4
      %v993 = vld [vmem:[%s992] sm:$0x3]
      %v995 = vsel %vm341, %v976, 0
      %v998 = vsel %vm341, %v977, 0
      %v1001 = vsel %vm341, %v978, 0
      %v1004 = vsel %vm341, %v979, 0
      %v1007 = vsel %vm341, %v980, 0
      %v1010 = vsel %vm341, %v981, 0
      %v1013 = vsel %vm341, %v982, 0
      %v1016 = vsel %vm341, %v983, 0
      %v1019 = vsel %vm341, %v984, 0
      %v1022 = vsel %vm341, %v985, 0
      %v1025 = vsel %vm341, %v986, 0
      %v1028 = vsel %vm341, %v987, 0
      %v1031 = vsel %vm341, %v988, 0
      %v1034 = vsel %vm341, %v989, 0
      %v1037 = vsel %vm341, %v990, 0
      %v1040 = vsel %vm341, %v991, 0
      %v1043 = vsel %vm567, %v993, 0
      %1045 = vmatprep.subr.bf16.mxu0 0
      %1046 = vmatpush1.bf16.msra.mxu0 0
      %1047 = vmatprep.subr.bf16.mxu0 0
      %1048 = vmatpush1.bf16.msra.mxu0 0
      %1049 = vmatprep.subr.bf16.mxu0 0
      %1050 = vmatpush1.bf16.msra.mxu0 0
      %1051 = vmatprep.subr.bf16.mxu0 0
      %1052 = vmatpush1.bf16.msra.mxu0 0
      %1053 = vmatprep.subr.bf16.mxu0 0
      %1054 = vmatpush1.bf16.msra.mxu0 0
      %1055 = vmatprep.subr.bf16.mxu0 0
      %1056 = vmatpush1.bf16.msra.mxu0 0
      %1057 = vmatprep.subr.bf16.mxu0 0
      %1058 = vmatpush1.bf16.msra.mxu0 0
      %1059 = vmatprep.subr.bf16.mxu0 0
      %1060 = vmatpush1.bf16.msra.mxu0 %v1043
      %1061 = vmatprep.subr.bf16.mxu0 0
      %1062 = vmatpush2.bf16.msra.mxu0 0
      %1063 = vmatprep.subr.bf16.mxu0 0
      %1064 = vmatpush2.bf16.msra.mxu0 0
      %1065 = vmatprep.subr.bf16.mxu0 0
      %1066 = vmatpush2.bf16.msra.mxu0 0
      %1067 = vmatprep.subr.bf16.mxu0 0
      %1068 = vmatpush2.bf16.msra.mxu0 0
      %1069 = vmatprep.subr.bf16.mxu0 0
      %1070 = vmatpush2.bf16.msra.mxu0 0
      %1071 = vmatprep.subr.bf16.mxu0 0
      %1072 = vmatpush2.bf16.msra.mxu0 0
      %1073 = vmatprep.subr.bf16.mxu0 0
      %1074 = vmatpush2.bf16.msra.mxu0 0
      %1075 = vmatprep.subr.bf16.mxu0 0
      %1076 = vmatpush2.bf16.msra.mxu0 0
      %1077 = vmatprep.mubr.bf16.mxu0 0
      %1078 = vmatmul.mubr.bf16.gmra.mxu0 %v995
      %v1079 = vpop.f32.mrf.mxu0
      %v1080 = vadd.f32 0.0, %v1079
      %v1081 = vpop.f32.mrf.mxu0
      %v1082 = vpop.f32.mrf.mxu0
      %v1083 = vadd.f32 0.0, %v1082
      %v1084 = vpop.f32.mrf.mxu0
      %1085 = vmatprep.mubr.bf16.mxu0 0
      %1086 = vmatmul.mubr.bf16.gmra.mxu0 %v998
      %v1087 = vpop.f32.mrf.mxu0
      %v1088 = vadd.f32 0.0, %v1087
      %v1089 = vpop.f32.mrf.mxu0
      %v1090 = vpop.f32.mrf.mxu0
      %v1091 = vadd.f32 0.0, %v1090
      %v1092 = vpop.f32.mrf.mxu0
      %1093 = vmatprep.mubr.bf16.mxu0 0
      %1094 = vmatmul.mubr.bf16.gmra.mxu0 %v1001
      %v1095 = vpop.f32.mrf.mxu0
      %v1096 = vadd.f32 0.0, %v1095
      %v1097 = vpop.f32.mrf.mxu0
      %v1098 = vpop.f32.mrf.mxu0
      %v1099 = vadd.f32 0.0, %v1098
      %v1100 = vpop.f32.mrf.mxu0
      %1101 = vmatprep.mubr.bf16.mxu0 0
      %1102 = vmatmul.mubr.bf16.gmra.mxu0 %v1004
      %v1103 = vpop.f32.mrf.mxu0
      %v1104 = vadd.f32 0.0, %v1103
      %v1105 = vpop.f32.mrf.mxu0
      %v1106 = vpop.f32.mrf.mxu0
      %v1107 = vadd.f32 0.0, %v1106
      %v1108 = vpop.f32.mrf.mxu0
      %1109 = vmatprep.mubr.bf16.mxu0 0
      %1110 = vmatmul.mubr.bf16.gmra.mxu0 %v1007
      %v1111 = vpop.f32.mrf.mxu0
      %v1112 = vadd.f32 0.0, %v1111
      %v1113 = vpop.f32.mrf.mxu0
      %v1114 = vpop.f32.mrf.mxu0
      %v1115 = vadd.f32 0.0, %v1114
      %v1116 = vpop.f32.mrf.mxu0
      %1117 = vmatprep.mubr.bf16.mxu0 0
      %1118 = vmatmul.mubr.bf16.gmra.mxu0 %v1010
      %v1119 = vpop.f32.mrf.mxu0
      %v1120 = vadd.f32 0.0, %v1119
      %v1121 = vpop.f32.mrf.mxu0
      %v1122 = vpop.f32.mrf.mxu0
      %v1123 = vadd.f32 0.0, %v1122
      %v1124 = vpop.f32.mrf.mxu0
      %1125 = vmatprep.mubr.bf16.mxu0 0
      %1126 = vmatmul.mubr.bf16.gmra.mxu0 %v1013
      %v1127 = vpop.f32.mrf.mxu0
      %v1128 = vadd.f32 0.0, %v1127
      %v1129 = vpop.f32.mrf.mxu0
      %v1130 = vpop.f32.mrf.mxu0
      %v1131 = vadd.f32 0.0, %v1130
      %v1132 = vpop.f32.mrf.mxu0
      %1133 = vmatprep.mubr.bf16.mxu0 0
      %1134 = vmatmul.mubr.bf16.gmra.mxu0 %v1016
      %v1135 = vpop.f32.mrf.mxu0
      %v1136 = vadd.f32 0.0, %v1135
      %v1137 = vpop.f32.mrf.mxu0
      %v1138 = vpop.f32.mrf.mxu0
      %v1139 = vadd.f32 0.0, %v1138
      %v1140 = vpop.f32.mrf.mxu0
      %1141 = vmatprep.mubr.bf16.mxu0 0
      %1142 = vmatmul.mubr.bf16.gmra.mxu0 %v1019
      %v1143 = vpop.f32.mrf.mxu0
      %v1144 = vadd.f32 0.0, %v1143
      %v1145 = vpop.f32.mrf.mxu0
      %v1146 = vpop.f32.mrf.mxu0
      %v1147 = vadd.f32 0.0, %v1146
      %v1148 = vpop.f32.mrf.mxu0
      %1149 = vmatprep.mubr.bf16.mxu0 0
      %1150 = vmatmul.mubr.bf16.gmra.mxu0 %v1022
      %v1151 = vpop.f32.mrf.mxu0
      %v1152 = vadd.f32 0.0, %v1151
      %v1153 = vpop.f32.mrf.mxu0
      %v1154 = vpop.f32.mrf.mxu0
      %v1155 = vadd.f32 0.0, %v1154
      %v1156 = vpop.f32.mrf.mxu0
      %1157 = vmatprep.mubr.bf16.mxu0 0
      %1158 = vmatmul.mubr.bf16.gmra.mxu0 %v1025
      %v1159 = vpop.f32.mrf.mxu0
      %v1160 = vadd.f32 0.0, %v1159
      %v1161 = vpop.f32.mrf.mxu0
      %v1162 = vpop.f32.mrf.mxu0
      %v1163 = vadd.f32 0.0, %v1162
      %v1164 = vpop.f32.mrf.mxu0
      %1165 = vmatprep.mubr.bf16.mxu0 0
      %1166 = vmatmul.mubr.bf16.gmra.mxu0 %v1028
      %v1167 = vpop.f32.mrf.mxu0
      %v1168 = vadd.f32 0.0, %v1167
      %v1169 = vpop.f32.mrf.mxu0
      %v1170 = vpop.f32.mrf.mxu0
      %v1171 = vadd.f32 0.0, %v1170
      %v1172 = vpop.f32.mrf.mxu0
      %1173 = vmatprep.mubr.bf16.mxu0 0
      %1174 = vmatmul.mubr.bf16.gmra.mxu0 %v1031
      %v1175 = vpop.f32.mrf.mxu0
      %v1176 = vadd.f32 0.0, %v1175
      %v1177 = vpop.f32.mrf.mxu0
      %v1178 = vpop.f32.mrf.mxu0
      %v1179 = vadd.f32 0.0, %v1178
      %v1180 = vpop.f32.mrf.mxu0
      %1181 = vmatprep.mubr.bf16.mxu0 0
      %1182 = vmatmul.mubr.bf16.gmra.mxu0 %v1034
      %v1183 = vpop.f32.mrf.mxu0
      %v1184 = vadd.f32 0.0, %v1183
      %v1185 = vpop.f32.mrf.mxu0
      %v1186 = vpop.f32.mrf.mxu0
      %v1187 = vadd.f32 0.0, %v1186
      %v1188 = vpop.f32.mrf.mxu0
      %1189 = vmatprep.mubr.bf16.mxu0 0
      %1190 = vmatmul.mubr.bf16.gmra.mxu0 %v1037
      %v1191 = vpop.f32.mrf.mxu0
      %v1192 = vadd.f32 0.0, %v1191
      %v1193 = vpop.f32.mrf.mxu0
      %v1194 = vpop.f32.mrf.mxu0
      %v1195 = vadd.f32 0.0, %v1194
      %v1196 = vpop.f32.mrf.mxu0
      %1197 = vmatprep.mubr.bf16.mxu0 0
      %1198 = vmatmul.mubr.bf16.gmra.mxu0 %v1040
      %v1199 = vpop.f32.mrf.mxu0
      %v1200 = vadd.f32 0.0, %v1199
      %v1201 = vpop.f32.mrf.mxu0
      %v1202 = vpop.f32.mrf.mxu0
      %v1203 = vadd.f32 0.0, %v1202
      %v1204 = vpop.f32.mrf.mxu0
      %1205 = vdwg.mxu0
      %v1206 = vadd.f32 %v818, %v1080
      %v1207 = vadd.f32 %v821, %v1083
      %v1208 = vadd.f32 %v826, %v1088
      %v1209 = vadd.f32 %v829, %v1091
      %v1210 = vadd.f32 %v834, %v1096
      %v1211 = vadd.f32 %v837, %v1099
      %v1212 = vadd.f32 %v842, %v1104
      %v1213 = vadd.f32 %v845, %v1107
      %v1214 = vadd.f32 %v850, %v1112
      %v1215 = vadd.f32 %v853, %v1115
      %v1216 = vadd.f32 %v858, %v1120
      %v1217 = vadd.f32 %v861, %v1123
      %v1218 = vadd.f32 %v866, %v1128
      %v1219 = vadd.f32 %v869, %v1131
      %v1220 = vadd.f32 %v874, %v1136
      %v1221 = vadd.f32 %v877, %v1139
      %v1222 = vadd.f32 %v882, %v1144
      %v1223 = vadd.f32 %v885, %v1147
      %v1224 = vadd.f32 %v890, %v1152
      %v1225 = vadd.f32 %v893, %v1155
      %v1226 = vadd.f32 %v898, %v1160
      %v1227 = vadd.f32 %v901, %v1163
      %v1228 = vadd.f32 %v906, %v1168
      %v1229 = vadd.f32 %v909, %v1171
      %v1230 = vadd.f32 %v914, %v1176
      %v1231 = vadd.f32 %v917, %v1179
      %v1232 = vadd.f32 %v922, %v1184
      %v1233 = vadd.f32 %v925, %v1187
      %v1234 = vadd.f32 %v930, %v1192
      %v1235 = vadd.f32 %v933, %v1195
      %v1236 = vadd.f32 %v938, %v1200
      %v1237 = vadd.f32 %v941, %v1203
      %v1238 = vld [vmem:[%s387] sm:$0xff]
      %v1239 = vld [vmem:[%s387 + $0x8] sm:$0xff]
      %v1240 = vld [vmem:[%s387 + $0x18] sm:$0xff]
      %v1241 = vld [vmem:[%s387 + $0x20] sm:$0xff]
      %v1242 = vld [vmem:[%s387 + $0x30] sm:$0xff]
      %v1243 = vld [vmem:[%s387 + $0x38] sm:$0xff]
      %v1244 = vld [vmem:[%s387 + $0x48] sm:$0xff]
      %v1245 = vld [vmem:[%s387 + $0x50] sm:$0xff]
      %v1246 = vld [vmem:[%s387 + $0x60] sm:$0xff]
      %v1247 = vld [vmem:[%s387 + $0x68] sm:$0xff]
      %v1248 = vld [vmem:[%s387 + $0x78] sm:$0xff]
      %v1249 = vld [vmem:[%s387 + $0x80] sm:$0xff]
      %v1250 = vld [vmem:[%s387 + $0x90] sm:$0xff]
      %v1251 = vld [vmem:[%s387 + $0x98] sm:$0xff]
      %v1252 = vld [vmem:[%s387 + $0xa8] sm:$0xff]
      %v1253 = vld [vmem:[%s387 + $0xb0] sm:$0xff]
      %v1254 = vld [vmem:[%s387 + $0xc0] sm:$0xff]
      %v1255 = vld [vmem:[%s387 + $0xc8] sm:$0xff]
      %v1256 = vld [vmem:[%s387 + $0xd8] sm:$0xff]
      %v1257 = vld [vmem:[%s387 + $0xe0] sm:$0xff]
      %v1258 = vld [vmem:[%s387 + $0xf0] sm:$0xff]
      %v1259 = vld [vmem:[%s387 + $0xf8] sm:$0xff]
      %v1260 = vld [vmem:[%s387 + $0x108] sm:$0xff]
      %v1261 = vld [vmem:[%s387 + $0x110] sm:$0xff]
      %v1262 = vld [vmem:[%s387 + $0x120] sm:$0xff]
      %v1263 = vld [vmem:[%s387 + $0x128] sm:$0xff]
      %v1264 = vld [vmem:[%s387 + $0x138] sm:$0xff]
      %v1265 = vld [vmem:[%s387 + $0x140] sm:$0xff]
      %v1266 = vld [vmem:[%s387 + $0x150] sm:$0xff]
      %v1267 = vld [vmem:[%s387 + $0x158] sm:$0xff]
      %v1268 = vld [vmem:[%s387 + $0x168] sm:$0xff]
      %v1269 = vld [vmem:[%s387 + $0x170] sm:$0xff]
      %v1270 = vpack.c.bf16 %v1239, %v1238
      %v1271 = vpack.c.bf16 %v1241, %v1240
      %v1272 = vpack.c.bf16 %v1243, %v1242
      %v1273 = vpack.c.bf16 %v1245, %v1244
      %v1274 = vpack.c.bf16 %v1247, %v1246
      %v1275 = vpack.c.bf16 %v1249, %v1248
      %v1276 = vpack.c.bf16 %v1251, %v1250
      %v1277 = vpack.c.bf16 %v1253, %v1252
      %v1278 = vpack.c.bf16 %v1255, %v1254
      %v1279 = vpack.c.bf16 %v1257, %v1256
      %v1280 = vpack.c.bf16 %v1259, %v1258
      %v1281 = vpack.c.bf16 %v1261, %v1260
      %v1282 = vpack.c.bf16 %v1263, %v1262
      %v1283 = vpack.c.bf16 %v1265, %v1264
      %v1284 = vpack.c.bf16 %v1267, %v1266
      %v1285 = vpack.c.bf16 %v1269, %v1268
      %s1286 = scalar_lea.vmem %s3, 6
      %v1287 = vld [vmem:[%s1286] sm:$0x3]
      %v1289 = vsel %vm341, %v1270, 0
      %v1292 = vsel %vm341, %v1271, 0
      %v1295 = vsel %vm341, %v1272, 0
      %v1298 = vsel %vm341, %v1273, 0
      %v1301 = vsel %vm341, %v1274, 0
      %v1304 = vsel %vm341, %v1275, 0
      %v1307 = vsel %vm341, %v1276, 0
      %v1310 = vsel %vm341, %v1277, 0
      %v1313 = vsel %vm341, %v1278, 0
      %v1316 = vsel %vm341, %v1279, 0
      %v1319 = vsel %vm341, %v1280, 0
      %v1322 = vsel %vm341, %v1281, 0
      %v1325 = vsel %vm341, %v1282, 0
      %v1328 = vsel %vm341, %v1283, 0
      %v1331 = vsel %vm341, %v1284, 0
      %v1334 = vsel %vm341, %v1285, 0
      %v1337 = vsel %vm567, %v1287, 0
      %1339 = vmatprep.subr.bf16.mxu0 0
      %1340 = vmatpush1.bf16.msra.mxu0 0
      %1341 = vmatprep.subr.bf16.mxu0 0
      %1342 = vmatpush1.bf16.msra.mxu0 0
      %1343 = vmatprep.subr.bf16.mxu0 0
      %1344 = vmatpush1.bf16.msra.mxu0 0
      %1345 = vmatprep.subr.bf16.mxu0 0
      %1346 = vmatpush1.bf16.msra.mxu0 0
      %1347 = vmatprep.subr.bf16.mxu0 0
      %1348 = vmatpush1.bf16.msra.mxu0 0
      %1349 = vmatprep.subr.bf16.mxu0 0
      %1350 = vmatpush1.bf16.msra.mxu0 0
      %1351 = vmatprep.subr.bf16.mxu0 0
      %1352 = vmatpush1.bf16.msra.mxu0 0
      %1353 = vmatprep.subr.bf16.mxu0 0
      %1354 = vmatpush1.bf16.msra.mxu0 %v1337
      %1355 = vmatprep.subr.bf16.mxu0 0
      %1356 = vmatpush2.bf16.msra.mxu0 0
      %1357 = vmatprep.subr.bf16.mxu0 0
      %1358 = vmatpush2.bf16.msra.mxu0 0
      %1359 = vmatprep.subr.bf16.mxu0 0
      %1360 = vmatpush2.bf16.msra.mxu0 0
      %1361 = vmatprep.subr.bf16.mxu0 0
      %1362 = vmatpush2.bf16.msra.mxu0 0
      %1363 = vmatprep.subr.bf16.mxu0 0
      %1364 = vmatpush2.bf16.msra.mxu0 0
      %1365 = vmatprep.subr.bf16.mxu0 0
      %1366 = vmatpush2.bf16.msra.mxu0 0
      %1367 = vmatprep.subr.bf16.mxu0 0
      %1368 = vmatpush2.bf16.msra.mxu0 0
      %1369 = vmatprep.subr.bf16.mxu0 0
      %1370 = vmatpush2.bf16.msra.mxu0 0
      %1371 = vmatprep.mubr.bf16.mxu0 0
      %1372 = vmatmul.mubr.bf16.gmra.mxu0 %v1289
      %v1373 = vpop.f32.mrf.mxu0
      %v1374 = vadd.f32 0.0, %v1373
      %v1375 = vpop.f32.mrf.mxu0
      %v1376 = vpop.f32.mrf.mxu0
      %v1377 = vadd.f32 0.0, %v1376
      %v1378 = vpop.f32.mrf.mxu0
      %1379 = vmatprep.mubr.bf16.mxu0 0
      %1380 = vmatmul.mubr.bf16.gmra.mxu0 %v1292
      %v1381 = vpop.f32.mrf.mxu0
      %v1382 = vadd.f32 0.0, %v1381
      %v1383 = vpop.f32.mrf.mxu0
      %v1384 = vpop.f32.mrf.mxu0
      %v1385 = vadd.f32 0.0, %v1384
      %v1386 = vpop.f32.mrf.mxu0
      %1387 = vmatprep.mubr.bf16.mxu0 0
      %1388 = vmatmul.mubr.bf16.gmra.mxu0 %v1295
      %v1389 = vpop.f32.mrf.mxu0
      %v1390 = vadd.f32 0.0, %v1389
      %v1391 = vpop.f32.mrf.mxu0
      %v1392 = vpop.f32.mrf.mxu0
      %v1393 = vadd.f32 0.0, %v1392
      %v1394 = vpop.f32.mrf.mxu0
      %1395 = vmatprep.mubr.bf16.mxu0 0
      %1396 = vmatmul.mubr.bf16.gmra.mxu0 %v1298
      %v1397 = vpop.f32.mrf.mxu0
      %v1398 = vadd.f32 0.0, %v1397
      %v1399 = vpop.f32.mrf.mxu0
      %v1400 = vpop.f32.mrf.mxu0
      %v1401 = vadd.f32 0.0, %v1400
      %v1402 = vpop.f32.mrf.mxu0
      %1403 = vmatprep.mubr.bf16.mxu0 0
      %1404 = vmatmul.mubr.bf16.gmra.mxu0 %v1301
      %v1405 = vpop.f32.mrf.mxu0
      %v1406 = vadd.f32 0.0, %v1405
      %v1407 = vpop.f32.mrf.mxu0
      %v1408 = vpop.f32.mrf.mxu0
      %v1409 = vadd.f32 0.0, %v1408
      %v1410 = vpop.f32.mrf.mxu0
      %1411 = vmatprep.mubr.bf16.mxu0 0
      %1412 = vmatmul.mubr.bf16.gmra.mxu0 %v1304
      %v1413 = vpop.f32.mrf.mxu0
      %v1414 = vadd.f32 0.0, %v1413
      %v1415 = vpop.f32.mrf.mxu0
      %v1416 = vpop.f32.mrf.mxu0
      %v1417 = vadd.f32 0.0, %v1416
      %v1418 = vpop.f32.mrf.mxu0
      %1419 = vmatprep.mubr.bf16.mxu0 0
      %1420 = vmatmul.mubr.bf16.gmra.mxu0 %v1307
      %v1421 = vpop.f32.mrf.mxu0
      %v1422 = vadd.f32 0.0, %v1421
      %v1423 = vpop.f32.mrf.mxu0
      %v1424 = vpop.f32.mrf.mxu0
      %v1425 = vadd.f32 0.0, %v1424
      %v1426 = vpop.f32.mrf.mxu0
      %1427 = vmatprep.mubr.bf16.mxu0 0
      %1428 = vmatmul.mubr.bf16.gmra.mxu0 %v1310
      %v1429 = vpop.f32.mrf.mxu0
      %v1430 = vadd.f32 0.0, %v1429
      %v1431 = vpop.f32.mrf.mxu0
      %v1432 = vpop.f32.mrf.mxu0
      %v1433 = vadd.f32 0.0, %v1432
      %v1434 = vpop.f32.mrf.mxu0
      %1435 = vmatprep.mubr.bf16.mxu0 0
      %1436 = vmatmul.mubr.bf16.gmra.mxu0 %v1313
      %v1437 = vpop.f32.mrf.mxu0
      %v1438 = vadd.f32 0.0, %v1437
      %v1439 = vpop.f32.mrf.mxu0
      %v1440 = vpop.f32.mrf.mxu0
      %v1441 = vadd.f32 0.0, %v1440
      %v1442 = vpop.f32.mrf.mxu0
      %1443 = vmatprep.mubr.bf16.mxu0 0
      %1444 = vmatmul.mubr.bf16.gmra.mxu0 %v1316
      %v1445 = vpop.f32.mrf.mxu0
      %v1446 = vadd.f32 0.0, %v1445
      %v1447 = vpop.f32.mrf.mxu0
      %v1448 = vpop.f32.mrf.mxu0
      %v1449 = vadd.f32 0.0, %v1448
      %v1450 = vpop.f32.mrf.mxu0
      %1451 = vmatprep.mubr.bf16.mxu0 0
      %1452 = vmatmul.mubr.bf16.gmra.mxu0 %v1319
      %v1453 = vpop.f32.mrf.mxu0
      %v1454 = vadd.f32 0.0, %v1453
      %v1455 = vpop.f32.mrf.mxu0
      %v1456 = vpop.f32.mrf.mxu0
      %v1457 = vadd.f32 0.0, %v1456
      %v1458 = vpop.f32.mrf.mxu0
      %1459 = vmatprep.mubr.bf16.mxu0 0
      %1460 = vmatmul.mubr.bf16.gmra.mxu0 %v1322
      %v1461 = vpop.f32.mrf.mxu0
      %v1462 = vadd.f32 0.0, %v1461
      %v1463 = vpop.f32.mrf.mxu0
      %v1464 = vpop.f32.mrf.mxu0
      %v1465 = vadd.f32 0.0, %v1464
      %v1466 = vpop.f32.mrf.mxu0
      %1467 = vmatprep.mubr.bf16.mxu0 0
      %1468 = vmatmul.mubr.bf16.gmra.mxu0 %v1325
      %v1469 = vpop.f32.mrf.mxu0
      %v1470 = vadd.f32 0.0, %v1469
      %v1471 = vpop.f32.mrf.mxu0
      %v1472 = vpop.f32.mrf.mxu0
      %v1473 = vadd.f32 0.0, %v1472
      %v1474 = vpop.f32.mrf.mxu0
      %1475 = vmatprep.mubr.bf16.mxu0 0
      %1476 = vmatmul.mubr.bf16.gmra.mxu0 %v1328
      %v1477 = vpop.f32.mrf.mxu0
      %v1478 = vadd.f32 0.0, %v1477
      %v1479 = vpop.f32.mrf.mxu0
      %v1480 = vpop.f32.mrf.mxu0
      %v1481 = vadd.f32 0.0, %v1480
      %v1482 = vpop.f32.mrf.mxu0
      %1483 = vmatprep.mubr.bf16.mxu0 0
      %1484 = vmatmul.mubr.bf16.gmra.mxu0 %v1331
      %v1485 = vpop.f32.mrf.mxu0
      %v1486 = vadd.f32 0.0, %v1485
      %v1487 = vpop.f32.mrf.mxu0
      %v1488 = vpop.f32.mrf.mxu0
      %v1489 = vadd.f32 0.0, %v1488
      %v1490 = vpop.f32.mrf.mxu0
      %1491 = vmatprep.mubr.bf16.mxu0 0
      %1492 = vmatmul.mubr.bf16.gmra.mxu0 %v1334
      %v1493 = vpop.f32.mrf.mxu0
      %v1494 = vadd.f32 0.0, %v1493
      %v1495 = vpop.f32.mrf.mxu0
      %v1496 = vpop.f32.mrf.mxu0
      %v1497 = vadd.f32 0.0, %v1496
      %v1498 = vpop.f32.mrf.mxu0
      %1499 = vdwg.mxu0
      %v1500 = vadd.f32 %v1206, %v1374
      %v1501 = vadd.f32 %v1207, %v1377
      %v1502 = vadd.f32 %v1208, %v1382
      %v1503 = vadd.f32 %v1209, %v1385
      %v1504 = vadd.f32 %v1210, %v1390
      %v1505 = vadd.f32 %v1211, %v1393
      %v1506 = vadd.f32 %v1212, %v1398
      %v1507 = vadd.f32 %v1213, %v1401
      %v1508 = vadd.f32 %v1214, %v1406
      %v1509 = vadd.f32 %v1215, %v1409
      %v1510 = vadd.f32 %v1216, %v1414
      %v1511 = vadd.f32 %v1217, %v1417
      %v1512 = vadd.f32 %v1218, %v1422
      %v1513 = vadd.f32 %v1219, %v1425
      %v1514 = vadd.f32 %v1220, %v1430
      %v1515 = vadd.f32 %v1221, %v1433
      %v1516 = vadd.f32 %v1222, %v1438
      %v1517 = vadd.f32 %v1223, %v1441
      %v1518 = vadd.f32 %v1224, %v1446
      %v1519 = vadd.f32 %v1225, %v1449
      %v1520 = vadd.f32 %v1226, %v1454
      %v1521 = vadd.f32 %v1227, %v1457
      %v1522 = vadd.f32 %v1228, %v1462
      %v1523 = vadd.f32 %v1229, %v1465
      %v1524 = vadd.f32 %v1230, %v1470
      %v1525 = vadd.f32 %v1231, %v1473
      %v1526 = vadd.f32 %v1232, %v1478
      %v1527 = vadd.f32 %v1233, %v1481
      %v1528 = vadd.f32 %v1234, %v1486
      %v1529 = vadd.f32 %v1235, %v1489
      %v1530 = vadd.f32 %v1236, %v1494
      %v1531 = vadd.f32 %v1237, %v1497
      %v1532 = vld [vmem:[%s387 + $0x1] sm:$0xff]
      %v1533 = vld [vmem:[%s387 + $0x9] sm:$0xff]
      %v1534 = vld [vmem:[%s387 + $0x19] sm:$0xff]
      %v1535 = vld [vmem:[%s387 + $0x21] sm:$0xff]
      %v1536 = vld [vmem:[%s387 + $0x31] sm:$0xff]
      %v1537 = vld [vmem:[%s387 + $0x39] sm:$0xff]
      %v1538 = vld [vmem:[%s387 + $0x49] sm:$0xff]
      %v1539 = vld [vmem:[%s387 + $0x51] sm:$0xff]
      %v1540 = vld [vmem:[%s387 + $0x61] sm:$0xff]
      %v1541 = vld [vmem:[%s387 + $0x69] sm:$0xff]
      %v1542 = vld [vmem:[%s387 + $0x79] sm:$0xff]
      %v1543 = vld [vmem:[%s387 + $0x81] sm:$0xff]
      %v1544 = vld [vmem:[%s387 + $0x91] sm:$0xff]
      %v1545 = vld [vmem:[%s387 + $0x99] sm:$0xff]
      %v1546 = vld [vmem:[%s387 + $0xa9] sm:$0xff]
      %v1547 = vld [vmem:[%s387 + $0xb1] sm:$0xff]
      %v1548 = vld [vmem:[%s387 + $0xc1] sm:$0xff]
      %v1549 = vld [vmem:[%s387 + $0xc9] sm:$0xff]
      %v1550 = vld [vmem:[%s387 + $0xd9] sm:$0xff]
      %v1551 = vld [vmem:[%s387 + $0xe1] sm:$0xff]
      %v1552 = vld [vmem:[%s387 + $0xf1] sm:$0xff]
      %v1553 = vld [vmem:[%s387 + $0xf9] sm:$0xff]
      %v1554 = vld [vmem:[%s387 + $0x109] sm:$0xff]
      %v1555 = vld [vmem:[%s387 + $0x111] sm:$0xff]
      %v1556 = vld [vmem:[%s387 + $0x121] sm:$0xff]
      %v1557 = vld [vmem:[%s387 + $0x129] sm:$0xff]
      %v1558 = vld [vmem:[%s387 + $0x139] sm:$0xff]
      %v1559 = vld [vmem:[%s387 + $0x141] sm:$0xff]
      %v1560 = vld [vmem:[%s387 + $0x151] sm:$0xff]
      %v1561 = vld [vmem:[%s387 + $0x159] sm:$0xff]
      %v1562 = vld [vmem:[%s387 + $0x169] sm:$0xff]
      %v1563 = vld [vmem:[%s387 + $0x171] sm:$0xff]
      %v1564 = vpack.c.bf16 %v1533, %v1532
      %v1565 = vpack.c.bf16 %v1535, %v1534
      %v1566 = vpack.c.bf16 %v1537, %v1536
      %v1567 = vpack.c.bf16 %v1539, %v1538
      %v1568 = vpack.c.bf16 %v1541, %v1540
      %v1569 = vpack.c.bf16 %v1543, %v1542
      %v1570 = vpack.c.bf16 %v1545, %v1544
      %v1571 = vpack.c.bf16 %v1547, %v1546
      %v1572 = vpack.c.bf16 %v1549, %v1548
      %v1573 = vpack.c.bf16 %v1551, %v1550
      %v1574 = vpack.c.bf16 %v1553, %v1552
      %v1575 = vpack.c.bf16 %v1555, %v1554
      %v1576 = vpack.c.bf16 %v1557, %v1556
      %v1577 = vpack.c.bf16 %v1559, %v1558
      %v1578 = vpack.c.bf16 %v1561, %v1560
      %v1579 = vpack.c.bf16 %v1563, %v1562
      %s1580 = scalar_lea.vmem %s3, 8
      %v1581 = vld [vmem:[%s1580] sm:$0x3]
      %v1583 = vsel %vm341, %v1564, 0
      %v1586 = vsel %vm341, %v1565, 0
      %v1589 = vsel %vm341, %v1566, 0
      %v1592 = vsel %vm341, %v1567, 0
      %v1595 = vsel %vm341, %v1568, 0
      %v1598 = vsel %vm341, %v1569, 0
      %v1601 = vsel %vm341, %v1570, 0
      %v1604 = vsel %vm341, %v1571, 0
      %v1607 = vsel %vm341, %v1572, 0
      %v1610 = vsel %vm341, %v1573, 0
      %v1613 = vsel %vm341, %v1574, 0
      %v1616 = vsel %vm341, %v1575, 0
      %v1619 = vsel %vm341, %v1576, 0
      %v1622 = vsel %vm341, %v1577, 0
      %v1625 = vsel %vm341, %v1578, 0
      %v1628 = vsel %vm341, %v1579, 0
      %v1631 = vsel %vm567, %v1581, 0
      %1633 = vmatprep.subr.bf16.mxu0 0
      %1634 = vmatpush1.bf16.msra.mxu0 0
      %1635 = vmatprep.subr.bf16.mxu0 0
      %1636 = vmatpush1.bf16.msra.mxu0 0
      %1637 = vmatprep.subr.bf16.mxu0 0
      %1638 = vmatpush1.bf16.msra.mxu0 0
      %1639 = vmatprep.subr.bf16.mxu0 0
      %1640 = vmatpush1.bf16.msra.mxu0 0
      %1641 = vmatprep.subr.bf16.mxu0 0
      %1642 = vmatpush1.bf16.msra.mxu0 0
      %1643 = vmatprep.subr.bf16.mxu0 0
      %1644 = vmatpush1.bf16.msra.mxu0 0
      %1645 = vmatprep.subr.bf16.mxu0 0
      %1646 = vmatpush1.bf16.msra.mxu0 0
      %1647 = vmatprep.subr.bf16.mxu0 0
      %1648 = vmatpush1.bf16.msra.mxu0 %v1631
      %1649 = vmatprep.subr.bf16.mxu0 0
      %1650 = vmatpush2.bf16.msra.mxu0 0
      %1651 = vmatprep.subr.bf16.mxu0 0
      %1652 = vmatpush2.bf16.msra.mxu0 0
      %1653 = vmatprep.subr.bf16.mxu0 0
      %1654 = vmatpush2.bf16.msra.mxu0 0
      %1655 = vmatprep.subr.bf16.mxu0 0
      %1656 = vmatpush2.bf16.msra.mxu0 0
      %1657 = vmatprep.subr.bf16.mxu0 0
      %1658 = vmatpush2.bf16.msra.mxu0 0
      %1659 = vmatprep.subr.bf16.mxu0 0
      %1660 = vmatpush2.bf16.msra.mxu0 0
      %1661 = vmatprep.subr.bf16.mxu0 0
      %1662 = vmatpush2.bf16.msra.mxu0 0
      %1663 = vmatprep.subr.bf16.mxu0 0
      %1664 = vmatpush2.bf16.msra.mxu0 0
      %1665 = vmatprep.mubr.bf16.mxu0 0
      %1666 = vmatmul.mubr.bf16.gmra.mxu0 %v1583
      %v1667 = vpop.f32.mrf.mxu0
      %v1668 = vadd.f32 0.0, %v1667
      %v1669 = vpop.f32.mrf.mxu0
      %v1670 = vpop.f32.mrf.mxu0
      %v1671 = vadd.f32 0.0, %v1670
      %v1672 = vpop.f32.mrf.mxu0
      %1673 = vmatprep.mubr.bf16.mxu0 0
      %1674 = vmatmul.mubr.bf16.gmra.mxu0 %v1586
      %v1675 = vpop.f32.mrf.mxu0
      %v1676 = vadd.f32 0.0, %v1675
      %v1677 = vpop.f32.mrf.mxu0
      %v1678 = vpop.f32.mrf.mxu0
      %v1679 = vadd.f32 0.0, %v1678
      %v1680 = vpop.f32.mrf.mxu0
      %1681 = vmatprep.mubr.bf16.mxu0 0
      %1682 = vmatmul.mubr.bf16.gmra.mxu0 %v1589
      %v1683 = vpop.f32.mrf.mxu0
      %v1684 = vadd.f32 0.0, %v1683
      %v1685 = vpop.f32.mrf.mxu0
      %v1686 = vpop.f32.mrf.mxu0
      %v1687 = vadd.f32 0.0, %v1686
      %v1688 = vpop.f32.mrf.mxu0
      %1689 = vmatprep.mubr.bf16.mxu0 0
      %1690 = vmatmul.mubr.bf16.gmra.mxu0 %v1592
      %v1691 = vpop.f32.mrf.mxu0
      %v1692 = vadd.f32 0.0, %v1691
      %v1693 = vpop.f32.mrf.mxu0
      %v1694 = vpop.f32.mrf.mxu0
      %v1695 = vadd.f32 0.0, %v1694
      %v1696 = vpop.f32.mrf.mxu0
      %1697 = vmatprep.mubr.bf16.mxu0 0
      %1698 = vmatmul.mubr.bf16.gmra.mxu0 %v1595
      %v1699 = vpop.f32.mrf.mxu0
      %v1700 = vadd.f32 0.0, %v1699
      %v1701 = vpop.f32.mrf.mxu0
      %v1702 = vpop.f32.mrf.mxu0
      %v1703 = vadd.f32 0.0, %v1702
      %v1704 = vpop.f32.mrf.mxu0
      %1705 = vmatprep.mubr.bf16.mxu0 0
      %1706 = vmatmul.mubr.bf16.gmra.mxu0 %v1598
      %v1707 = vpop.f32.mrf.mxu0
      %v1708 = vadd.f32 0.0, %v1707
      %v1709 = vpop.f32.mrf.mxu0
      %v1710 = vpop.f32.mrf.mxu0
      %v1711 = vadd.f32 0.0, %v1710
      %v1712 = vpop.f32.mrf.mxu0
      %1713 = vmatprep.mubr.bf16.mxu0 0
      %1714 = vmatmul.mubr.bf16.gmra.mxu0 %v1601
      %v1715 = vpop.f32.mrf.mxu0
      %v1716 = vadd.f32 0.0, %v1715
      %v1717 = vpop.f32.mrf.mxu0
      %v1718 = vpop.f32.mrf.mxu0
      %v1719 = vadd.f32 0.0, %v1718
      %v1720 = vpop.f32.mrf.mxu0
      %1721 = vmatprep.mubr.bf16.mxu0 0
      %1722 = vmatmul.mubr.bf16.gmra.mxu0 %v1604
      %v1723 = vpop.f32.mrf.mxu0
      %v1724 = vadd.f32 0.0, %v1723
      %v1725 = vpop.f32.mrf.mxu0
      %v1726 = vpop.f32.mrf.mxu0
      %v1727 = vadd.f32 0.0, %v1726
      %v1728 = vpop.f32.mrf.mxu0
      %1729 = vmatprep.mubr.bf16.mxu0 0
      %1730 = vmatmul.mubr.bf16.gmra.mxu0 %v1607
      %v1731 = vpop.f32.mrf.mxu0
      %v1732 = vadd.f32 0.0, %v1731
      %v1733 = vpop.f32.mrf.mxu0
      %v1734 = vpop.f32.mrf.mxu0
      %v1735 = vadd.f32 0.0, %v1734
      %v1736 = vpop.f32.mrf.mxu0
      %1737 = vmatprep.mubr.bf16.mxu0 0
      %1738 = vmatmul.mubr.bf16.gmra.mxu0 %v1610
      %v1739 = vpop.f32.mrf.mxu0
      %v1740 = vadd.f32 0.0, %v1739
      %v1741 = vpop.f32.mrf.mxu0
      %v1742 = vpop.f32.mrf.mxu0
      %v1743 = vadd.f32 0.0, %v1742
      %v1744 = vpop.f32.mrf.mxu0
      %1745 = vmatprep.mubr.bf16.mxu0 0
      %1746 = vmatmul.mubr.bf16.gmra.mxu0 %v1613
      %v1747 = vpop.f32.mrf.mxu0
      %v1748 = vadd.f32 0.0, %v1747
      %v1749 = vpop.f32.mrf.mxu0
      %v1750 = vpop.f32.mrf.mxu0
      %v1751 = vadd.f32 0.0, %v1750
      %v1752 = vpop.f32.mrf.mxu0
      %1753 = vmatprep.mubr.bf16.mxu0 0
      %1754 = vmatmul.mubr.bf16.gmra.mxu0 %v1616
      %v1755 = vpop.f32.mrf.mxu0
      %v1756 = vadd.f32 0.0, %v1755
      %v1757 = vpop.f32.mrf.mxu0
      %v1758 = vpop.f32.mrf.mxu0
      %v1759 = vadd.f32 0.0, %v1758
      %v1760 = vpop.f32.mrf.mxu0
      %1761 = vmatprep.mubr.bf16.mxu0 0
      %1762 = vmatmul.mubr.bf16.gmra.mxu0 %v1619
      %v1763 = vpop.f32.mrf.mxu0
      %v1764 = vadd.f32 0.0, %v1763
      %v1765 = vpop.f32.mrf.mxu0
      %v1766 = vpop.f32.mrf.mxu0
      %v1767 = vadd.f32 0.0, %v1766
      %v1768 = vpop.f32.mrf.mxu0
      %1769 = vmatprep.mubr.bf16.mxu0 0
      %1770 = vmatmul.mubr.bf16.gmra.mxu0 %v1622
      %v1771 = vpop.f32.mrf.mxu0
      %v1772 = vadd.f32 0.0, %v1771
      %v1773 = vpop.f32.mrf.mxu0
      %v1774 = vpop.f32.mrf.mxu0
      %v1775 = vadd.f32 0.0, %v1774
      %v1776 = vpop.f32.mrf.mxu0
      %1777 = vmatprep.mubr.bf16.mxu0 0
      %1778 = vmatmul.mubr.bf16.gmra.mxu0 %v1625
      %v1779 = vpop.f32.mrf.mxu0
      %v1780 = vadd.f32 0.0, %v1779
      %v1781 = vpop.f32.mrf.mxu0
      %v1782 = vpop.f32.mrf.mxu0
      %v1783 = vadd.f32 0.0, %v1782
      %v1784 = vpop.f32.mrf.mxu0
      %1785 = vmatprep.mubr.bf16.mxu0 0
      %1786 = vmatmul.mubr.bf16.gmra.mxu0 %v1628
      %v1787 = vpop.f32.mrf.mxu0
      %v1788 = vadd.f32 0.0, %v1787
      %v1789 = vpop.f32.mrf.mxu0
      %v1790 = vpop.f32.mrf.mxu0
      %v1791 = vadd.f32 0.0, %v1790
      %v1792 = vpop.f32.mrf.mxu0
      %1793 = vdwg.mxu0
      %v1794 = vadd.f32 %v1500, %v1668
      %v1795 = vadd.f32 %v1501, %v1671
      %v1796 = vadd.f32 %v1502, %v1676
      %v1797 = vadd.f32 %v1503, %v1679
      %v1798 = vadd.f32 %v1504, %v1684
      %v1799 = vadd.f32 %v1505, %v1687
      %v1800 = vadd.f32 %v1506, %v1692
      %v1801 = vadd.f32 %v1507, %v1695
      %v1802 = vadd.f32 %v1508, %v1700
      %v1803 = vadd.f32 %v1509, %v1703
      %v1804 = vadd.f32 %v1510, %v1708
      %v1805 = vadd.f32 %v1511, %v1711
      %v1806 = vadd.f32 %v1512, %v1716
      %v1807 = vadd.f32 %v1513, %v1719
      %v1808 = vadd.f32 %v1514, %v1724
      %v1809 = vadd.f32 %v1515, %v1727
      %v1810 = vadd.f32 %v1516, %v1732
      %v1811 = vadd.f32 %v1517, %v1735
      %v1812 = vadd.f32 %v1518, %v1740
      %v1813 = vadd.f32 %v1519, %v1743
      %v1814 = vadd.f32 %v1520, %v1748
      %v1815 = vadd.f32 %v1521, %v1751
      %v1816 = vadd.f32 %v1522, %v1756
      %v1817 = vadd.f32 %v1523, %v1759
      %v1818 = vadd.f32 %v1524, %v1764
      %v1819 = vadd.f32 %v1525, %v1767
      %v1820 = vadd.f32 %v1526, %v1772
      %v1821 = vadd.f32 %v1527, %v1775
      %v1822 = vadd.f32 %v1528, %v1780
      %v1823 = vadd.f32 %v1529, %v1783
      %v1824 = vadd.f32 %v1530, %v1788
      %v1825 = vadd.f32 %v1531, %v1791
      %v1826 = vld [vmem:[%s387 + $0x2] sm:$0xff]
      %v1827 = vld [vmem:[%s387 + $0xa] sm:$0xff]
      %v1828 = vld [vmem:[%s387 + $0x1a] sm:$0xff]
      %v1829 = vld [vmem:[%s387 + $0x22] sm:$0xff]
      %v1830 = vld [vmem:[%s387 + $0x32] sm:$0xff]
      %v1831 = vld [vmem:[%s387 + $0x3a] sm:$0xff]
      %v1832 = vld [vmem:[%s387 + $0x4a] sm:$0xff]
      %v1833 = vld [vmem:[%s387 + $0x52] sm:$0xff]
      %v1834 = vld [vmem:[%s387 + $0x62] sm:$0xff]
      %v1835 = vld [vmem:[%s387 + $0x6a] sm:$0xff]
      %v1836 = vld [vmem:[%s387 + $0x7a] sm:$0xff]
      %v1837 = vld [vmem:[%s387 + $0x82] sm:$0xff]
      %v1838 = vld [vmem:[%s387 + $0x92] sm:$0xff]
      %v1839 = vld [vmem:[%s387 + $0x9a] sm:$0xff]
      %v1840 = vld [vmem:[%s387 + $0xaa] sm:$0xff]
      %v1841 = vld [vmem:[%s387 + $0xb2] sm:$0xff]
      %v1842 = vld [vmem:[%s387 + $0xc2] sm:$0xff]
      %v1843 = vld [vmem:[%s387 + $0xca] sm:$0xff]
      %v1844 = vld [vmem:[%s387 + $0xda] sm:$0xff]
      %v1845 = vld [vmem:[%s387 + $0xe2] sm:$0xff]
      %v1846 = vld [vmem:[%s387 + $0xf2] sm:$0xff]
      %v1847 = vld [vmem:[%s387 + $0xfa] sm:$0xff]
      %v1848 = vld [vmem:[%s387 + $0x10a] sm:$0xff]
      %v1849 = vld [vmem:[%s387 + $0x112] sm:$0xff]
      %v1850 = vld [vmem:[%s387 + $0x122] sm:$0xff]
      %v1851 = vld [vmem:[%s387 + $0x12a] sm:$0xff]
      %v1852 = vld [vmem:[%s387 + $0x13a] sm:$0xff]
      %v1853 = vld [vmem:[%s387 + $0x142] sm:$0xff]
      %v1854 = vld [vmem:[%s387 + $0x152] sm:$0xff]
      %v1855 = vld [vmem:[%s387 + $0x15a] sm:$0xff]
      %v1856 = vld [vmem:[%s387 + $0x16a] sm:$0xff]
      %v1857 = vld [vmem:[%s387 + $0x172] sm:$0xff]
      %v1858 = vpack.c.bf16 %v1827, %v1826
      %v1859 = vpack.c.bf16 %v1829, %v1828
      %v1860 = vpack.c.bf16 %v1831, %v1830
      %v1861 = vpack.c.bf16 %v1833, %v1832
      %v1862 = vpack.c.bf16 %v1835, %v1834
      %v1863 = vpack.c.bf16 %v1837, %v1836
      %v1864 = vpack.c.bf16 %v1839, %v1838
      %v1865 = vpack.c.bf16 %v1841, %v1840
      %v1866 = vpack.c.bf16 %v1843, %v1842
      %v1867 = vpack.c.bf16 %v1845, %v1844
      %v1868 = vpack.c.bf16 %v1847, %v1846
      %v1869 = vpack.c.bf16 %v1849, %v1848
      %v1870 = vpack.c.bf16 %v1851, %v1850
      %v1871 = vpack.c.bf16 %v1853, %v1852
      %v1872 = vpack.c.bf16 %v1855, %v1854
      %v1873 = vpack.c.bf16 %v1857, %v1856
      %s1874 = scalar_lea.vmem %s3, 10
      %v1875 = vld [vmem:[%s1874] sm:$0x3]
      %v1877 = vsel %vm341, %v1858, 0
      %v1880 = vsel %vm341, %v1859, 0
      %v1883 = vsel %vm341, %v1860, 0
      %v1886 = vsel %vm341, %v1861, 0
      %v1889 = vsel %vm341, %v1862, 0
      %v1892 = vsel %vm341, %v1863, 0
      %v1895 = vsel %vm341, %v1864, 0
      %v1898 = vsel %vm341, %v1865, 0
      %v1901 = vsel %vm341, %v1866, 0
      %v1904 = vsel %vm341, %v1867, 0
      %v1907 = vsel %vm341, %v1868, 0
      %v1910 = vsel %vm341, %v1869, 0
      %v1913 = vsel %vm341, %v1870, 0
      %v1916 = vsel %vm341, %v1871, 0
      %v1919 = vsel %vm341, %v1872, 0
      %v1922 = vsel %vm341, %v1873, 0
      %v1925 = vsel %vm567, %v1875, 0
      %1927 = vmatprep.subr.bf16.mxu0 0
      %1928 = vmatpush1.bf16.msra.mxu0 0
      %1929 = vmatprep.subr.bf16.mxu0 0
      %1930 = vmatpush1.bf16.msra.mxu0 0
      %1931 = vmatprep.subr.bf16.mxu0 0
      %1932 = vmatpush1.bf16.msra.mxu0 0
      %1933 = vmatprep.subr.bf16.mxu0 0
      %1934 = vmatpush1.bf16.msra.mxu0 0
      %1935 = vmatprep.subr.bf16.mxu0 0
      %1936 = vmatpush1.bf16.msra.mxu0 0
      %1937 = vmatprep.subr.bf16.mxu0 0
      %1938 = vmatpush1.bf16.msra.mxu0 0
      %1939 = vmatprep.subr.bf16.mxu0 0
      %1940 = vmatpush1.bf16.msra.mxu0 0
      %1941 = vmatprep.subr.bf16.mxu0 0
      %1942 = vmatpush1.bf16.msra.mxu0 %v1925
      %1943 = vmatprep.subr.bf16.mxu0 0
      %1944 = vmatpush2.bf16.msra.mxu0 0
      %1945 = vmatprep.subr.bf16.mxu0 0
      %1946 = vmatpush2.bf16.msra.mxu0 0
      %1947 = vmatprep.subr.bf16.mxu0 0
      %1948 = vmatpush2.bf16.msra.mxu0 0
      %1949 = vmatprep.subr.bf16.mxu0 0
      %1950 = vmatpush2.bf16.msra.mxu0 0
      %1951 = vmatprep.subr.bf16.mxu0 0
      %1952 = vmatpush2.bf16.msra.mxu0 0
      %1953 = vmatprep.subr.bf16.mxu0 0
      %1954 = vmatpush2.bf16.msra.mxu0 0
      %1955 = vmatprep.subr.bf16.mxu0 0
      %1956 = vmatpush2.bf16.msra.mxu0 0
      %1957 = vmatprep.subr.bf16.mxu0 0
      %1958 = vmatpush2.bf16.msra.mxu0 0
      %1959 = vmatprep.mubr.bf16.mxu0 0
      %1960 = vmatmul.mubr.bf16.gmra.mxu0 %v1877
      %v1961 = vpop.f32.mrf.mxu0
      %v1962 = vadd.f32 0.0, %v1961
      %v1963 = vpop.f32.mrf.mxu0
      %v1964 = vpop.f32.mrf.mxu0
      %v1965 = vadd.f32 0.0, %v1964
      %v1966 = vpop.f32.mrf.mxu0
      %1967 = vmatprep.mubr.bf16.mxu0 0
      %1968 = vmatmul.mubr.bf16.gmra.mxu0 %v1880
      %v1969 = vpop.f32.mrf.mxu0
      %v1970 = vadd.f32 0.0, %v1969
      %v1971 = vpop.f32.mrf.mxu0
      %v1972 = vpop.f32.mrf.mxu0
      %v1973 = vadd.f32 0.0, %v1972
      %v1974 = vpop.f32.mrf.mxu0
      %1975 = vmatprep.mubr.bf16.mxu0 0
      %1976 = vmatmul.mubr.bf16.gmra.mxu0 %v1883
      %v1977 = vpop.f32.mrf.mxu0
      %v1978 = vadd.f32 0.0, %v1977
      %v1979 = vpop.f32.mrf.mxu0
      %v1980 = vpop.f32.mrf.mxu0
      %v1981 = vadd.f32 0.0, %v1980
      %v1982 = vpop.f32.mrf.mxu0
      %1983 = vmatprep.mubr.bf16.mxu0 0
      %1984 = vmatmul.mubr.bf16.gmra.mxu0 %v1886
      %v1985 = vpop.f32.mrf.mxu0
      %v1986 = vadd.f32 0.0, %v1985
      %v1987 = vpop.f32.mrf.mxu0
      %v1988 = vpop.f32.mrf.mxu0
      %v1989 = vadd.f32 0.0, %v1988
      %v1990 = vpop.f32.mrf.mxu0
      %1991 = vmatprep.mubr.bf16.mxu0 0
      %1992 = vmatmul.mubr.bf16.gmra.mxu0 %v1889
      %v1993 = vpop.f32.mrf.mxu0
      %v1994 = vadd.f32 0.0, %v1993
      %v1995 = vpop.f32.mrf.mxu0
      %v1996 = vpop.f32.mrf.mxu0
      %v1997 = vadd.f32 0.0, %v1996
      %v1998 = vpop.f32.mrf.mxu0
      %1999 = vmatprep.mubr.bf16.mxu0 0
      %2000 = vmatmul.mubr.bf16.gmra.mxu0 %v1892
      %v2001 = vpop.f32.mrf.mxu0
      %v2002 = vadd.f32 0.0, %v2001
      %v2003 = vpop.f32.mrf.mxu0
      %v2004 = vpop.f32.mrf.mxu0
      %v2005 = vadd.f32 0.0, %v2004
      %v2006 = vpop.f32.mrf.mxu0
      %2007 = vmatprep.mubr.bf16.mxu0 0
      %2008 = vmatmul.mubr.bf16.gmra.mxu0 %v1895
      %v2009 = vpop.f32.mrf.mxu0
      %v2010 = vadd.f32 0.0, %v2009
      %v2011 = vpop.f32.mrf.mxu0
      %v2012 = vpop.f32.mrf.mxu0
      %v2013 = vadd.f32 0.0, %v2012
      %v2014 = vpop.f32.mrf.mxu0
      %2015 = vmatprep.mubr.bf16.mxu0 0
      %2016 = vmatmul.mubr.bf16.gmra.mxu0 %v1898
      %v2017 = vpop.f32.mrf.mxu0
      %v2018 = vadd.f32 0.0, %v2017
      %v2019 = vpop.f32.mrf.mxu0
      %v2020 = vpop.f32.mrf.mxu0
      %v2021 = vadd.f32 0.0, %v2020
      %v2022 = vpop.f32.mrf.mxu0
      %2023 = vmatprep.mubr.bf16.mxu0 0
      %2024 = vmatmul.mubr.bf16.gmra.mxu0 %v1901
      %v2025 = vpop.f32.mrf.mxu0
      %v2026 = vadd.f32 0.0, %v2025
      %v2027 = vpop.f32.mrf.mxu0
      %v2028 = vpop.f32.mrf.mxu0
      %v2029 = vadd.f32 0.0, %v2028
      %v2030 = vpop.f32.mrf.mxu0
      %2031 = vmatprep.mubr.bf16.mxu0 0
      %2032 = vmatmul.mubr.bf16.gmra.mxu0 %v1904
      %v2033 = vpop.f32.mrf.mxu0
      %v2034 = vadd.f32 0.0, %v2033
      %v2035 = vpop.f32.mrf.mxu0
      %v2036 = vpop.f32.mrf.mxu0
      %v2037 = vadd.f32 0.0, %v2036
      %v2038 = vpop.f32.mrf.mxu0
      %2039 = vmatprep.mubr.bf16.mxu0 0
      %2040 = vmatmul.mubr.bf16.gmra.mxu0 %v1907
      %v2041 = vpop.f32.mrf.mxu0
      %v2042 = vadd.f32 0.0, %v2041
      %v2043 = vpop.f32.mrf.mxu0
      %v2044 = vpop.f32.mrf.mxu0
      %v2045 = vadd.f32 0.0, %v2044
      %v2046 = vpop.f32.mrf.mxu0
      %2047 = vmatprep.mubr.bf16.mxu0 0
      %2048 = vmatmul.mubr.bf16.gmra.mxu0 %v1910
      %v2049 = vpop.f32.mrf.mxu0
      %v2050 = vadd.f32 0.0, %v2049
      %v2051 = vpop.f32.mrf.mxu0
      %v2052 = vpop.f32.mrf.mxu0
      %v2053 = vadd.f32 0.0, %v2052
      %v2054 = vpop.f32.mrf.mxu0
      %2055 = vmatprep.mubr.bf16.mxu0 0
      %2056 = vmatmul.mubr.bf16.gmra.mxu0 %v1913
      %v2057 = vpop.f32.mrf.mxu0
      %v2058 = vadd.f32 0.0, %v2057
      %v2059 = vpop.f32.mrf.mxu0
      %v2060 = vpop.f32.mrf.mxu0
      %v2061 = vadd.f32 0.0, %v2060
      %v2062 = vpop.f32.mrf.mxu0
      %2063 = vmatprep.mubr.bf16.mxu0 0
      %2064 = vmatmul.mubr.bf16.gmra.mxu0 %v1916
      %v2065 = vpop.f32.mrf.mxu0
      %v2066 = vadd.f32 0.0, %v2065
      %v2067 = vpop.f32.mrf.mxu0
      %v2068 = vpop.f32.mrf.mxu0
      %v2069 = vadd.f32 0.0, %v2068
      %v2070 = vpop.f32.mrf.mxu0
      %2071 = vmatprep.mubr.bf16.mxu0 0
      %2072 = vmatmul.mubr.bf16.gmra.mxu0 %v1919
      %v2073 = vpop.f32.mrf.mxu0
      %v2074 = vadd.f32 0.0, %v2073
      %v2075 = vpop.f32.mrf.mxu0
      %v2076 = vpop.f32.mrf.mxu0
      %v2077 = vadd.f32 0.0, %v2076
      %v2078 = vpop.f32.mrf.mxu0
      %2079 = vmatprep.mubr.bf16.mxu0 0
      %2080 = vmatmul.mubr.bf16.gmra.mxu0 %v1922
      %v2081 = vpop.f32.mrf.mxu0
      %v2082 = vadd.f32 0.0, %v2081
      %v2083 = vpop.f32.mrf.mxu0
      %v2084 = vpop.f32.mrf.mxu0
      %v2085 = vadd.f32 0.0, %v2084
      %v2086 = vpop.f32.mrf.mxu0
      %2087 = vdwg.mxu0
      %v2088 = vadd.f32 %v1794, %v1962
      %v2089 = vadd.f32 %v1795, %v1965
      %v2090 = vadd.f32 %v1796, %v1970
      %v2091 = vadd.f32 %v1797, %v1973
      %v2092 = vadd.f32 %v1798, %v1978
      %v2093 = vadd.f32 %v1799, %v1981
      %v2094 = vadd.f32 %v1800, %v1986
      %v2095 = vadd.f32 %v1801, %v1989
      %v2096 = vadd.f32 %v1802, %v1994
      %v2097 = vadd.f32 %v1803, %v1997
      %v2098 = vadd.f32 %v1804, %v2002
      %v2099 = vadd.f32 %v1805, %v2005
      %v2100 = vadd.f32 %v1806, %v2010
      %v2101 = vadd.f32 %v1807, %v2013
      %v2102 = vadd.f32 %v1808, %v2018
      %v2103 = vadd.f32 %v1809, %v2021
      %v2104 = vadd.f32 %v1810, %v2026
      %v2105 = vadd.f32 %v1811, %v2029
      %v2106 = vadd.f32 %v1812, %v2034
      %v2107 = vadd.f32 %v1813, %v2037
      %v2108 = vadd.f32 %v1814, %v2042
      %v2109 = vadd.f32 %v1815, %v2045
      %v2110 = vadd.f32 %v1816, %v2050
      %v2111 = vadd.f32 %v1817, %v2053
      %v2112 = vadd.f32 %v1818, %v2058
      %v2113 = vadd.f32 %v1819, %v2061
      %v2114 = vadd.f32 %v1820, %v2066
      %v2115 = vadd.f32 %v1821, %v2069
      %v2116 = vadd.f32 %v1822, %v2074
      %v2117 = vadd.f32 %v1823, %v2077
      %v2118 = vadd.f32 %v1824, %v2082
      %v2119 = vadd.f32 %v1825, %v2085
      %s2120 = scalar_lea.vmem [#allocation2], 48
      %v2121 = vld [vmem:[%s2120] sm:$0xff]
      %v2122 = vld [vmem:[%s2120 + $0x8] sm:$0xff]
      %v2123 = vld [vmem:[%s2120 + $0x18] sm:$0xff]
      %v2124 = vld [vmem:[%s2120 + $0x20] sm:$0xff]
      %v2125 = vld [vmem:[%s2120 + $0x30] sm:$0xff]
      %v2126 = vld [vmem:[%s2120 + $0x38] sm:$0xff]
      %v2127 = vld [vmem:[%s2120 + $0x48] sm:$0xff]
      %v2128 = vld [vmem:[%s2120 + $0x50] sm:$0xff]
      %v2129 = vld [vmem:[%s2120 + $0x60] sm:$0xff]
      %v2130 = vld [vmem:[%s2120 + $0x68] sm:$0xff]
      %v2131 = vld [vmem:[%s2120 + $0x78] sm:$0xff]
      %v2132 = vld [vmem:[%s2120 + $0x80] sm:$0xff]
      %v2133 = vld [vmem:[%s2120 + $0x90] sm:$0xff]
      %v2134 = vld [vmem:[%s2120 + $0x98] sm:$0xff]
      %v2135 = vld [vmem:[%s2120 + $0xa8] sm:$0xff]
      %v2136 = vld [vmem:[%s2120 + $0xb0] sm:$0xff]
      %v2137 = vld [vmem:[%s2120 + $0xc0] sm:$0xff]
      %v2138 = vld [vmem:[%s2120 + $0xc8] sm:$0xff]
      %v2139 = vld [vmem:[%s2120 + $0xd8] sm:$0xff]
      %v2140 = vld [vmem:[%s2120 + $0xe0] sm:$0xff]
      %v2141 = vld [vmem:[%s2120 + $0xf0] sm:$0xff]
      %v2142 = vld [vmem:[%s2120 + $0xf8] sm:$0xff]
      %v2143 = vld [vmem:[%s2120 + $0x108] sm:$0xff]
      %v2144 = vld [vmem:[%s2120 + $0x110] sm:$0xff]
      %v2145 = vld [vmem:[%s2120 + $0x120] sm:$0xff]
      %v2146 = vld [vmem:[%s2120 + $0x128] sm:$0xff]
      %v2147 = vld [vmem:[%s2120 + $0x138] sm:$0xff]
      %v2148 = vld [vmem:[%s2120 + $0x140] sm:$0xff]
      %v2149 = vld [vmem:[%s2120 + $0x150] sm:$0xff]
      %v2150 = vld [vmem:[%s2120 + $0x158] sm:$0xff]
      %v2151 = vld [vmem:[%s2120 + $0x168] sm:$0xff]
      %v2152 = vld [vmem:[%s2120 + $0x170] sm:$0xff]
      %v2153 = vpack.c.bf16 %v2122, %v2121
      %v2154 = vpack.c.bf16 %v2124, %v2123
      %v2155 = vpack.c.bf16 %v2126, %v2125
      %v2156 = vpack.c.bf16 %v2128, %v2127
      %v2157 = vpack.c.bf16 %v2130, %v2129
      %v2158 = vpack.c.bf16 %v2132, %v2131
      %v2159 = vpack.c.bf16 %v2134, %v2133
      %v2160 = vpack.c.bf16 %v2136, %v2135
      %v2161 = vpack.c.bf16 %v2138, %v2137
      %v2162 = vpack.c.bf16 %v2140, %v2139
      %v2163 = vpack.c.bf16 %v2142, %v2141
      %v2164 = vpack.c.bf16 %v2144, %v2143
      %v2165 = vpack.c.bf16 %v2146, %v2145
      %v2166 = vpack.c.bf16 %v2148, %v2147
      %v2167 = vpack.c.bf16 %v2150, %v2149
      %v2168 = vpack.c.bf16 %v2152, %v2151
      %s2169 = scalar_lea.vmem %s3, 12
      %v2170 = vld [vmem:[%s2169] sm:$0x3]
      %v2172 = vsel %vm341, %v2153, 0
      %v2175 = vsel %vm341, %v2154, 0
      %v2178 = vsel %vm341, %v2155, 0
      %v2181 = vsel %vm341, %v2156, 0
      %v2184 = vsel %vm341, %v2157, 0
      %v2187 = vsel %vm341, %v2158, 0
      %v2190 = vsel %vm341, %v2159, 0
      %v2193 = vsel %vm341, %v2160, 0
      %v2196 = vsel %vm341, %v2161, 0
      %v2199 = vsel %vm341, %v2162, 0
      %v2202 = vsel %vm341, %v2163, 0
      %v2205 = vsel %vm341, %v2164, 0
      %v2208 = vsel %vm341, %v2165, 0
      %v2211 = vsel %vm341, %v2166, 0
      %v2214 = vsel %vm341, %v2167, 0
      %v2217 = vsel %vm341, %v2168, 0
      %v2220 = vsel %vm567, %v2170, 0
      %2222 = vmatprep.subr.bf16.mxu0 0
      %2223 = vmatpush1.bf16.msra.mxu0 0
      %2224 = vmatprep.subr.bf16.mxu0 0
      %2225 = vmatpush1.bf16.msra.mxu0 0
      %2226 = vmatprep.subr.bf16.mxu0 0
      %2227 = vmatpush1.bf16.msra.mxu0 0
      %2228 = vmatprep.subr.bf16.mxu0 0
      %2229 = vmatpush1.bf16.msra.mxu0 0
      %2230 = vmatprep.subr.bf16.mxu0 0
      %2231 = vmatpush1.bf16.msra.mxu0 0
      %2232 = vmatprep.subr.bf16.mxu0 0
      %2233 = vmatpush1.bf16.msra.mxu0 0
      %2234 = vmatprep.subr.bf16.mxu0 0
      %2235 = vmatpush1.bf16.msra.mxu0 0
      %2236 = vmatprep.subr.bf16.mxu0 0
      %2237 = vmatpush1.bf16.msra.mxu0 %v2220
      %2238 = vmatprep.subr.bf16.mxu0 0
      %2239 = vmatpush2.bf16.msra.mxu0 0
      %2240 = vmatprep.subr.bf16.mxu0 0
      %2241 = vmatpush2.bf16.msra.mxu0 0
      %2242 = vmatprep.subr.bf16.mxu0 0
      %2243 = vmatpush2.bf16.msra.mxu0 0
      %2244 = vmatprep.subr.bf16.mxu0 0
      %2245 = vmatpush2.bf16.msra.mxu0 0
      %2246 = vmatprep.subr.bf16.mxu0 0
      %2247 = vmatpush2.bf16.msra.mxu0 0
      %2248 = vmatprep.subr.bf16.mxu0 0
      %2249 = vmatpush2.bf16.msra.mxu0 0
      %2250 = vmatprep.subr.bf16.mxu0 0
      %2251 = vmatpush2.bf16.msra.mxu0 0
      %2252 = vmatprep.subr.bf16.mxu0 0
      %2253 = vmatpush2.bf16.msra.mxu0 0
      %2254 = vmatprep.mubr.bf16.mxu0 0
      %2255 = vmatmul.mubr.bf16.gmra.mxu0 %v2172
      %v2256 = vpop.f32.mrf.mxu0
      %v2257 = vadd.f32 0.0, %v2256
      %v2258 = vpop.f32.mrf.mxu0
      %v2259 = vpop.f32.mrf.mxu0
      %v2260 = vadd.f32 0.0, %v2259
      %v2261 = vpop.f32.mrf.mxu0
      %2262 = vmatprep.mubr.bf16.mxu0 0
      %2263 = vmatmul.mubr.bf16.gmra.mxu0 %v2175
      %v2264 = vpop.f32.mrf.mxu0
      %v2265 = vadd.f32 0.0, %v2264
      %v2266 = vpop.f32.mrf.mxu0
      %v2267 = vpop.f32.mrf.mxu0
      %v2268 = vadd.f32 0.0, %v2267
      %v2269 = vpop.f32.mrf.mxu0
      %2270 = vmatprep.mubr.bf16.mxu0 0
      %2271 = vmatmul.mubr.bf16.gmra.mxu0 %v2178
      %v2272 = vpop.f32.mrf.mxu0
      %v2273 = vadd.f32 0.0, %v2272
      %v2274 = vpop.f32.mrf.mxu0
      %v2275 = vpop.f32.mrf.mxu0
      %v2276 = vadd.f32 0.0, %v2275
      %v2277 = vpop.f32.mrf.mxu0
      %2278 = vmatprep.mubr.bf16.mxu0 0
      %2279 = vmatmul.mubr.bf16.gmra.mxu0 %v2181
      %v2280 = vpop.f32.mrf.mxu0
      %v2281 = vadd.f32 0.0, %v2280
      %v2282 = vpop.f32.mrf.mxu0
      %v2283 = vpop.f32.mrf.mxu0
      %v2284 = vadd.f32 0.0, %v2283
      %v2285 = vpop.f32.mrf.mxu0
      %2286 = vmatprep.mubr.bf16.mxu0 0
      %2287 = vmatmul.mubr.bf16.gmra.mxu0 %v2184
      %v2288 = vpop.f32.mrf.mxu0
      %v2289 = vadd.f32 0.0, %v2288
      %v2290 = vpop.f32.mrf.mxu0
      %v2291 = vpop.f32.mrf.mxu0
      %v2292 = vadd.f32 0.0, %v2291
      %v2293 = vpop.f32.mrf.mxu0
      %2294 = vmatprep.mubr.bf16.mxu0 0
      %2295 = vmatmul.mubr.bf16.gmra.mxu0 %v2187
      %v2296 = vpop.f32.mrf.mxu0
      %v2297 = vadd.f32 0.0, %v2296
      %v2298 = vpop.f32.mrf.mxu0
      %v2299 = vpop.f32.mrf.mxu0
      %v2300 = vadd.f32 0.0, %v2299
      %v2301 = vpop.f32.mrf.mxu0
      %2302 = vmatprep.mubr.bf16.mxu0 0
      %2303 = vmatmul.mubr.bf16.gmra.mxu0 %v2190
      %v2304 = vpop.f32.mrf.mxu0
      %v2305 = vadd.f32 0.0, %v2304
      %v2306 = vpop.f32.mrf.mxu0
      %v2307 = vpop.f32.mrf.mxu0
      %v2308 = vadd.f32 0.0, %v2307
      %v2309 = vpop.f32.mrf.mxu0
      %2310 = vmatprep.mubr.bf16.mxu0 0
      %2311 = vmatmul.mubr.bf16.gmra.mxu0 %v2193
      %v2312 = vpop.f32.mrf.mxu0
      %v2313 = vadd.f32 0.0, %v2312
      %v2314 = vpop.f32.mrf.mxu0
      %v2315 = vpop.f32.mrf.mxu0
      %v2316 = vadd.f32 0.0, %v2315
      %v2317 = vpop.f32.mrf.mxu0
      %2318 = vmatprep.mubr.bf16.mxu0 0
      %2319 = vmatmul.mubr.bf16.gmra.mxu0 %v2196
      %v2320 = vpop.f32.mrf.mxu0
      %v2321 = vadd.f32 0.0, %v2320
      %v2322 = vpop.f32.mrf.mxu0
      %v2323 = vpop.f32.mrf.mxu0
      %v2324 = vadd.f32 0.0, %v2323
      %v2325 = vpop.f32.mrf.mxu0
      %2326 = vmatprep.mubr.bf16.mxu0 0
      %2327 = vmatmul.mubr.bf16.gmra.mxu0 %v2199
      %v2328 = vpop.f32.mrf.mxu0
      %v2329 = vadd.f32 0.0, %v2328
      %v2330 = vpop.f32.mrf.mxu0
      %v2331 = vpop.f32.mrf.mxu0
      %v2332 = vadd.f32 0.0, %v2331
      %v2333 = vpop.f32.mrf.mxu0
      %2334 = vmatprep.mubr.bf16.mxu0 0
      %2335 = vmatmul.mubr.bf16.gmra.mxu0 %v2202
      %v2336 = vpop.f32.mrf.mxu0
      %v2337 = vadd.f32 0.0, %v2336
      %v2338 = vpop.f32.mrf.mxu0
      %v2339 = vpop.f32.mrf.mxu0
      %v2340 = vadd.f32 0.0, %v2339
      %v2341 = vpop.f32.mrf.mxu0
      %2342 = vmatprep.mubr.bf16.mxu0 0
      %2343 = vmatmul.mubr.bf16.gmra.mxu0 %v2205
      %v2344 = vpop.f32.mrf.mxu0
      %v2345 = vadd.f32 0.0, %v2344
      %v2346 = vpop.f32.mrf.mxu0
      %v2347 = vpop.f32.mrf.mxu0
      %v2348 = vadd.f32 0.0, %v2347
      %v2349 = vpop.f32.mrf.mxu0
      %2350 = vmatprep.mubr.bf16.mxu0 0
      %2351 = vmatmul.mubr.bf16.gmra.mxu0 %v2208
      %v2352 = vpop.f32.mrf.mxu0
      %v2353 = vadd.f32 0.0, %v2352
      %v2354 = vpop.f32.mrf.mxu0
      %v2355 = vpop.f32.mrf.mxu0
      %v2356 = vadd.f32 0.0, %v2355
      %v2357 = vpop.f32.mrf.mxu0
      %2358 = vmatprep.mubr.bf16.mxu0 0
      %2359 = vmatmul.mubr.bf16.gmra.mxu0 %v2211
      %v2360 = vpop.f32.mrf.mxu0
      %v2361 = vadd.f32 0.0, %v2360
      %v2362 = vpop.f32.mrf.mxu0
      %v2363 = vpop.f32.mrf.mxu0
      %v2364 = vadd.f32 0.0, %v2363
      %v2365 = vpop.f32.mrf.mxu0
      %2366 = vmatprep.mubr.bf16.mxu0 0
      %2367 = vmatmul.mubr.bf16.gmra.mxu0 %v2214
      %v2368 = vpop.f32.mrf.mxu0
      %v2369 = vadd.f32 0.0, %v2368
      %v2370 = vpop.f32.mrf.mxu0
      %v2371 = vpop.f32.mrf.mxu0
      %v2372 = vadd.f32 0.0, %v2371
      %v2373 = vpop.f32.mrf.mxu0
      %2374 = vmatprep.mubr.bf16.mxu0 0
      %2375 = vmatmul.mubr.bf16.gmra.mxu0 %v2217
      %v2376 = vpop.f32.mrf.mxu0
      %v2377 = vadd.f32 0.0, %v2376
      %v2378 = vpop.f32.mrf.mxu0
      %v2379 = vpop.f32.mrf.mxu0
      %v2380 = vadd.f32 0.0, %v2379
      %v2381 = vpop.f32.mrf.mxu0
      %2382 = vdwg.mxu0
      %v2383 = vadd.f32 %v2088, %v2257
      %v2384 = vadd.f32 %v2089, %v2260
      %v2385 = vadd.f32 %v2090, %v2265
      %v2386 = vadd.f32 %v2091, %v2268
      %v2387 = vadd.f32 %v2092, %v2273
      %v2388 = vadd.f32 %v2093, %v2276
      %v2389 = vadd.f32 %v2094, %v2281
      %v2390 = vadd.f32 %v2095, %v2284
      %v2391 = vadd.f32 %v2096, %v2289
      %v2392 = vadd.f32 %v2097, %v2292
      %v2393 = vadd.f32 %v2098, %v2297
      %v2394 = vadd.f32 %v2099, %v2300
      %v2395 = vadd.f32 %v2100, %v2305
      %v2396 = vadd.f32 %v2101, %v2308
      %v2397 = vadd.f32 %v2102, %v2313
      %v2398 = vadd.f32 %v2103, %v2316
      %v2399 = vadd.f32 %v2104, %v2321
      %v2400 = vadd.f32 %v2105, %v2324
      %v2401 = vadd.f32 %v2106, %v2329
      %v2402 = vadd.f32 %v2107, %v2332
      %v2403 = vadd.f32 %v2108, %v2337
      %v2404 = vadd.f32 %v2109, %v2340
      %v2405 = vadd.f32 %v2110, %v2345
      %v2406 = vadd.f32 %v2111, %v2348
      %v2407 = vadd.f32 %v2112, %v2353
      %v2408 = vadd.f32 %v2113, %v2356
      %v2409 = vadd.f32 %v2114, %v2361
      %v2410 = vadd.f32 %v2115, %v2364
      %v2411 = vadd.f32 %v2116, %v2369
      %v2412 = vadd.f32 %v2117, %v2372
      %v2413 = vadd.f32 %v2118, %v2377
      %v2414 = vadd.f32 %v2119, %v2380
      %v2415 = vld [vmem:[%s2120 + $0x1] sm:$0xff]
      %v2416 = vld [vmem:[%s2120 + $0x9] sm:$0xff]
      %v2417 = vld [vmem:[%s2120 + $0x19] sm:$0xff]
      %v2418 = vld [vmem:[%s2120 + $0x21] sm:$0xff]
      %v2419 = vld [vmem:[%s2120 + $0x31] sm:$0xff]
      %v2420 = vld [vmem:[%s2120 + $0x39] sm:$0xff]
      %v2421 = vld [vmem:[%s2120 + $0x49] sm:$0xff]
      %v2422 = vld [vmem:[%s2120 + $0x51] sm:$0xff]
      %v2423 = vld [vmem:[%s2120 + $0x61] sm:$0xff]
      %v2424 = vld [vmem:[%s2120 + $0x69] sm:$0xff]
      %v2425 = vld [vmem:[%s2120 + $0x79] sm:$0xff]
      %v2426 = vld [vmem:[%s2120 + $0x81] sm:$0xff]
      %v2427 = vld [vmem:[%s2120 + $0x91] sm:$0xff]
      %v2428 = vld [vmem:[%s2120 + $0x99] sm:$0xff]
      %v2429 = vld [vmem:[%s2120 + $0xa9] sm:$0xff]
      %v2430 = vld [vmem:[%s2120 + $0xb1] sm:$0xff]
      %v2431 = vld [vmem:[%s2120 + $0xc1] sm:$0xff]
      %v2432 = vld [vmem:[%s2120 + $0xc9] sm:$0xff]
      %v2433 = vld [vmem:[%s2120 + $0xd9] sm:$0xff]
      %v2434 = vld [vmem:[%s2120 + $0xe1] sm:$0xff]
      %v2435 = vld [vmem:[%s2120 + $0xf1] sm:$0xff]
      %v2436 = vld [vmem:[%s2120 + $0xf9] sm:$0xff]
      %v2437 = vld [vmem:[%s2120 + $0x109] sm:$0xff]
      %v2438 = vld [vmem:[%s2120 + $0x111] sm:$0xff]
      %v2439 = vld [vmem:[%s2120 + $0x121] sm:$0xff]
      %v2440 = vld [vmem:[%s2120 + $0x129] sm:$0xff]
      %v2441 = vld [vmem:[%s2120 + $0x139] sm:$0xff]
      %v2442 = vld [vmem:[%s2120 + $0x141] sm:$0xff]
      %v2443 = vld [vmem:[%s2120 + $0x151] sm:$0xff]
      %v2444 = vld [vmem:[%s2120 + $0x159] sm:$0xff]
      %v2445 = vld [vmem:[%s2120 + $0x169] sm:$0xff]
      %v2446 = vld [vmem:[%s2120 + $0x171] sm:$0xff]
      %v2447 = vpack.c.bf16 %v2416, %v2415
      %v2448 = vpack.c.bf16 %v2418, %v2417
      %v2449 = vpack.c.bf16 %v2420, %v2419
      %v2450 = vpack.c.bf16 %v2422, %v2421
      %v2451 = vpack.c.bf16 %v2424, %v2423
      %v2452 = vpack.c.bf16 %v2426, %v2425
      %v2453 = vpack.c.bf16 %v2428, %v2427
      %v2454 = vpack.c.bf16 %v2430, %v2429
      %v2455 = vpack.c.bf16 %v2432, %v2431
      %v2456 = vpack.c.bf16 %v2434, %v2433
      %v2457 = vpack.c.bf16 %v2436, %v2435
      %v2458 = vpack.c.bf16 %v2438, %v2437
      %v2459 = vpack.c.bf16 %v2440, %v2439
      %v2460 = vpack.c.bf16 %v2442, %v2441
      %v2461 = vpack.c.bf16 %v2444, %v2443
      %v2462 = vpack.c.bf16 %v2446, %v2445
      %s2463 = scalar_lea.vmem %s3, 14
      %v2464 = vld [vmem:[%s2463] sm:$0x3]
      %v2466 = vsel %vm341, %v2447, 0
      %v2469 = vsel %vm341, %v2448, 0
      %v2472 = vsel %vm341, %v2449, 0
      %v2475 = vsel %vm341, %v2450, 0
      %v2478 = vsel %vm341, %v2451, 0
      %v2481 = vsel %vm341, %v2452, 0
      %v2484 = vsel %vm341, %v2453, 0
      %v2487 = vsel %vm341, %v2454, 0
      %v2490 = vsel %vm341, %v2455, 0
      %v2493 = vsel %vm341, %v2456, 0
      %v2496 = vsel %vm341, %v2457, 0
      %v2499 = vsel %vm341, %v2458, 0
      %v2502 = vsel %vm341, %v2459, 0
      %v2505 = vsel %vm341, %v2460, 0
      %v2508 = vsel %vm341, %v2461, 0
      %v2511 = vsel %vm341, %v2462, 0
      %v2514 = vsel %vm567, %v2464, 0
      %2516 = vmatprep.subr.bf16.mxu0 0
      %2517 = vmatpush1.bf16.msra.mxu0 0
      %2518 = vmatprep.subr.bf16.mxu0 0
      %2519 = vmatpush1.bf16.msra.mxu0 0
      %2520 = vmatprep.subr.bf16.mxu0 0
      %2521 = vmatpush1.bf16.msra.mxu0 0
      %2522 = vmatprep.subr.bf16.mxu0 0
      %2523 = vmatpush1.bf16.msra.mxu0 0
      %2524 = vmatprep.subr.bf16.mxu0 0
      %2525 = vmatpush1.bf16.msra.mxu0 0
      %2526 = vmatprep.subr.bf16.mxu0 0
      %2527 = vmatpush1.bf16.msra.mxu0 0
      %2528 = vmatprep.subr.bf16.mxu0 0
      %2529 = vmatpush1.bf16.msra.mxu0 0
      %2530 = vmatprep.subr.bf16.mxu0 0
      %2531 = vmatpush1.bf16.msra.mxu0 %v2514
      %2532 = vmatprep.subr.bf16.mxu0 0
      %2533 = vmatpush2.bf16.msra.mxu0 0
      %2534 = vmatprep.subr.bf16.mxu0 0
      %2535 = vmatpush2.bf16.msra.mxu0 0
      %2536 = vmatprep.subr.bf16.mxu0 0
      %2537 = vmatpush2.bf16.msra.mxu0 0
      %2538 = vmatprep.subr.bf16.mxu0 0
      %2539 = vmatpush2.bf16.msra.mxu0 0
      %2540 = vmatprep.subr.bf16.mxu0 0
      %2541 = vmatpush2.bf16.msra.mxu0 0
      %2542 = vmatprep.subr.bf16.mxu0 0
      %2543 = vmatpush2.bf16.msra.mxu0 0
      %2544 = vmatprep.subr.bf16.mxu0 0
      %2545 = vmatpush2.bf16.msra.mxu0 0
      %2546 = vmatprep.subr.bf16.mxu0 0
      %2547 = vmatpush2.bf16.msra.mxu0 0
      %2548 = vmatprep.mubr.bf16.mxu0 0
      %2549 = vmatmul.mubr.bf16.gmra.mxu0 %v2466
      %v2550 = vpop.f32.mrf.mxu0
      %v2551 = vadd.f32 0.0, %v2550
      %v2552 = vpop.f32.mrf.mxu0
      %v2553 = vpop.f32.mrf.mxu0
      %v2554 = vadd.f32 0.0, %v2553
      %v2555 = vpop.f32.mrf.mxu0
      %2556 = vmatprep.mubr.bf16.mxu0 0
      %2557 = vmatmul.mubr.bf16.gmra.mxu0 %v2469
      %v2558 = vpop.f32.mrf.mxu0
      %v2559 = vadd.f32 0.0, %v2558
      %v2560 = vpop.f32.mrf.mxu0
      %v2561 = vpop.f32.mrf.mxu0
      %v2562 = vadd.f32 0.0, %v2561
      %v2563 = vpop.f32.mrf.mxu0
      %2564 = vmatprep.mubr.bf16.mxu0 0
      %2565 = vmatmul.mubr.bf16.gmra.mxu0 %v2472
      %v2566 = vpop.f32.mrf.mxu0
      %v2567 = vadd.f32 0.0, %v2566
      %v2568 = vpop.f32.mrf.mxu0
      %v2569 = vpop.f32.mrf.mxu0
      %v2570 = vadd.f32 0.0, %v2569
      %v2571 = vpop.f32.mrf.mxu0
      %2572 = vmatprep.mubr.bf16.mxu0 0
      %2573 = vmatmul.mubr.bf16.gmra.mxu0 %v2475
      %v2574 = vpop.f32.mrf.mxu0
      %v2575 = vadd.f32 0.0, %v2574
      %v2576 = vpop.f32.mrf.mxu0
      %v2577 = vpop.f32.mrf.mxu0
      %v2578 = vadd.f32 0.0, %v2577
      %v2579 = vpop.f32.mrf.mxu0
      %2580 = vmatprep.mubr.bf16.mxu0 0
      %2581 = vmatmul.mubr.bf16.gmra.mxu0 %v2478
      %v2582 = vpop.f32.mrf.mxu0
      %v2583 = vadd.f32 0.0, %v2582
      %v2584 = vpop.f32.mrf.mxu0
      %v2585 = vpop.f32.mrf.mxu0
      %v2586 = vadd.f32 0.0, %v2585
      %v2587 = vpop.f32.mrf.mxu0
      %2588 = vmatprep.mubr.bf16.mxu0 0
      %2589 = vmatmul.mubr.bf16.gmra.mxu0 %v2481
      %v2590 = vpop.f32.mrf.mxu0
      %v2591 = vadd.f32 0.0, %v2590
      %v2592 = vpop.f32.mrf.mxu0
      %v2593 = vpop.f32.mrf.mxu0
      %v2594 = vadd.f32 0.0, %v2593
      %v2595 = vpop.f32.mrf.mxu0
      %2596 = vmatprep.mubr.bf16.mxu0 0
      %2597 = vmatmul.mubr.bf16.gmra.mxu0 %v2484
      %v2598 = vpop.f32.mrf.mxu0
      %v2599 = vadd.f32 0.0, %v2598
      %v2600 = vpop.f32.mrf.mxu0
      %v2601 = vpop.f32.mrf.mxu0
      %v2602 = vadd.f32 0.0, %v2601
      %v2603 = vpop.f32.mrf.mxu0
      %2604 = vmatprep.mubr.bf16.mxu0 0
      %2605 = vmatmul.mubr.bf16.gmra.mxu0 %v2487
      %v2606 = vpop.f32.mrf.mxu0
      %v2607 = vadd.f32 0.0, %v2606
      %v2608 = vpop.f32.mrf.mxu0
      %v2609 = vpop.f32.mrf.mxu0
      %v2610 = vadd.f32 0.0, %v2609
      %v2611 = vpop.f32.mrf.mxu0
      %2612 = vmatprep.mubr.bf16.mxu0 0
      %2613 = vmatmul.mubr.bf16.gmra.mxu0 %v2490
      %v2614 = vpop.f32.mrf.mxu0
      %v2615 = vadd.f32 0.0, %v2614
      %v2616 = vpop.f32.mrf.mxu0
      %v2617 = vpop.f32.mrf.mxu0
      %v2618 = vadd.f32 0.0, %v2617
      %v2619 = vpop.f32.mrf.mxu0
      %2620 = vmatprep.mubr.bf16.mxu0 0
      %2621 = vmatmul.mubr.bf16.gmra.mxu0 %v2493
      %v2622 = vpop.f32.mrf.mxu0
      %v2623 = vadd.f32 0.0, %v2622
      %v2624 = vpop.f32.mrf.mxu0
      %v2625 = vpop.f32.mrf.mxu0
      %v2626 = vadd.f32 0.0, %v2625
      %v2627 = vpop.f32.mrf.mxu0
      %2628 = vmatprep.mubr.bf16.mxu0 0
      %2629 = vmatmul.mubr.bf16.gmra.mxu0 %v2496
      %v2630 = vpop.f32.mrf.mxu0
      %v2631 = vadd.f32 0.0, %v2630
      %v2632 = vpop.f32.mrf.mxu0
      %v2633 = vpop.f32.mrf.mxu0
      %v2634 = vadd.f32 0.0, %v2633
      %v2635 = vpop.f32.mrf.mxu0
      %2636 = vmatprep.mubr.bf16.mxu0 0
      %2637 = vmatmul.mubr.bf16.gmra.mxu0 %v2499
      %v2638 = vpop.f32.mrf.mxu0
      %v2639 = vadd.f32 0.0, %v2638
      %v2640 = vpop.f32.mrf.mxu0
      %v2641 = vpop.f32.mrf.mxu0
      %v2642 = vadd.f32 0.0, %v2641
      %v2643 = vpop.f32.mrf.mxu0
      %2644 = vmatprep.mubr.bf16.mxu0 0
      %2645 = vmatmul.mubr.bf16.gmra.mxu0 %v2502
      %v2646 = vpop.f32.mrf.mxu0
      %v2647 = vadd.f32 0.0, %v2646
      %v2648 = vpop.f32.mrf.mxu0
      %v2649 = vpop.f32.mrf.mxu0
      %v2650 = vadd.f32 0.0, %v2649
      %v2651 = vpop.f32.mrf.mxu0
      %2652 = vmatprep.mubr.bf16.mxu0 0
      %2653 = vmatmul.mubr.bf16.gmra.mxu0 %v2505
      %v2654 = vpop.f32.mrf.mxu0
      %v2655 = vadd.f32 0.0, %v2654
      %v2656 = vpop.f32.mrf.mxu0
      %v2657 = vpop.f32.mrf.mxu0
      %v2658 = vadd.f32 0.0, %v2657
      %v2659 = vpop.f32.mrf.mxu0
      %2660 = vmatprep.mubr.bf16.mxu0 0
      %2661 = vmatmul.mubr.bf16.gmra.mxu0 %v2508
      %v2662 = vpop.f32.mrf.mxu0
      %v2663 = vadd.f32 0.0, %v2662
      %v2664 = vpop.f32.mrf.mxu0
      %v2665 = vpop.f32.mrf.mxu0
      %v2666 = vadd.f32 0.0, %v2665
      %v2667 = vpop.f32.mrf.mxu0
      %2668 = vmatprep.mubr.bf16.mxu0 0
      %2669 = vmatmul.mubr.bf16.gmra.mxu0 %v2511
      %v2670 = vpop.f32.mrf.mxu0
      %v2671 = vadd.f32 0.0, %v2670
      %v2672 = vpop.f32.mrf.mxu0
      %v2673 = vpop.f32.mrf.mxu0
      %v2674 = vadd.f32 0.0, %v2673
      %v2675 = vpop.f32.mrf.mxu0
      %2676 = vdwg.mxu0
      %v2677 = vadd.f32 %v2383, %v2551
      %v2678 = vadd.f32 %v2384, %v2554
      %v2679 = vadd.f32 %v2385, %v2559
      %v2680 = vadd.f32 %v2386, %v2562
      %v2681 = vadd.f32 %v2387, %v2567
      %v2682 = vadd.f32 %v2388, %v2570
      %v2683 = vadd.f32 %v2389, %v2575
      %v2684 = vadd.f32 %v2390, %v2578
      %v2685 = vadd.f32 %v2391, %v2583
      %v2686 = vadd.f32 %v2392, %v2586
      %v2687 = vadd.f32 %v2393, %v2591
      %v2688 = vadd.f32 %v2394, %v2594
      %v2689 = vadd.f32 %v2395, %v2599
      %v2690 = vadd.f32 %v2396, %v2602
      %v2691 = vadd.f32 %v2397, %v2607
      %v2692 = vadd.f32 %v2398, %v2610
      %v2693 = vadd.f32 %v2399, %v2615
      %v2694 = vadd.f32 %v2400, %v2618
      %v2695 = vadd.f32 %v2401, %v2623
      %v2696 = vadd.f32 %v2402, %v2626
      %v2697 = vadd.f32 %v2403, %v2631
      %v2698 = vadd.f32 %v2404, %v2634
      %v2699 = vadd.f32 %v2405, %v2639
      %v2700 = vadd.f32 %v2406, %v2642
      %v2701 = vadd.f32 %v2407, %v2647
      %v2702 = vadd.f32 %v2408, %v2650
      %v2703 = vadd.f32 %v2409, %v2655
      %v2704 = vadd.f32 %v2410, %v2658
      %v2705 = vadd.f32 %v2411, %v2663
      %v2706 = vadd.f32 %v2412, %v2666
      %v2707 = vadd.f32 %v2413, %v2671
      %v2708 = vadd.f32 %v2414, %v2674
      %v2709 = vld [vmem:[%s2120 + $0x2] sm:$0xff]
      %v2710 = vld [vmem:[%s2120 + $0xa] sm:$0xff]
      %v2711 = vld [vmem:[%s2120 + $0x1a] sm:$0xff]
      %v2712 = vld [vmem:[%s2120 + $0x22] sm:$0xff]
      %v2713 = vld [vmem:[%s2120 + $0x32] sm:$0xff]
      %v2714 = vld [vmem:[%s2120 + $0x3a] sm:$0xff]
      %v2715 = vld [vmem:[%s2120 + $0x4a] sm:$0xff]
      %v2716 = vld [vmem:[%s2120 + $0x52] sm:$0xff]
      %v2717 = vld [vmem:[%s2120 + $0x62] sm:$0xff]
      %v2718 = vld [vmem:[%s2120 + $0x6a] sm:$0xff]
      %v2719 = vld [vmem:[%s2120 + $0x7a] sm:$0xff]
      %v2720 = vld [vmem:[%s2120 + $0x82] sm:$0xff]
      %v2721 = vld [vmem:[%s2120 + $0x92] sm:$0xff]
      %v2722 = vld [vmem:[%s2120 + $0x9a] sm:$0xff]
      %v2723 = vld [vmem:[%s2120 + $0xaa] sm:$0xff]
      %v2724 = vld [vmem:[%s2120 + $0xb2] sm:$0xff]
      %v2725 = vld [vmem:[%s2120 + $0xc2] sm:$0xff]
      %v2726 = vld [vmem:[%s2120 + $0xca] sm:$0xff]
      %v2727 = vld [vmem:[%s2120 + $0xda] sm:$0xff]
      %v2728 = vld [vmem:[%s2120 + $0xe2] sm:$0xff]
      %v2729 = vld [vmem:[%s2120 + $0xf2] sm:$0xff]
      %v2730 = vld [vmem:[%s2120 + $0xfa] sm:$0xff]
      %v2731 = vld [vmem:[%s2120 + $0x10a] sm:$0xff]
      %v2732 = vld [vmem:[%s2120 + $0x112] sm:$0xff]
      %v2733 = vld [vmem:[%s2120 + $0x122] sm:$0xff]
      %v2734 = vld [vmem:[%s2120 + $0x12a] sm:$0xff]
      %v2735 = vld [vmem:[%s2120 + $0x13a] sm:$0xff]
      %v2736 = vld [vmem:[%s2120 + $0x142] sm:$0xff]
      %v2737 = vld [vmem:[%s2120 + $0x152] sm:$0xff]
      %v2738 = vld [vmem:[%s2120 + $0x15a] sm:$0xff]
      %v2739 = vld [vmem:[%s2120 + $0x16a] sm:$0xff]
      %v2740 = vld [vmem:[%s2120 + $0x172] sm:$0xff]
      %v2741 = vpack.c.bf16 %v2710, %v2709
      %v2742 = vpack.c.bf16 %v2712, %v2711
      %v2743 = vpack.c.bf16 %v2714, %v2713
      %v2744 = vpack.c.bf16 %v2716, %v2715
      %v2745 = vpack.c.bf16 %v2718, %v2717
      %v2746 = vpack.c.bf16 %v2720, %v2719
      %v2747 = vpack.c.bf16 %v2722, %v2721
      %v2748 = vpack.c.bf16 %v2724, %v2723
      %v2749 = vpack.c.bf16 %v2726, %v2725
      %v2750 = vpack.c.bf16 %v2728, %v2727
      %v2751 = vpack.c.bf16 %v2730, %v2729
      %v2752 = vpack.c.bf16 %v2732, %v2731
      %v2753 = vpack.c.bf16 %v2734, %v2733
      %v2754 = vpack.c.bf16 %v2736, %v2735
      %v2755 = vpack.c.bf16 %v2738, %v2737
      %v2756 = vpack.c.bf16 %v2740, %v2739
      %s2757 = scalar_lea.vmem %s3, 16
      %v2758 = vld [vmem:[%s2757] sm:$0x3]
      %v2760 = vsel %vm341, %v2741, 0
      %v2763 = vsel %vm341, %v2742, 0
      %v2766 = vsel %vm341, %v2743, 0
      %v2769 = vsel %vm341, %v2744, 0
      %v2772 = vsel %vm341, %v2745, 0
      %v2775 = vsel %vm341, %v2746, 0
      %v2778 = vsel %vm341, %v2747, 0
      %v2781 = vsel %vm341, %v2748, 0
      %v2784 = vsel %vm341, %v2749, 0
      %v2787 = vsel %vm341, %v2750, 0
      %v2790 = vsel %vm341, %v2751, 0
      %v2793 = vsel %vm341, %v2752, 0
      %v2796 = vsel %vm341, %v2753, 0
      %v2799 = vsel %vm341, %v2754, 0
      %v2802 = vsel %vm341, %v2755, 0
      %v2805 = vsel %vm341, %v2756, 0
      %v2808 = vsel %vm567, %v2758, 0
      %2810 = vmatprep.subr.bf16.mxu0 0
      %2811 = vmatpush1.bf16.msra.mxu0 0
      %2812 = vmatprep.subr.bf16.mxu0 0
      %2813 = vmatpush1.bf16.msra.mxu0 0
      %2814 = vmatprep.subr.bf16.mxu0 0
      %2815 = vmatpush1.bf16.msra.mxu0 0
      %2816 = vmatprep.subr.bf16.mxu0 0
      %2817 = vmatpush1.bf16.msra.mxu0 0
      %2818 = vmatprep.subr.bf16.mxu0 0
      %2819 = vmatpush1.bf16.msra.mxu0 0
      %2820 = vmatprep.subr.bf16.mxu0 0
      %2821 = vmatpush1.bf16.msra.mxu0 0
      %2822 = vmatprep.subr.bf16.mxu0 0
      %2823 = vmatpush1.bf16.msra.mxu0 0
      %2824 = vmatprep.subr.bf16.mxu0 0
      %2825 = vmatpush1.bf16.msra.mxu0 %v2808
      %2826 = vmatprep.subr.bf16.mxu0 0
      %2827 = vmatpush2.bf16.msra.mxu0 0
      %2828 = vmatprep.subr.bf16.mxu0 0
      %2829 = vmatpush2.bf16.msra.mxu0 0
      %2830 = vmatprep.subr.bf16.mxu0 0
      %2831 = vmatpush2.bf16.msra.mxu0 0
      %2832 = vmatprep.subr.bf16.mxu0 0
      %2833 = vmatpush2.bf16.msra.mxu0 0
      %2834 = vmatprep.subr.bf16.mxu0 0
      %2835 = vmatpush2.bf16.msra.mxu0 0
      %2836 = vmatprep.subr.bf16.mxu0 0
      %2837 = vmatpush2.bf16.msra.mxu0 0
      %2838 = vmatprep.subr.bf16.mxu0 0
      %2839 = vmatpush2.bf16.msra.mxu0 0
      %2840 = vmatprep.subr.bf16.mxu0 0
      %2841 = vmatpush2.bf16.msra.mxu0 0
      %2842 = vmatprep.mubr.bf16.mxu0 0
      %2843 = vmatmul.mubr.bf16.gmra.mxu0 %v2760
      %v2844 = vpop.f32.mrf.mxu0
      %v2845 = vadd.f32 0.0, %v2844
      %v2846 = vpop.f32.mrf.mxu0
      %v2847 = vpop.f32.mrf.mxu0
      %v2848 = vadd.f32 0.0, %v2847
      %v2849 = vpop.f32.mrf.mxu0
      %2850 = vmatprep.mubr.bf16.mxu0 0
      %2851 = vmatmul.mubr.bf16.gmra.mxu0 %v2763
      %v2852 = vpop.f32.mrf.mxu0
      %v2853 = vadd.f32 0.0, %v2852
      %v2854 = vpop.f32.mrf.mxu0
      %v2855 = vpop.f32.mrf.mxu0
      %v2856 = vadd.f32 0.0, %v2855
      %v2857 = vpop.f32.mrf.mxu0
      %2858 = vmatprep.mubr.bf16.mxu0 0
      %2859 = vmatmul.mubr.bf16.gmra.mxu0 %v2766
      %v2860 = vpop.f32.mrf.mxu0
      %v2861 = vadd.f32 0.0, %v2860
      %v2862 = vpop.f32.mrf.mxu0
      %v2863 = vpop.f32.mrf.mxu0
      %v2864 = vadd.f32 0.0, %v2863
      %v2865 = vpop.f32.mrf.mxu0
      %2866 = vmatprep.mubr.bf16.mxu0 0
      %2867 = vmatmul.mubr.bf16.gmra.mxu0 %v2769
      %v2868 = vpop.f32.mrf.mxu0
      %v2869 = vadd.f32 0.0, %v2868
      %v2870 = vpop.f32.mrf.mxu0
      %v2871 = vpop.f32.mrf.mxu0
      %v2872 = vadd.f32 0.0, %v2871
      %v2873 = vpop.f32.mrf.mxu0
      %2874 = vmatprep.mubr.bf16.mxu0 0
      %2875 = vmatmul.mubr.bf16.gmra.mxu0 %v2772
      %v2876 = vpop.f32.mrf.mxu0
      %v2877 = vadd.f32 0.0, %v2876
      %v2878 = vpop.f32.mrf.mxu0
      %v2879 = vpop.f32.mrf.mxu0
      %v2880 = vadd.f32 0.0, %v2879
      %v2881 = vpop.f32.mrf.mxu0
      %2882 = vmatprep.mubr.bf16.mxu0 0
      %2883 = vmatmul.mubr.bf16.gmra.mxu0 %v2775
      %v2884 = vpop.f32.mrf.mxu0
      %v2885 = vadd.f32 0.0, %v2884
      %v2886 = vpop.f32.mrf.mxu0
      %v2887 = vpop.f32.mrf.mxu0
      %v2888 = vadd.f32 0.0, %v2887
      %v2889 = vpop.f32.mrf.mxu0
      %2890 = vmatprep.mubr.bf16.mxu0 0
      %2891 = vmatmul.mubr.bf16.gmra.mxu0 %v2778
      %v2892 = vpop.f32.mrf.mxu0
      %v2893 = vadd.f32 0.0, %v2892
      %v2894 = vpop.f32.mrf.mxu0
      %v2895 = vpop.f32.mrf.mxu0
      %v2896 = vadd.f32 0.0, %v2895
      %v2897 = vpop.f32.mrf.mxu0
      %2898 = vmatprep.mubr.bf16.mxu0 0
      %2899 = vmatmul.mubr.bf16.gmra.mxu0 %v2781
      %v2900 = vpop.f32.mrf.mxu0
      %v2901 = vadd.f32 0.0, %v2900
      %v2902 = vpop.f32.mrf.mxu0
      %v2903 = vpop.f32.mrf.mxu0
      %v2904 = vadd.f32 0.0, %v2903
      %v2905 = vpop.f32.mrf.mxu0
      %2906 = vmatprep.mubr.bf16.mxu0 0
      %2907 = vmatmul.mubr.bf16.gmra.mxu0 %v2784
      %v2908 = vpop.f32.mrf.mxu0
      %v2909 = vadd.f32 0.0, %v2908
      %v2910 = vpop.f32.mrf.mxu0
      %v2911 = vpop.f32.mrf.mxu0
      %v2912 = vadd.f32 0.0, %v2911
      %v2913 = vpop.f32.mrf.mxu0
      %2914 = vmatprep.mubr.bf16.mxu0 0
      %2915 = vmatmul.mubr.bf16.gmra.mxu0 %v2787
      %v2916 = vpop.f32.mrf.mxu0
      %v2917 = vadd.f32 0.0, %v2916
      %v2918 = vpop.f32.mrf.mxu0
      %v2919 = vpop.f32.mrf.mxu0
      %v2920 = vadd.f32 0.0, %v2919
      %v2921 = vpop.f32.mrf.mxu0
      %2922 = vmatprep.mubr.bf16.mxu0 0
      %2923 = vmatmul.mubr.bf16.gmra.mxu0 %v2790
      %v2924 = vpop.f32.mrf.mxu0
      %v2925 = vadd.f32 0.0, %v2924
      %v2926 = vpop.f32.mrf.mxu0
      %v2927 = vpop.f32.mrf.mxu0
      %v2928 = vadd.f32 0.0, %v2927
      %v2929 = vpop.f32.mrf.mxu0
      %2930 = vmatprep.mubr.bf16.mxu0 0
      %2931 = vmatmul.mubr.bf16.gmra.mxu0 %v2793
      %v2932 = vpop.f32.mrf.mxu0
      %v2933 = vadd.f32 0.0, %v2932
      %v2934 = vpop.f32.mrf.mxu0
      %v2935 = vpop.f32.mrf.mxu0
      %v2936 = vadd.f32 0.0, %v2935
      %v2937 = vpop.f32.mrf.mxu0
      %2938 = vmatprep.mubr.bf16.mxu0 0
      %2939 = vmatmul.mubr.bf16.gmra.mxu0 %v2796
      %v2940 = vpop.f32.mrf.mxu0
      %v2941 = vadd.f32 0.0, %v2940
      %v2942 = vpop.f32.mrf.mxu0
      %v2943 = vpop.f32.mrf.mxu0
      %v2944 = vadd.f32 0.0, %v2943
      %v2945 = vpop.f32.mrf.mxu0
      %2946 = vmatprep.mubr.bf16.mxu0 0
      %2947 = vmatmul.mubr.bf16.gmra.mxu0 %v2799
      %v2948 = vpop.f32.mrf.mxu0
      %v2949 = vadd.f32 0.0, %v2948
      %v2950 = vpop.f32.mrf.mxu0
      %v2951 = vpop.f32.mrf.mxu0
      %v2952 = vadd.f32 0.0, %v2951
      %v2953 = vpop.f32.mrf.mxu0
      %2954 = vmatprep.mubr.bf16.mxu0 0
      %2955 = vmatmul.mubr.bf16.gmra.mxu0 %v2802
      %v2956 = vpop.f32.mrf.mxu0
      %v2957 = vadd.f32 0.0, %v2956
      %v2958 = vpop.f32.mrf.mxu0
      %v2959 = vpop.f32.mrf.mxu0
      %v2960 = vadd.f32 0.0, %v2959
      %v2961 = vpop.f32.mrf.mxu0
      %2962 = vmatprep.mubr.bf16.mxu0 0
      %2963 = vmatmul.mubr.bf16.gmra.mxu0 %v2805
      %v2964 = vpop.f32.mrf.mxu0
      %v2965 = vadd.f32 0.0, %v2964
      %v2966 = vpop.f32.mrf.mxu0
      %v2967 = vpop.f32.mrf.mxu0
      %v2968 = vadd.f32 0.0, %v2967
      %v2969 = vpop.f32.mrf.mxu0
      %2970 = vdwg.mxu0
      %v2971 = vadd.f32 %v2677, %v2845
      %v2972 = vadd.f32 %v2678, %v2848
      %v2973 = vadd.f32 %v2679, %v2853
      %v2974 = vadd.f32 %v2680, %v2856
      %v2975 = vadd.f32 %v2681, %v2861
      %v2976 = vadd.f32 %v2682, %v2864
      %v2977 = vadd.f32 %v2683, %v2869
      %v2978 = vadd.f32 %v2684, %v2872
      %v2979 = vadd.f32 %v2685, %v2877
      %v2980 = vadd.f32 %v2686, %v2880
      %v2981 = vadd.f32 %v2687, %v2885
      %v2982 = vadd.f32 %v2688, %v2888
      %v2983 = vadd.f32 %v2689, %v2893
      %v2984 = vadd.f32 %v2690, %v2896
      %v2985 = vadd.f32 %v2691, %v2901
      %v2986 = vadd.f32 %v2692, %v2904
      %v2987 = vadd.f32 %v2693, %v2909
      %v2988 = vadd.f32 %v2694, %v2912
      %v2989 = vadd.f32 %v2695, %v2917
      %v2990 = vadd.f32 %v2696, %v2920
      %v2991 = vadd.f32 %v2697, %v2925
      %v2992 = vadd.f32 %v2698, %v2928
      %v2993 = vadd.f32 %v2699, %v2933
      %v2994 = vadd.f32 %v2700, %v2936
      %v2995 = vadd.f32 %v2701, %v2941
      %v2996 = vadd.f32 %v2702, %v2944
      %v2997 = vadd.f32 %v2703, %v2949
      %v2998 = vadd.f32 %v2704, %v2952
      %v2999 = vadd.f32 %v2705, %v2957
      %v3000 = vadd.f32 %v2706, %v2960
      %v3001 = vadd.f32 %v2707, %v2965
      %v3002 = vadd.f32 %v2708, %v2968
      %3035 = vrot.lane.b32.xlu0 %v199, 8
      %v3036 = vpop.permute.xlu0 %3035
      %3037 = vrot.lane.b32.xlu0 %v200, 8
      %v3038 = vpop.permute.xlu0 %3037
      %3039 = vrot.lane.b32.xlu0 %v201, 8
      %v3040 = vpop.permute.xlu0 %3039
      %3041 = vrot.lane.b32.xlu0 %v202, 8
      %v3042 = vpop.permute.xlu0 %3041
      %3043 = vrot.lane.b32.xlu0 %v203, 8
      %v3044 = vpop.permute.xlu0 %3043
      %3045 = vrot.lane.b32.xlu0 %v204, 8
      %v3046 = vpop.permute.xlu0 %3045
      %3047 = vrot.lane.b32.xlu0 %v205, 8
      %v3048 = vpop.permute.xlu0 %3047
      %3049 = vrot.lane.b32.xlu0 %v206, 8
      %v3050 = vpop.permute.xlu0 %3049
      %3051 = vrot.lane.b32.xlu0 %v207, 8
      %v3052 = vpop.permute.xlu0 %3051
      %3053 = vrot.lane.b32.xlu0 %v208, 8
      %v3054 = vpop.permute.xlu0 %3053
      %3055 = vrot.lane.b32.xlu0 %v209, 8
      %v3056 = vpop.permute.xlu0 %3055
      %3057 = vrot.lane.b32.xlu0 %v210, 8
      %v3058 = vpop.permute.xlu0 %3057
      %3059 = vrot.lane.b32.xlu0 %v211, 8
      %v3060 = vpop.permute.xlu0 %3059
      %3061 = vrot.lane.b32.xlu0 %v212, 8
      %v3062 = vpop.permute.xlu0 %3061
      %3063 = vrot.lane.b32.xlu0 %v213, 8
      %v3064 = vpop.permute.xlu0 %3063
      %3065 = vrot.lane.b32.xlu0 %v214, 8
      %v3066 = vpop.permute.xlu0 %3065
      %3067 = vrot.lane.b32.xlu0 %v215, 8
      %v3068 = vpop.permute.xlu0 %3067
      %3069 = vrot.lane.b32.xlu0 %v216, 8
      %v3070 = vpop.permute.xlu0 %3069
      %3071 = vrot.lane.b32.xlu0 %v217, 8
      %v3072 = vpop.permute.xlu0 %3071
      %3073 = vrot.lane.b32.xlu0 %v218, 8
      %v3074 = vpop.permute.xlu0 %3073
      %3075 = vrot.lane.b32.xlu0 %v219, 8
      %v3076 = vpop.permute.xlu0 %3075
      %3077 = vrot.lane.b32.xlu0 %v220, 8
      %v3078 = vpop.permute.xlu0 %3077
      %3079 = vrot.lane.b32.xlu0 %v221, 8
      %v3080 = vpop.permute.xlu0 %3079
      %3081 = vrot.lane.b32.xlu0 %v222, 8
      %v3082 = vpop.permute.xlu0 %3081
      %3083 = vrot.lane.b32.xlu0 %v223, 8
      %v3084 = vpop.permute.xlu0 %3083
      %3085 = vrot.lane.b32.xlu0 %v224, 8
      %v3086 = vpop.permute.xlu0 %3085
      %3087 = vrot.lane.b32.xlu0 %v225, 8
      %v3088 = vpop.permute.xlu0 %3087
      %3089 = vrot.lane.b32.xlu0 %v226, 8
      %v3090 = vpop.permute.xlu0 %3089
      %3091 = vrot.lane.b32.xlu0 %v227, 8
      %v3092 = vpop.permute.xlu0 %3091
      %3093 = vrot.lane.b32.xlu0 %v228, 8
      %v3094 = vpop.permute.xlu0 %3093
      %3095 = vrot.lane.b32.xlu0 %v229, 8
      %v3096 = vpop.permute.xlu0 %3095
      %3097 = vrot.lane.b32.xlu0 %v230, 8
      %v3098 = vpop.permute.xlu0 %3097
      %vm3131 = vcmask 64512
      %v3132 = vsel %vm3131, %v2971, %v3036
      %v3133 = vsel %vm3131, %v2972, %v3038
      %v3134 = vsel %vm3131, %v2973, %v3040
      %v3135 = vsel %vm3131, %v2974, %v3042
      %v3136 = vsel %vm3131, %v2975, %v3044
      %v3137 = vsel %vm3131, %v2976, %v3046
      %v3138 = vsel %vm3131, %v2977, %v3048
      %v3139 = vsel %vm3131, %v2978, %v3050
      %v3140 = vsel %vm3131, %v2979, %v3052
      %v3141 = vsel %vm3131, %v2980, %v3054
      %v3142 = vsel %vm3131, %v2981, %v3056
      %v3143 = vsel %vm3131, %v2982, %v3058
      %v3144 = vsel %vm3131, %v2983, %v3060
      %v3145 = vsel %vm3131, %v2984, %v3062
      %v3146 = vsel %vm3131, %v2985, %v3064
      %v3147 = vsel %vm3131, %v2986, %v3066
      %v3148 = vsel %vm3131, %v2987, %v3068
      %v3149 = vsel %vm3131, %v2988, %v3070
      %v3150 = vsel %vm3131, %v2989, %v3072
      %v3151 = vsel %vm3131, %v2990, %v3074
      %v3152 = vsel %vm3131, %v2991, %v3076
      %v3153 = vsel %vm3131, %v2992, %v3078
      %v3154 = vsel %vm3131, %v2993, %v3080
      %v3155 = vsel %vm3131, %v2994, %v3082
      %v3156 = vsel %vm3131, %v2995, %v3084
      %v3157 = vsel %vm3131, %v2996, %v3086
      %v3158 = vsel %vm3131, %v2997, %v3088
      %v3159 = vsel %vm3131, %v2998, %v3090
      %v3160 = vsel %vm3131, %v2999, %v3092
      %v3161 = vsel %vm3131, %v3000, %v3094
      %v3162 = vsel %vm3131, %v3001, %v3096
      %v3163 = vsel %vm3131, %v3002, %v3098
      %vm3164 = vcmask 97280
      %3165 = vst.msk [vmem:[%s197] sm:$0xff] %vm3164, %v3132
      %3166 = vst.msk [vmem:[%s197 + $0x8] sm:$0xff] %vm3164, %v3133
      %3167 = vst.msk [vmem:[%s197 + $0x10] sm:$0xff] %vm3164, %v3134
      %3168 = vst.msk [vmem:[%s197 + $0x18] sm:$0xff] %vm3164, %v3135
      %3169 = vst.msk [vmem:[%s197 + $0x20] sm:$0xff] %vm3164, %v3136
      %3170 = vst.msk [vmem:[%s197 + $0x28] sm:$0xff] %vm3164, %v3137
      %3171 = vst.msk [vmem:[%s197 + $0x30] sm:$0xff] %vm3164, %v3138
      %3172 = vst.msk [vmem:[%s197 + $0x38] sm:$0xff] %vm3164, %v3139
      %3173 = vst.msk [vmem:[%s197 + $0x40] sm:$0xff] %vm3164, %v3140
      %3174 = vst.msk [vmem:[%s197 + $0x48] sm:$0xff] %vm3164, %v3141
      %3175 = vst.msk [vmem:[%s197 + $0x50] sm:$0xff] %vm3164, %v3142
      %3176 = vst.msk [vmem:[%s197 + $0x58] sm:$0xff] %vm3164, %v3143
      %3177 = vst.msk [vmem:[%s197 + $0x60] sm:$0xff] %vm3164, %v3144
      %3178 = vst.msk [vmem:[%s197 + $0x68] sm:$0xff] %vm3164, %v3145
      %3179 = vst.msk [vmem:[%s197 + $0x70] sm:$0xff] %vm3164, %v3146
      %3180 = vst.msk [vmem:[%s197 + $0x78] sm:$0xff] %vm3164, %v3147
      %3181 = vst.msk [vmem:[%s197 + $0x80] sm:$0xff] %vm3164, %v3148
      %3182 = vst.msk [vmem:[%s197 + $0x88] sm:$0xff] %vm3164, %v3149
      %3183 = vst.msk [vmem:[%s197 + $0x90] sm:$0xff] %vm3164, %v3150
      %3184 = vst.msk [vmem:[%s197 + $0x98] sm:$0xff] %vm3164, %v3151
      %3185 = vst.msk [vmem:[%s197 + $0xa0] sm:$0xff] %vm3164, %v3152
      %3186 = vst.msk [vmem:[%s197 + $0xa8] sm:$0xff] %vm3164, %v3153
      %3187 = vst.msk [vmem:[%s197 + $0xb0] sm:$0xff] %vm3164, %v3154
      %3188 = vst.msk [vmem:[%s197 + $0xb8] sm:$0xff] %vm3164, %v3155
      %3189 = vst.msk [vmem:[%s197 + $0xc0] sm:$0xff] %vm3164, %v3156
      %3190 = vst.msk [vmem:[%s197 + $0xc8] sm:$0xff] %vm3164, %v3157
      %3191 = vst.msk [vmem:[%s197 + $0xd0] sm:$0xff] %vm3164, %v3158
      %3192 = vst.msk [vmem:[%s197 + $0xd8] sm:$0xff] %vm3164, %v3159
      %3193 = vst.msk [vmem:[%s197 + $0xe0] sm:$0xff] %vm3164, %v3160
      %3194 = vst.msk [vmem:[%s197 + $0xe8] sm:$0xff] %vm3164, %v3161
      %3195 = vst.msk [vmem:[%s197 + $0xf0] sm:$0xff] %vm3164, %v3162
      %3196 = vst.msk [vmem:[%s197 + $0xf8] sm:$0xff] %vm3164, %v3163
      %p3197 = scmp.lt.s32.totalorder %s15, 1
      %s3198 = scalar_select %p3197, %s15, 1
      %s3199 = smul.addr %s3198, 32
      %s3200 = smul.addr %s3199, 8
      %s3201 = scalar_lea.vmem %s4, %s3200
      // Predicated region
      $region37: #{tpu_custom_call.1} parent=35 // pred_check
        %p3202 = pneg %p122
      $region38: #{tpu_custom_call.1} parent=35 // pred_check_branch
        %3204 = sbr.rel (%p3202) target = $region40
      $region39: #{tpu_custom_call.1} parent=35 // pred_region
        _
      $region40: #{tpu_custom_call.1} parent=35 // pred_fallthru
        _
    $region36: #{tpu_custom_call.1} parent=5 // pred_fallthru
      _
    %p3205 = scmp.le.s32.totalorder 2, %s10
    // Predicated region
    $region41: #{tpu_custom_call.1} parent=5 // pred_check
      %p3206 = pneg %p3205
    $region42: #{tpu_custom_call.1} parent=5 // pred_check_branch
      %3208 = sbr.rel (%p3206) target = $region44
    $region43: #{tpu_custom_call.1} parent=5 // pred_region
      %s3209 = ssub.s32 %s10, 2
      // Predicated region
      $region45: #{tpu_custom_call.1} parent=43 // pred_check
        %p3210 = pneg %p128
      $region46: #{tpu_custom_call.1} parent=43 // pred_check_branch
        %3212 = sbr.rel (%p3210) target = $region48
      $region47: #{tpu_custom_call.1} parent=43 // pred_region
        %p3213 = scmp.lt.s32.totalorder %s16, 1
        %s3214 = scalar_select %p3213, %s16, 1
        %s3215 = smul.addr %s3214, 32
        %s3216 = smul.addr %s3215, 8
        %s3217 = scalar_lea.vmem %s4, %s3216
      $region48: #{tpu_custom_call.1} parent=43 // pred_fallthru
        _
    $region44: #{tpu_custom_call.1} parent=5 // pred_fallthru
      _
  $region6: #{tpu_custom_call.1} parent=0 // loop_footer
    %s14 = sadd.s32 1, %s10
  $region7: #{tpu_custom_call.1} parent=0 // loop_footer_branch
    %9 = sbr.rel target = $region3
  $region8: #{tpu_custom_call.1} parent=0 // loop_exit
    _

</llo_original>
